<compile_context>
chip_gen: v7x
topology: tpu7x:2x2x1
jax: 0.10.0
libtpu: 0.0.40
codegen_flags: <defaults>
</compile_context>

<pallas_src>
import functools

import jax
import jax.numpy as jnp
from jax.experimental import pallas as pl
from jax.experimental.pallas import tpu as pltpu

LN2 = 0.6931471805599453
R_PAD = 8  # coordinate axis zero-padded 3 -> 8 (padding does not change d)


def _ssp(v):
    # ShiftedSoftplus: softplus(v) - log(2), numerically stable form.
    return jnp.maximum(v, 0.0) + jnp.log1p(jnp.exp(-jnp.abs(v))) - LN2


def _cfconv_kernel(xj_ref, ri_ref, rjb_ref, centers_ref,
                   w1_ref, b1_ref, w2_ref, b2_ref, out_ref,
                   *, ti, tj, kchunk, n_coord, mm_dtype):
    """One (i, j) grid step: add the j-block contribution to o[i-block]."""
    f = xj_ref.shape[-1]
    kp = centers_ref.shape[-1]
    n_chunks = kp // kchunk
    j = pl.program_id(1)

    xj = xj_ref[...]                               # [tj, F]   neighbor features
    ri = ri_ref[...]                               # [ti, R_PAD]
    rjb = rjb_ref[0]                               # [R_PAD, tj] (transposed)

    # ---- pairwise distances (explicit per-coordinate form, no cancellation);
    #      already scaled by sqrt(gamma) via the pre-scaled inputs below ----
    d2 = jnp.zeros((ti, tj), jnp.float32)
    for c in range(n_coord):
        dc = ri[:, c:c + 1] - rjb[c:c + 1, :]      # [ti, tj]
        d2 = d2 + dc * dc
    sd = jnp.sqrt(d2)                              # sqrt(gamma) * d  [ti, tj]

    # ---- RBF expansion fused into Linear1, chunked over K.  Fully unrolled
    #      (3 chunks); the [ti, tj, Kp] tensor is never materialized. ----
    h1_pre = jnp.zeros((ti * tj, f), jnp.float32)
    for kc in range(n_chunks):
        lo, hi = kc * kchunk, (kc + 1) * kchunk
        sc = centers_ref[0:1, lo:hi]                               # [1, kchunk]
        diff = sd[:, :, None] - sc[None, :, :]                     # [ti, tj, kchunk] f32
        e = jnp.exp(-(diff * diff))                                # f32 exponent & exp
        e2 = e.reshape(ti * tj, kchunk).astype(mm_dtype)
        w1c = w1_ref[lo:hi, :]                                     # [kchunk, F] mm_dtype
        h1_pre = h1_pre + jnp.dot(e2, w1c,
                                  preferred_element_type=jnp.float32)

    # ---- filter-generating network: Linear -> ssp -> Linear -> ssp ----
    h1 = _ssp(h1_pre + b1_ref[...])                                # f32
    pre2 = jnp.dot(h1.astype(mm_dtype), w2_ref[...],
                   preferred_element_type=jnp.float32) + b2_ref[...]
    w = _ssp(pre2)                                                 # [ti*tj, F] f32
    w3d = w.reshape(ti, tj, f)

    # ---- fused cfconv reduction: o[i,:] (+)= sum_{j in block} x[j,:]*w[i,j,:]
    contrib = jnp.sum(xj[None, :, :] * w3d, axis=1)                # [ti, F] f32

    @pl.when(j == 0)
    def _():
        out_ref[...] = contrib

    @pl.when(j != 0)
    def _():
        out_ref[...] += contrib


def cfconv(x, r, params, *, gamma=10.0, ti=None, tj=None,
           matmul_dtype=jnp.bfloat16, vmem_limit_bytes=None):
    n, f = x.shape
    k = params["centers"].shape[-1]
    n_coord = int(r.shape[1])

    # Tile sizes: fill the MXU / amortize per-step overhead, bounded by n.
    if ti is None:
        ti = min(n, 128)
        # Keep >= 2 steps on the parallel axis so both v7x TensorCores get work.
        if n // ti < 2 and n >= 16 and (n // 2) % 8 == 0:
            ti = n // 2
    if tj is None:
        tj = min(n, 128)
    assert n % ti == 0 and n % tj == 0 and ti % 8 == 0 and tj % 8 == 0
    assert f % 128 == 0, "num_features must be a multiple of 128 (lane-dense)"

    sqrt_gamma = float(gamma) ** 0.5

    # coordinates, pre-scaled by sqrt(gamma), padded to 8 columns
    r_sc = (sqrt_gamma * r).astype(jnp.float32)
    r_pad = jnp.zeros((n, R_PAD), jnp.float32).at[:, :n_coord].set(r_sc)
    # neighbor coordinates pre-blocked as [n//tj, R_PAD, tj] so the kernel
    # reads lane-dense [1, tj] coordinate rows with static indices only
    r_jblk = jnp.transpose(r_pad.reshape(n // tj, tj, R_PAD), (0, 2, 1))

    # pad the RBF axis K up to a multiple of 128; zero rows in W1 keep it exact
    kp = ((k + 127) // 128) * 128
    kchunk = 128
    centers_sc = jnp.zeros((1, kp), jnp.float32).at[0, :k].set(
        sqrt_gamma * params["centers"].reshape(-1))
    w1_p = jnp.zeros((kp, f), jnp.float32).at[:k, :].set(
        params["w1"]).astype(matmul_dtype)
    w2_p = params["w2"].astype(matmul_dtype)

    if vmem_limit_bytes is None:
        # K-chunked temporaries at ti=tj=128 peak around ~30 MiB; 56 MiB gives
        # headroom on v5e/v6e (128 MiB) and still fits v7x's 64 MiB per-TC VMEM.
        vmem_limit_bytes = 56 * 1024 * 1024

    full = lambda shape: pl.BlockSpec(shape, lambda i, j: (0,) * len(shape))
    kernel = functools.partial(_cfconv_kernel, ti=ti, tj=tj, kchunk=kchunk,
                               n_coord=n_coord, mm_dtype=matmul_dtype)

    return pl.pallas_call(
        kernel,
        out_shape=jax.ShapeDtypeStruct((n, f), jnp.float32),
        grid=(n // ti, n // tj),
        in_specs=[
            pl.BlockSpec((tj, f), lambda i, j: (j, 0)),            # x   (j block)
            pl.BlockSpec((ti, R_PAD), lambda i, j: (i, 0)),        # r   (i block)
            pl.BlockSpec((1, R_PAD, tj), lambda i, j: (j, 0, 0)),  # r^T (j block)
            full((1, kp)),                                         # scaled centers
            full((kp, f)), full((1, f)),                           # filter Linear1
            full((f, f)), full((1, f)),                            # filter Linear2
        ],
        out_specs=pl.BlockSpec((ti, f), lambda i, j: (i, 0)),
        compiler_params=pltpu.CompilerParams(
            dimension_semantics=("parallel", "arbitrary"),
            vmem_limit_bytes=vmem_limit_bytes),
    )(x.astype(jnp.float32), r_pad, r_jblk, centers_sc,
      w1_p, params["b1"].astype(jnp.float32),
      w2_p, params["b2"].astype(jnp.float32))


def _init_linear(key, fan_in, fan_out):
    # PyTorch nn.Linear default init: U(-1/sqrt(fan_in), 1/sqrt(fan_in)),
    # weight stored here as [in, out].
    kw, kb = jax.random.split(key)
    bound = 1.0 / jnp.sqrt(float(fan_in))
    w = jax.random.uniform(kw, (fan_in, fan_out), jnp.float32, -bound, bound)
    b = jax.random.uniform(kb, (1, fan_out), jnp.float32, -bound, bound)
    return w, b


def make_params(key, num_features, num_kernels=301):
    k1, k2 = jax.random.split(key)
    w1, b1 = _init_linear(k1, num_kernels, num_features)
    w2, b2 = _init_linear(k2, num_features, num_features)
    centers = jnp.linspace(0.0, 30.0, num_kernels, dtype=jnp.float32)
    return dict(centers=centers, w1=w1, b1=b1, w2=w2, b2=b2)


def reference(x, r, p, gamma=10.0):
    # Pure-JAX mirror of the PyTorch CFConv.forward, for verification.
    d = jnp.sqrt(jnp.maximum(
        jnp.sum((r[:, None, :] - r[None, :, :]) ** 2, axis=-1), 0.0))
    expanded = jnp.exp(-gamma * (d[..., None] - p["centers"]) ** 2)
    w = _ssp(expanded @ p["w1"] + p["b1"][0])
    w = _ssp(w @ p["w2"] + p["b2"][0])
    return jnp.einsum('jk,ijk->ik', x, w)


if __name__ == "__main__":
    N_ATOMS = 32        # atoms
    NUM_FEATURES = 128  # hidden features (multiple of 128 -> lane-dense output)
    NUM_KERNELS = 301   # module default; padded to 384 (3 K-chunks) inside

    key = jax.random.PRNGKey(0)
    kx, kr, kparam = jax.random.split(key, 3)
    x = jax.random.normal(kx, (N_ATOMS, NUM_FEATURES), jnp.float32)
    r = jax.random.uniform(kr, (N_ATOMS, 3), jnp.float32, 0.0, 5.0)
    params = make_params(kparam, NUM_FEATURES, NUM_KERNELS)

    ref = reference(x, r, params, gamma=10.0)

    # ti=tj=16 so this small example exercises the parallel i axis, the j
    # reduction axis (grid = (2, 2)) and all 3 K-chunks; use 128 at real sizes.

    # 1) exact f32 matmul path: tight tolerance against the reference.
    out_f32 = cfconv(x, r, params, gamma=10.0, ti=16, tj=16,
                     matmul_dtype=jnp.float32)
    out_f32 = jax.block_until_ready(out_f32)
    assert out_f32.shape == (N_ATOMS, NUM_FEATURES)
    err_f32 = float(jnp.max(jnp.abs(out_f32 - ref)))
    assert jnp.allclose(out_f32, ref, atol=2e-3, rtol=2e-3), err_f32

    # 2) default mixed-precision path (bf16 matmul operands, f32 exp/ssp/acc):
    #    looser tolerance to absorb bf16 operand rounding.
    out = cfconv(x, r, params, gamma=10.0, ti=16, tj=16)
    out = jax.block_until_ready(out)
    assert out.shape == (N_ATOMS, NUM_FEATURES)
    err_bf16 = float(jnp.max(jnp.abs(out - ref)))
    assert jnp.allclose(out, ref, atol=5e-2, rtol=5e-2), err_bf16

    print("KERNEL_OK")
</pallas_src>

<mosaic_0001>
module attributes {stable_mosaic.version = 11 : i64} {
  func.func @_cfconv_kernel(%arg0: i32, %arg1: i32, %arg2: memref<16x128xf32, #tpu.memory_space<vmem>>, %arg3: memref<16x8xf32, #tpu.memory_space<vmem>>, %arg4: memref<1x8x16xf32, #tpu.memory_space<vmem>>, %arg5: memref<1x384xf32, #tpu.memory_space<vmem>>, %arg6: memref<384x128xf32, #tpu.memory_space<vmem>>, %arg7: memref<1x128xf32, #tpu.memory_space<vmem>>, %arg8: memref<128x128xf32, #tpu.memory_space<vmem>>, %arg9: memref<1x128xf32, #tpu.memory_space<vmem>>, %arg10: memref<16x128xf32, #tpu.memory_space<vmem>>) attributes {dimension_semantics = [#tpu.dimension_semantics<parallel>, #tpu.dimension_semantics<arbitrary>], iteration_bounds = array<i64: 2, 2>, scalar_prefetch = 0 : i64, scratch_operands = 0 : i64, tpu.core_type = #tpu.core_type<tc>, window_params = [{transform_indices = @transform_0, window_bounds = array<i64: 16, 128>}, {transform_indices = @transform_1, window_bounds = array<i64: 16, 8>}, {transform_indices = @transform_2, window_bounds = array<i64: 1, 8, 16>}, {pipeline_mode = #tpu.pipeline_mode<synchronous>, transform_indices = @transform_3, window_bounds = array<i64: 1, 384>}, {pipeline_mode = #tpu.pipeline_mode<synchronous>, transform_indices = @transform_4, window_bounds = array<i64: 384, 128>}, {pipeline_mode = #tpu.pipeline_mode<synchronous>, transform_indices = @transform_5, window_bounds = array<i64: 1, 128>}, {pipeline_mode = #tpu.pipeline_mode<synchronous>, transform_indices = @transform_6, window_bounds = array<i64: 128, 128>}, {pipeline_mode = #tpu.pipeline_mode<synchronous>, transform_indices = @transform_7, window_bounds = array<i64: 1, 128>}, {transform_indices = @transform_8, window_bounds = array<i64: 16, 128>}]} {
    %c0 = arith.constant 0 : index
    %c0_0 = arith.constant 0 : index
    %0 = vector.load %arg2[%c0, %c0_0] : memref<16x128xf32, #tpu.memory_space<vmem>>, vector<16x128xf32>
    %c0_1 = arith.constant 0 : index
    %c0_2 = arith.constant 0 : index
    %1 = vector.load %arg3[%c0_1, %c0_2] : memref<16x8xf32, #tpu.memory_space<vmem>>, vector<16x8xf32>
    %c0_3 = arith.constant 0 : index
    %c0_4 = arith.constant 0 : index
    %c0_5 = arith.constant 0 : index
    %2 = vector.load %arg4[%c0_3, %c0_4, %c0_5] : memref<1x8x16xf32, #tpu.memory_space<vmem>>, vector<1x8x16xf32>
    %3 = vector.shape_cast %2 : vector<1x8x16xf32> to vector<8x16xf32>
    %cst = arith.constant 0.000000e+00 : f32
    %4 = vector.broadcast %cst : f32 to vector<16x16xf32>
    %5 = vector.extract_strided_slice %1 {offsets = [0, 0], sizes = [16, 1], strides = [1, 1]} : vector<16x8xf32> to vector<16x1xf32>
    %6 = vector.extract_strided_slice %3 {offsets = [0, 0], sizes = [1, 16], strides = [1, 1]} : vector<8x16xf32> to vector<1x16xf32>
    %7 = vector.broadcast %5 : vector<16x1xf32> to vector<16x16xf32>
    %8 = vector.broadcast %6 : vector<1x16xf32> to vector<16x16xf32>
    %9 = arith.subf %7, %8 : vector<16x16xf32>
    %10 = arith.mulf %9, %9 : vector<16x16xf32>
    %11 = arith.addf %4, %10 : vector<16x16xf32>
    %12 = vector.extract_strided_slice %1 {offsets = [0, 1], sizes = [16, 1], strides = [1, 1]} : vector<16x8xf32> to vector<16x1xf32>
    %13 = vector.extract_strided_slice %3 {offsets = [1, 0], sizes = [1, 16], strides = [1, 1]} : vector<8x16xf32> to vector<1x16xf32>
    %14 = vector.broadcast %12 : vector<16x1xf32> to vector<16x16xf32>
    %15 = vector.broadcast %13 : vector<1x16xf32> to vector<16x16xf32>
    %16 = arith.subf %14, %15 : vector<16x16xf32>
    %17 = arith.mulf %16, %16 : vector<16x16xf32>
    %18 = arith.addf %11, %17 : vector<16x16xf32>
    %19 = vector.extract_strided_slice %1 {offsets = [0, 2], sizes = [16, 1], strides = [1, 1]} : vector<16x8xf32> to vector<16x1xf32>
    %20 = vector.extract_strided_slice %3 {offsets = [2, 0], sizes = [1, 16], strides = [1, 1]} : vector<8x16xf32> to vector<1x16xf32>
    %21 = vector.broadcast %19 : vector<16x1xf32> to vector<16x16xf32>
    %22 = vector.broadcast %20 : vector<1x16xf32> to vector<16x16xf32>
    %23 = arith.subf %21, %22 : vector<16x16xf32>
    %24 = arith.mulf %23, %23 : vector<16x16xf32>
    %25 = arith.addf %18, %24 : vector<16x16xf32>
    %26 = math.sqrt %25 : vector<16x16xf32>
    %cst_6 = arith.constant 0.000000e+00 : f32
    %27 = vector.broadcast %cst_6 : f32 to vector<256x128xf32>
    %c0_7 = arith.constant 0 : index
    %c0_8 = arith.constant 0 : index
    %28 = vector.load %arg5[%c0_7, %c0_8] : memref<1x384xf32, #tpu.memory_space<vmem>>, vector<1x128xf32>
    %29 = vector.shape_cast %26 : vector<16x16xf32> to vector<16x16x1xf32>
    %30 = vector.shape_cast %28 : vector<1x128xf32> to vector<1x1x128xf32>
    %31 = vector.broadcast %29 : vector<16x16x1xf32> to vector<16x16x128xf32>
    %32 = vector.broadcast %30 : vector<1x1x128xf32> to vector<16x16x128xf32>
    %33 = arith.subf %31, %32 : vector<16x16x128xf32>
    %34 = arith.mulf %33, %33 : vector<16x16x128xf32>
    %cst_9 = arith.constant 0.000000e+00 : f32
    %35 = vector.broadcast %cst_9 : f32 to vector<16x16x128xf32>
    %36 = arith.subf %35, %34 : vector<16x16x128xf32>
    %37 = math.exp %36 : vector<16x16x128xf32>
    %38 = vector.shape_cast %37 : vector<16x16x128xf32> to vector<256x128xf32>
    %c0_10 = arith.constant 0 : index
    %c0_11 = arith.constant 0 : index
    %39 = vector.load %arg6[%c0_10, %c0_11] : memref<384x128xf32, #tpu.memory_space<vmem>>, vector<128x128xf32>
    %cst_12 = arith.constant dense<0.000000e+00> : vector<256x128xf32>
    %40 = tpu.matmul %38, %39, %cst_12 {dimension_numbers = #tpu.dot_dimension_numbers<[1], [0], [0], [1], [0, 0, 1, 1], [], []>} : vector<256x128xf32>, vector<128x128xf32>, vector<256x128xf32> -> vector<256x128xf32>
    %41 = arith.addf %27, %40 : vector<256x128xf32>
    %c0_13 = arith.constant 0 : index
    %c128 = arith.constant 128 : index
    %42 = vector.load %arg5[%c0_13, %c128] : memref<1x384xf32, #tpu.memory_space<vmem>>, vector<1x128xf32>
    %43 = vector.shape_cast %26 : vector<16x16xf32> to vector<16x16x1xf32>
    %44 = vector.shape_cast %42 : vector<1x128xf32> to vector<1x1x128xf32>
    %45 = vector.broadcast %43 : vector<16x16x1xf32> to vector<16x16x128xf32>
    %46 = vector.broadcast %44 : vector<1x1x128xf32> to vector<16x16x128xf32>
    %47 = arith.subf %45, %46 : vector<16x16x128xf32>
    %48 = arith.mulf %47, %47 : vector<16x16x128xf32>
    %cst_14 = arith.constant 0.000000e+00 : f32
    %49 = vector.broadcast %cst_14 : f32 to vector<16x16x128xf32>
    %50 = arith.subf %49, %48 : vector<16x16x128xf32>
    %51 = math.exp %50 : vector<16x16x128xf32>
    %52 = vector.shape_cast %51 : vector<16x16x128xf32> to vector<256x128xf32>
    %c128_15 = arith.constant 128 : index
    %c0_16 = arith.constant 0 : index
    %53 = vector.load %arg6[%c128_15, %c0_16] : memref<384x128xf32, #tpu.memory_space<vmem>>, vector<128x128xf32>
    %cst_17 = arith.constant dense<0.000000e+00> : vector<256x128xf32>
    %54 = tpu.matmul %52, %53, %cst_17 {dimension_numbers = #tpu.dot_dimension_numbers<[1], [0], [0], [1], [0, 0, 1, 1], [], []>} : vector<256x128xf32>, vector<128x128xf32>, vector<256x128xf32> -> vector<256x128xf32>
    %55 = arith.addf %41, %54 : vector<256x128xf32>
    %c0_18 = arith.constant 0 : index
    %c256 = arith.constant 256 : index
    %56 = vector.load %arg5[%c0_18, %c256] : memref<1x384xf32, #tpu.memory_space<vmem>>, vector<1x128xf32>
    %57 = vector.shape_cast %26 : vector<16x16xf32> to vector<16x16x1xf32>
    %58 = vector.shape_cast %56 : vector<1x128xf32> to vector<1x1x128xf32>
    %59 = vector.broadcast %57 : vector<16x16x1xf32> to vector<16x16x128xf32>
    %60 = vector.broadcast %58 : vector<1x1x128xf32> to vector<16x16x128xf32>
    %61 = arith.subf %59, %60 : vector<16x16x128xf32>
    %62 = arith.mulf %61, %61 : vector<16x16x128xf32>
    %cst_19 = arith.constant 0.000000e+00 : f32
    %63 = vector.broadcast %cst_19 : f32 to vector<16x16x128xf32>
    %64 = arith.subf %63, %62 : vector<16x16x128xf32>
    %65 = math.exp %64 : vector<16x16x128xf32>
    %66 = vector.shape_cast %65 : vector<16x16x128xf32> to vector<256x128xf32>
    %c256_20 = arith.constant 256 : index
    %c0_21 = arith.constant 0 : index
    %67 = vector.load %arg6[%c256_20, %c0_21] : memref<384x128xf32, #tpu.memory_space<vmem>>, vector<128x128xf32>
    %cst_22 = arith.constant dense<0.000000e+00> : vector<256x128xf32>
    %68 = tpu.matmul %66, %67, %cst_22 {dimension_numbers = #tpu.dot_dimension_numbers<[1], [0], [0], [1], [0, 0, 1, 1], [], []>} : vector<256x128xf32>, vector<128x128xf32>, vector<256x128xf32> -> vector<256x128xf32>
    %69 = arith.addf %55, %68 : vector<256x128xf32>
    %c0_23 = arith.constant 0 : index
    %c0_24 = arith.constant 0 : index
    %70 = vector.load %arg7[%c0_23, %c0_24] : memref<1x128xf32, #tpu.memory_space<vmem>>, vector<1x128xf32>
    %71 = vector.broadcast %70 : vector<1x128xf32> to vector<256x128xf32>
    %72 = arith.addf %69, %71 : vector<256x128xf32>
    %cst_25 = arith.constant 0.000000e+00 : f32
    %73 = vector.broadcast %cst_25 : f32 to vector<256x128xf32>
    %74 = arith.maximumf %72, %73 : vector<256x128xf32>
    %75 = math.absf %72 : vector<256x128xf32>
    %cst_26 = arith.constant 0.000000e+00 : f32
    %76 = vector.broadcast %cst_26 : f32 to vector<256x128xf32>
    %77 = arith.subf %76, %75 : vector<256x128xf32>
    %78 = math.exp %77 : vector<256x128xf32>
    %79 = math.log1p %78 : vector<256x128xf32>
    %80 = arith.addf %74, %79 : vector<256x128xf32>
    %cst_27 = arith.constant 0.693147182 : f32
    %81 = vector.broadcast %cst_27 : f32 to vector<256x128xf32>
    %82 = arith.subf %80, %81 : vector<256x128xf32>
    %c0_28 = arith.constant 0 : index
    %c0_29 = arith.constant 0 : index
    %83 = vector.load %arg8[%c0_28, %c0_29] : memref<128x128xf32, #tpu.memory_space<vmem>>, vector<128x128xf32>
    %cst_30 = arith.constant dense<0.000000e+00> : vector<256x128xf32>
    %84 = tpu.matmul %82, %83, %cst_30 {dimension_numbers = #tpu.dot_dimension_numbers<[1], [0], [0], [1], [0, 0, 1, 1], [], []>} : vector<256x128xf32>, vector<128x128xf32>, vector<256x128xf32> -> vector<256x128xf32>
    %c0_31 = arith.constant 0 : index
    %c0_32 = arith.constant 0 : index
    %85 = vector.load %arg9[%c0_31, %c0_32] : memref<1x128xf32, #tpu.memory_space<vmem>>, vector<1x128xf32>
    %86 = vector.broadcast %85 : vector<1x128xf32> to vector<256x128xf32>
    %87 = arith.addf %84, %86 : vector<256x128xf32>
    %cst_33 = arith.constant 0.000000e+00 : f32
    %88 = vector.broadcast %cst_33 : f32 to vector<256x128xf32>
    %89 = arith.maximumf %87, %88 : vector<256x128xf32>
    %90 = math.absf %87 : vector<256x128xf32>
    %cst_34 = arith.constant 0.000000e+00 : f32
    %91 = vector.broadcast %cst_34 : f32 to vector<256x128xf32>
    %92 = arith.subf %91, %90 : vector<256x128xf32>
    %93 = math.exp %92 : vector<256x128xf32>
    %94 = math.log1p %93 : vector<256x128xf32>
    %95 = arith.addf %89, %94 : vector<256x128xf32>
    %cst_35 = arith.constant 0.693147182 : f32
    %96 = vector.broadcast %cst_35 : f32 to vector<256x128xf32>
    %97 = arith.subf %95, %96 : vector<256x128xf32>
    %98 = vector.shape_cast %97 : vector<256x128xf32> to vector<16x16x128xf32>
    %99 = vector.shape_cast %0 : vector<16x128xf32> to vector<1x16x128xf32>
    %100 = vector.broadcast %99 : vector<1x16x128xf32> to vector<16x16x128xf32>
    %101 = arith.mulf %100, %98 : vector<16x16x128xf32>
    %cst_36 = arith.constant dense<0.000000e+00> : vector<16x128xf32>
    %102 = vector.multi_reduction <add>, %101, %cst_36 [1] : vector<16x16x128xf32> to vector<16x128xf32>
    %c0_i32 = arith.constant 0 : i32
    %103 = arith.cmpi eq, %arg1, %c0_i32 : i32
    %104 = arith.extui %103 : i1 to i32
    %c0_i32_37 = arith.constant 0 : i32
    %105 = arith.cmpi ne, %104, %c0_i32_37 : i32
    scf.if %105 {
      %c0_40 = arith.constant 0 : index
      %c0_41 = arith.constant 0 : index
      %109 = vector.load %arg10[%c0_40, %c0_41] : memref<16x128xf32, #tpu.memory_space<vmem>>, vector<16x128xf32>
      tpu.vector_store %arg10[%c0_40, %c0_41], %102 {strides = array<i32>} : memref<16x128xf32, #tpu.memory_space<vmem>>, vector<16x128xf32>,
    } else {
    }
    %c0_i32_38 = arith.constant 0 : i32
    %106 = arith.cmpi ne, %arg1, %c0_i32_38 : i32
    %107 = arith.extui %106 : i1 to i32
    %c0_i32_39 = arith.constant 0 : i32
    %108 = arith.cmpi ne, %107, %c0_i32_39 : i32
    scf.if %108 {
      %c0_40 = arith.constant 0 : index
      %c0_41 = arith.constant 0 : index
      %109 = vector.load %arg10[%c0_40, %c0_41] : memref<16x128xf32, #tpu.memory_space<vmem>>, vector<16x128xf32>
      %110 = arith.addf %109, %102 : vector<16x128xf32>
      %c0_42 = arith.constant 0 : index
      %c0_43 = arith.constant 0 : index
      %111 = vector.load %arg10[%c0_42, %c0_43] : memref<16x128xf32, #tpu.memory_space<vmem>>, vector<16x128xf32>
      tpu.vector_store %arg10[%c0_42, %c0_43], %110 {strides = array<i32>} : memref<16x128xf32, #tpu.memory_space<vmem>>, vector<16x128xf32>,
    } else {
    }
    return
  }
  func.func @transform_0(%arg0: i32, %arg1: i32) -> (i32, i32) {
    %c0_i32 = arith.constant 0 : i32
    %c0_i32_0 = arith.constant 0 : i32
    return %arg1, %c0_i32 : i32, i32
  }
  func.func @transform_1(%arg0: i32, %arg1: i32) -> (i32, i32) {
    %c0_i32 = arith.constant 0 : i32
    %c0_i32_0 = arith.constant 0 : i32
    return %arg0, %c0_i32 : i32, i32
  }
  func.func @transform_2(%arg0: i32, %arg1: i32) -> (i32, i32, i32) {
    %c0_i32 = arith.constant 0 : i32
    %c0_i32_0 = arith.constant 0 : i32
    %c0_i32_1 = arith.constant 0 : i32
    return %arg1, %c0_i32, %c0_i32_0 : i32, i32, i32
  }
  func.func @transform_3(%arg0: i32, %arg1: i32) -> (i32, i32) {
    %c0_i32 = arith.constant 0 : i32
    %c0_i32_0 = arith.constant 0 : i32
    %c0_i32_1 = arith.constant 0 : i32
    return %c0_i32, %c0_i32_0 : i32, i32
  }
  func.func @transform_4(%arg0: i32, %arg1: i32) -> (i32, i32) {
    %c0_i32 = arith.constant 0 : i32
    %c0_i32_0 = arith.constant 0 : i32
    %c0_i32_1 = arith.constant 0 : i32
    return %c0_i32, %c0_i32_0 : i32, i32
  }
  func.func @transform_5(%arg0: i32, %arg1: i32) -> (i32, i32) {
    %c0_i32 = arith.constant 0 : i32
    %c0_i32_0 = arith.constant 0 : i32
    %c0_i32_1 = arith.constant 0 : i32
    return %c0_i32, %c0_i32_0 : i32, i32
  }
  func.func @transform_6(%arg0: i32, %arg1: i32) -> (i32, i32) {
    %c0_i32 = arith.constant 0 : i32
    %c0_i32_0 = arith.constant 0 : i32
    %c0_i32_1 = arith.constant 0 : i32
    return %c0_i32, %c0_i32_0 : i32, i32
  }
  func.func @transform_7(%arg0: i32, %arg1: i32) -> (i32, i32) {
    %c0_i32 = arith.constant 0 : i32
    %c0_i32_0 = arith.constant 0 : i32
    %c0_i32_1 = arith.constant 0 : i32
    return %c0_i32, %c0_i32_0 : i32, i32
  }
  func.func @transform_8(%arg0: i32, %arg1: i32) -> (i32, i32) {
    %c0_i32 = arith.constant 0 : i32
    %c0_i32_0 = arith.constant 0 : i32
    return %arg0, %c0_i32 : i32, i32
  }
}

</mosaic_0001>

<llo_original>
// kernel: tpu_custom_call.1
$region0: #{tpu_custom_call.1}
  #allocation0 [shape = 'u32[]', space=smem, size = 0x4, offset = 0x4, fixed_abs, tag = 'smem constant byte address 0x4 - core index']
  #allocation1 [shape = 'u32[144,128]{1,0:T(1,128)}', space=vmem, size = 0x12000, scoped, tag = 'internal scratch']
  %s0 = inlined_call_operand.vmem [shape: f32[32,128], index: 0, kind: input, shape index: {}]
  %s1 = inlined_call_operand.vmem [shape: f32[32,8], index: 1, kind: input, shape index: {}]
  %s2 = inlined_call_operand.hbm [shape: f32[2,8,16], index: 2, kind: input, shape index: {}]
  %s3 = inlined_call_operand.vmem [shape: f32[1,384], index: 3, kind: input, shape index: {}]
  %s4 = inlined_call_operand.hbm [shape: f32[384,128], index: 4, kind: input, shape index: {}]
  %s5 = inlined_call_operand.vmem [shape: f32[1,128], index: 5, kind: input, shape index: {}]
  %s6 = inlined_call_operand.hbm [shape: f32[128,128], index: 6, kind: input, shape index: {}]
  %s7 = inlined_call_operand.vmem [shape: f32[1,128], index: 7, kind: input, shape index: {}]
  %s8 = inlined_call_operand.hbm [shape: f32[32,128], index: 8, kind: output, shape index: {}]
  %s9 = sld [smem:[#allocation0]]
  $region85: #{tpu_custom_call.1} parent=0
    _
  %s11 = ssub.s32 1, %s9
  %s12 = scalar_select 0, %s11, %s9
  $region1: #{tpu_custom_call.1} parent=0
    #allocation2 [shape = 'u8[8192]{0}', space=vmem, size = 0x2000, scoped, tag = 'input window, operand 2']
    #allocation3 [shape = 's32[2]{0}', space=sflag, size = 0x8, scoped, tag = 'scoped memory for tpu_custom_call.1']
    #allocation4 [shape = 's32[2]{0}', space=sflag, size = 0x8, scoped, tag = 'scoped memory for tpu_custom_call.1']
    #allocation5 [shape = 'u8[196608]{0}', space=vmem, size = 0x30000, scoped, tag = 'input window, operand 4, single buffered']
    #allocation6 [shape = 's32[1]{0}', space=sflag, size = 0x4, scoped, tag = 'scoped memory for tpu_custom_call.1']
    #allocation7 [shape = 'u8[65536]{0}', space=vmem, size = 0x10000, scoped, tag = 'input window, operand 6, single buffered']
    #allocation8 [shape = 'u8[16384]{0}', space=vmem, size = 0x4000, scoped, tag = 'output window, operand 0']
    %13 = vsyncpa [#allocation3], 0
    %s14 = scalar_lea.sflag [#allocation3], 1
    %15 = vsyncpa %s14, 0
    %16 = vsyncpa [#allocation6], 0
    %17 = vsyncpa [#allocation4], 0
    %s18 = scalar_lea.sflag [#allocation4], 1
    %19 = vsyncpa %s18, 0
    loop: start=0, step=1, limit=6
    $region2: #{tpu_custom_call.1} parent=1 // loop_pre_header
      _
    $region3: #{tpu_custom_call.1} parent=1 // loop_header
      %s21 = sphi 0, %s25
      %p22 = scmp.ge.s32.totalorder %s21, 6
      %s28 = sphi 0, %s40
      %s29 = sphi 0, %s36
      %s30 = sphi 0, %s28
      %s31 = sphi 0, %s29
      %s32 = sphi 0, %s30
      %s33 = sphi 0, %s31
      %s43 = sphi 0, %s45
      %s46 = sphi 0, %s43
      %s47 = sphi 0, %s46
      %s63 = sphi 0, %s47
      %s69 = sphi 0, %s71
      %s72 = sphi 0, %s69
      %s73 = sphi 0, %s72
      %s89 = sphi 0, %s73
      %s95 = sphi 0, %s97
      %s98 = sphi 0, %s95
      %s99 = sphi 0, %s98
      %s115 = sphi 0, %s99
      %s119 = sphi 0, %s119
      %s121 = sphi 0, %s119
      %s122 = sphi 0, %s121
      %s136 = sphi 0, %s122
      %s140 = sphi 0, %s140
      %s142 = sphi 0, %s140
      %s143 = sphi 0, %s142
      %s157 = sphi 0, %s143
      %s161 = sphi 0, %s161
      %s163 = sphi 0, %s161
      %s164 = sphi 0, %s163
      %s178 = sphi 0, %s164
      %s182 = sphi 0, %s182
      %s184 = sphi 0, %s182
      %s185 = sphi 0, %s184
      %s199 = sphi 0, %s185
      %s203 = sphi 0, %s203
      %s205 = sphi 0, %s203
      %s206 = sphi 0, %s205
      %s220 = sphi 0, %s206
      %s226 = sphi 0, %s228
      %s229 = sphi 0, %s226
      %s230 = sphi 0, %s229
      %s246 = sphi 0, %s230
    $region4: #{tpu_custom_call.1} parent=1 // loop_header_branch
      %24 = sbr.rel (%p22) target = $region8
    $region5: #{tpu_custom_call.1} parent=1 // loop_body
      %s26 = ssub.s32 %s21, 1
      %s27 = ssub.s32 %s21, 2
      %s34 = sadd.s32 1, %s29
      %p35 = scmp.ge.s32.totalorder %s34, 2
      %s36 = scalar_select %p35, 0, %s34
      %s37 = sadd.s32 1, %s28
      %s38 = scalar_select %p35, %s37, %s28
      %p39 = scmp.ge.s32.totalorder %s38, 2
      %s40 = scalar_select %p39, 0, %s38
      %s41 = ssub.s32 %s29, %s36
      %p42 = scmp.eq.s32.totalorder %s41, 0
      %s44 = sadd.s32 %s43, 1
      %s45 = scalar_select %p42, %s43, %s44
      %p48 = pneg %p42
      %p49 = scmp.eq.s32.totalorder %s21, 3
      %p50 = por %p48, %p49
      %p51 = scmp.ne.s32.totalorder %s43, %s46
      %p52 = scmp.eq.s32.totalorder %s21, 0
      %p53 = por %p51, %p52
      %p54 = scmp.ne.s32.totalorder %s43, %s46
      %p55 = scmp.eq.s32.totalorder %s26, 3
      %p56 = por %p54, %p55
      %p57 = scmp.ne.s32.totalorder %s46, %s47
      %p58 = scmp.eq.s32.totalorder %s26, 0
      %p59 = por %p57, %p58
      %p60 = scmp.ne.s32.totalorder %s46, %s47
      %p61 = scmp.eq.s32.totalorder %s27, 3
      %p62 = por %p60, %p61
      %p64 = scmp.ne.s32.totalorder %s47, %s63
      %p65 = scmp.eq.s32.totalorder %s27, 0
      %p66 = por %p64, %p65
      %s67 = ssub.s32 %s28, %s40
      %p68 = scmp.eq.s32.totalorder %s67, 0
      %s70 = sadd.s32 %s69, 1
      %s71 = scalar_select %p68, %s69, %s70
      %p74 = pneg %p68
      %p75 = scmp.eq.s32.totalorder %s21, 3
      %p76 = por %p74, %p75
      %p77 = scmp.ne.s32.totalorder %s69, %s72
      %p78 = scmp.eq.s32.totalorder %s21, 0
      %p79 = por %p77, %p78
      %p80 = scmp.ne.s32.totalorder %s69, %s72
      %p81 = scmp.eq.s32.totalorder %s26, 3
      %p82 = por %p80, %p81
      %p83 = scmp.ne.s32.totalorder %s72, %s73
      %p84 = scmp.eq.s32.totalorder %s26, 0
      %p85 = por %p83, %p84
      %p86 = scmp.ne.s32.totalorder %s72, %s73
      %p87 = scmp.eq.s32.totalorder %s27, 3
      %p88 = por %p86, %p87
      %p90 = scmp.ne.s32.totalorder %s73, %s89
      %p91 = scmp.eq.s32.totalorder %s27, 0
      %p92 = por %p90, %p91
      %s93 = ssub.s32 %s29, %s36
      %p94 = scmp.eq.s32.totalorder %s93, 0
      %s96 = sadd.s32 %s95, 1
      %s97 = scalar_select %p94, %s95, %s96
      %p100 = pneg %p94
      %p101 = scmp.eq.s32.totalorder %s21, 3
      %p102 = por %p100, %p101
      %p103 = scmp.ne.s32.totalorder %s95, %s98
      %p104 = scmp.eq.s32.totalorder %s21, 0
      %p105 = por %p103, %p104
      %p106 = scmp.ne.s32.totalorder %s95, %s98
      %p107 = scmp.eq.s32.totalorder %s26, 3
      %p108 = por %p106, %p107
      %p109 = scmp.ne.s32.totalorder %s98, %s99
      %p110 = scmp.eq.s32.totalorder %s26, 0
      %p111 = por %p109, %p110
      %p112 = scmp.ne.s32.totalorder %s98, %s99
      %p113 = scmp.eq.s32.totalorder %s27, 3
      %p114 = por %p112, %p113
      %p116 = scmp.ne.s32.totalorder %s99, %s115
      %p117 = scmp.eq.s32.totalorder %s27, 0
      %p118 = por %p116, %p117
      %s120 = sadd.s32 %s119, 1
      %p123 = scmp.eq.s32.totalorder %s21, 3
      %p124 = scmp.ne.s32.totalorder %s119, %s121
      %p125 = scmp.eq.s32.totalorder %s21, 0
      %p126 = por %p124, %p125
      %p127 = scmp.ne.s32.totalorder %s119, %s121
      %p128 = scmp.eq.s32.totalorder %s26, 3
      %p129 = por %p127, %p128
      %p130 = scmp.ne.s32.totalorder %s121, %s122
      %p131 = scmp.eq.s32.totalorder %s26, 0
      %p132 = por %p130, %p131
      %p133 = scmp.ne.s32.totalorder %s121, %s122
      %p134 = scmp.eq.s32.totalorder %s27, 3
      %p135 = por %p133, %p134
      %p137 = scmp.ne.s32.totalorder %s122, %s136
      %p138 = scmp.eq.s32.totalorder %s27, 0
      %p139 = por %p137, %p138
      %s141 = sadd.s32 %s140, 1
      %p144 = scmp.eq.s32.totalorder %s21, 3
      %p145 = scmp.ne.s32.totalorder %s140, %s142
      %p146 = scmp.eq.s32.totalorder %s21, 0
      %p147 = por %p145, %p146
      %p148 = scmp.ne.s32.totalorder %s140, %s142
      %p149 = scmp.eq.s32.totalorder %s26, 3
      %p150 = por %p148, %p149
      %p151 = scmp.ne.s32.totalorder %s142, %s143
      %p152 = scmp.eq.s32.totalorder %s26, 0
      %p153 = por %p151, %p152
      %p154 = scmp.ne.s32.totalorder %s142, %s143
      %p155 = scmp.eq.s32.totalorder %s27, 3
      %p156 = por %p154, %p155
      %p158 = scmp.ne.s32.totalorder %s143, %s157
      %p159 = scmp.eq.s32.totalorder %s27, 0
      %p160 = por %p158, %p159
      %s162 = sadd.s32 %s161, 1
      %p165 = scmp.eq.s32.totalorder %s21, 3
      %p166 = scmp.ne.s32.totalorder %s161, %s163
      %p167 = scmp.eq.s32.totalorder %s21, 0
      %p168 = por %p166, %p167
      %p169 = scmp.ne.s32.totalorder %s161, %s163
      %p170 = scmp.eq.s32.totalorder %s26, 3
      %p171 = por %p169, %p170
      %p172 = scmp.ne.s32.totalorder %s163, %s164
      %p173 = scmp.eq.s32.totalorder %s26, 0
      %p174 = por %p172, %p173
      %p175 = scmp.ne.s32.totalorder %s163, %s164
      %p176 = scmp.eq.s32.totalorder %s27, 3
      %p177 = por %p175, %p176
      %p179 = scmp.ne.s32.totalorder %s164, %s178
      %p180 = scmp.eq.s32.totalorder %s27, 0
      %p181 = por %p179, %p180
      %s183 = sadd.s32 %s182, 1
      %p186 = scmp.eq.s32.totalorder %s21, 3
      %p187 = scmp.ne.s32.totalorder %s182, %s184
      %p188 = scmp.eq.s32.totalorder %s21, 0
      %p189 = por %p187, %p188
      %p190 = scmp.ne.s32.totalorder %s182, %s184
      %p191 = scmp.eq.s32.totalorder %s26, 3
      %p192 = por %p190, %p191
      %p193 = scmp.ne.s32.totalorder %s184, %s185
      %p194 = scmp.eq.s32.totalorder %s26, 0
      %p195 = por %p193, %p194
      %p196 = scmp.ne.s32.totalorder %s184, %s185
      %p197 = scmp.eq.s32.totalorder %s27, 3
      %p198 = por %p196, %p197
      %p200 = scmp.ne.s32.totalorder %s185, %s199
      %p201 = scmp.eq.s32.totalorder %s27, 0
      %p202 = por %p200, %p201
      %s204 = sadd.s32 %s203, 1
      %p207 = scmp.eq.s32.totalorder %s21, 3
      %p208 = scmp.ne.s32.totalorder %s203, %s205
      %p209 = scmp.eq.s32.totalorder %s21, 0
      %p210 = por %p208, %p209
      %p211 = scmp.ne.s32.totalorder %s203, %s205
      %p212 = scmp.eq.s32.totalorder %s26, 3
      %p213 = por %p211, %p212
      %p214 = scmp.ne.s32.totalorder %s205, %s206
      %p215 = scmp.eq.s32.totalorder %s26, 0
      %p216 = por %p214, %p215
      %p217 = scmp.ne.s32.totalorder %s205, %s206
      %p218 = scmp.eq.s32.totalorder %s27, 3
      %p219 = por %p217, %p218
      %p221 = scmp.ne.s32.totalorder %s206, %s220
      %p222 = scmp.eq.s32.totalorder %s27, 0
      %p223 = por %p221, %p222
      %s224 = ssub.s32 %s28, %s40
      %p225 = scmp.eq.s32.totalorder %s224, 0
      %s227 = sadd.s32 %s226, 1
      %s228 = scalar_select %p225, %s226, %s227
      %p231 = pneg %p225
      %p232 = scmp.eq.s32.totalorder %s21, 3
      %p233 = por %p231, %p232
      %p234 = scmp.ne.s32.totalorder %s226, %s229
      %p235 = scmp.eq.s32.totalorder %s21, 0
      %p236 = por %p234, %p235
      %p237 = scmp.ne.s32.totalorder %s226, %s229
      %p238 = scmp.eq.s32.totalorder %s26, 3
      %p239 = por %p237, %p238
      %p240 = scmp.ne.s32.totalorder %s229, %s230
      %p241 = scmp.eq.s32.totalorder %s26, 0
      %p242 = por %p240, %p241
      %p243 = scmp.ne.s32.totalorder %s229, %s230
      %p244 = scmp.eq.s32.totalorder %s27, 3
      %p245 = por %p243, %p244
      %p247 = scmp.ne.s32.totalorder %s230, %s246
      %p248 = scmp.eq.s32.totalorder %s27, 0
      %p249 = por %p247, %p248
      %p250 = scmp.le.s32.totalorder 1, %s21
      %p251 = scmp.lt.s32.totalorder %s21, 5
      %p252 = pnand %p250, %p251
      %p253 = pneg %p252
      // Predicated region
      $region9: #{tpu_custom_call.1} parent=5 // pred_check
        _
      $region10: #{tpu_custom_call.1} parent=5 // pred_check_branch
        %255 = sbr.rel (%p252) target = $region12
      $region11: #{tpu_custom_call.1} parent=5 // pred_region
        %s256 = ssub.s32 %s21, 1
        // Predicated region
        $region13: #{tpu_custom_call.1} parent=11 // pred_check
          %p257 = pneg %p132
        $region14: #{tpu_custom_call.1} parent=11 // pred_check_branch
          %259 = sbr.rel (%p257) target = $region16
        $region15: #{tpu_custom_call.1} parent=11 // pred_region
          _
        $region16: #{tpu_custom_call.1} parent=11 // pred_fallthru
          _
        // Predicated region
        $region17: #{tpu_custom_call.1} parent=11 // pred_check
          %p260 = pneg %p153
        $region18: #{tpu_custom_call.1} parent=11 // pred_check_branch
          %262 = sbr.rel (%p260) target = $region20
        $region19: #{tpu_custom_call.1} parent=11 // pred_region
          %s264 = ssub.s32 6144, 6144
          %265 = vsyncadd [#allocation6], %s264
          %s266 = sshll.u32 [#allocation5], 4
          %s267 = int_to_ptr.vmem [resolvable:$true] %s266
          %272 = dma.hbm_to_vmem [thread:$0]  %s4, 6144, %s267, [#allocation6], 128, 128, 8
        $region20: #{tpu_custom_call.1} parent=11 // pred_fallthru
          _
        // Predicated region
        $region21: #{tpu_custom_call.1} parent=11 // pred_check
          %p273 = pneg %p174
        $region22: #{tpu_custom_call.1} parent=11 // pred_check_branch
          %275 = sbr.rel (%p273) target = $region24
        $region23: #{tpu_custom_call.1} parent=11 // pred_region
          _
        $region24: #{tpu_custom_call.1} parent=11 // pred_fallthru
          _
        // Predicated region
        $region25: #{tpu_custom_call.1} parent=11 // pred_check
          %p276 = pneg %p195
        $region26: #{tpu_custom_call.1} parent=11 // pred_check_branch
          %278 = sbr.rel (%p276) target = $region28
        $region27: #{tpu_custom_call.1} parent=11 // pred_region
          %s280 = ssub.s32 2048, 2048
          %281 = vsyncadd [#allocation6], %s280
          %s282 = sshll.u32 [#allocation7], 4
          %s283 = int_to_ptr.vmem [resolvable:$true] %s282
          %288 = dma.hbm_to_vmem [thread:$0]  %s6, 2048, %s283, [#allocation6], 128, 128, 8
        $region28: #{tpu_custom_call.1} parent=11 // pred_fallthru
          _
        // Predicated region
        $region29: #{tpu_custom_call.1} parent=11 // pred_check
          %p289 = pneg %p216
        $region30: #{tpu_custom_call.1} parent=11 // pred_check_branch
          %291 = sbr.rel (%p289) target = $region32
        $region31: #{tpu_custom_call.1} parent=11 // pred_region
          _
        $region32: #{tpu_custom_call.1} parent=11 // pred_fallthru
          _
      $region12: #{tpu_custom_call.1} parent=5 // pred_fallthru
        _
      %p292 = scmp.lt.s32.totalorder %s21, 4
      // Predicated region
      $region33: #{tpu_custom_call.1} parent=5 // pred_check
        %p293 = pneg %p292
      $region34: #{tpu_custom_call.1} parent=5 // pred_check_branch
        %295 = sbr.rel (%p293) target = $region36
      $region35: #{tpu_custom_call.1} parent=5 // pred_region
        // Predicated region
        $region37: #{tpu_custom_call.1} parent=35 // pred_check
          %p296 = pneg %p53
        $region38: #{tpu_custom_call.1} parent=35 // pred_check_branch
          %298 = sbr.rel (%p296) target = $region40
        $region39: #{tpu_custom_call.1} parent=35 // pred_region
          %s299 = smul.u32 2, %s29
          %p300 = scmp.lt.s32.totalorder %s299, 3
          %s301 = scalar_select %p300, %s299, 3
          %s302 = smul.addr %s301, 8
          %s303 = scalar_lea.vmem %s0, %s302
          %s304 = smul.u32 2, %s29
        $region40: #{tpu_custom_call.1} parent=35 // pred_fallthru
          _
        // Predicated region
        $region41: #{tpu_custom_call.1} parent=35 // pred_check
          %p305 = pneg %p79
        $region42: #{tpu_custom_call.1} parent=35 // pred_check_branch
          %307 = sbr.rel (%p305) target = $region44
        $region43: #{tpu_custom_call.1} parent=35 // pred_region
          %s308 = smul.u32 2, %s28
          %p309 = scmp.lt.s32.totalorder %s308, 3
          %s310 = scalar_select %p309, %s308, 3
          %s311 = smul.addr %s310, 8
          %s312 = scalar_lea.vmem %s1, %s311
          %s313 = smul.u32 2, %s28
        $region44: #{tpu_custom_call.1} parent=35 // pred_fallthru
          _
        // Predicated region
        $region45: #{tpu_custom_call.1} parent=35 // pred_check
          %p314 = pneg %p105
        $region46: #{tpu_custom_call.1} parent=35 // pred_check_branch
          %316 = sbr.rel (%p314) target = $region48
        $region47: #{tpu_custom_call.1} parent=35 // pred_region
          %s317 = sand.u32 %s95, 1
          %s318 = scalar_lea.sflag [#allocation3], %s317
          %s319 = sand.u32 %s95, 1
          %s320 = smul.addr %s319, 8
          %s321 = scalar_lea.vmem [#allocation2], %s320
          %s323 = ssub.s32 128, 128
          %324 = vsyncadd %s318, %s323
          %s325 = smul.addr %s29, 128
          %s326 = scalar_lea.hbm %s2, %s325
          %s328 = sshll.u32 %s321, 4
          %s329 = int_to_ptr.vmem [resolvable:$true] %s328
          %331 = dma.hbm_to_vmem [thread:$0]  %s326, 128, %s329, %s318
        $region48: #{tpu_custom_call.1} parent=35 // pred_fallthru
          _
      $region36: #{tpu_custom_call.1} parent=5 // pred_fallthru
        _
      %p332 = scmp.le.s32.totalorder 1, %s21
      %p333 = scmp.lt.s32.totalorder %s21, 5
      %p334 = pnand %p332, %p333
      %p335 = pneg %p334
      // Predicated region
      $region49: #{tpu_custom_call.1} parent=5 // pred_check
        _
      $region50: #{tpu_custom_call.1} parent=5 // pred_check_branch
        %337 = sbr.rel (%p334) target = $region52
      $region51: #{tpu_custom_call.1} parent=5 // pred_region
        %s338 = ssub.s32 %s21, 1
        %s339 = sand.u32 %s98, 1
        %s340 = scalar_lea.sflag [#allocation3], %s339
        %s341 = sand.u32 %s98, 1
        %s342 = smul.addr %s341, 8
        %s343 = scalar_lea.vmem [#allocation2], %s342
        // Predicated region
        $region53: #{tpu_custom_call.1} parent=51 // pred_check
          %p344 = pneg %p111
        $region54: #{tpu_custom_call.1} parent=51 // pred_check_branch
          %346 = sbr.rel (%p344) target = $region56
        $region55: #{tpu_custom_call.1} parent=51 // pred_region
          %347 = dma.done %s340, 128
        $region56: #{tpu_custom_call.1} parent=51 // pred_fallthru
          _
        // Predicated region
        $region57: #{tpu_custom_call.1} parent=51 // pred_check
          %p348 = pneg %p153
        $region58: #{tpu_custom_call.1} parent=51 // pred_check_branch
          %350 = sbr.rel (%p348) target = $region60
        $region59: #{tpu_custom_call.1} parent=51 // pred_region
          %351 = dma.done [#allocation6], 6144
        $region60: #{tpu_custom_call.1} parent=51 // pred_fallthru
          _
        // Predicated region
        $region61: #{tpu_custom_call.1} parent=51 // pred_check
          %p352 = pneg %p195
        $region62: #{tpu_custom_call.1} parent=51 // pred_check_branch
          %354 = sbr.rel (%p352) target = $region64
        $region63: #{tpu_custom_call.1} parent=51 // pred_region
          %355 = dma.done [#allocation6], 2048
        $region64: #{tpu_custom_call.1} parent=51 // pred_fallthru
          _
        %s356 = smul.u32 2, %s31
        %p357 = scmp.lt.s32.totalorder %s356, 3
        %s358 = scalar_select %p357, %s356, 3
        %s359 = smul.addr %s358, 8
        %s360 = scalar_lea.vmem %s0, %s359
        %p361 = pneg %p59
        %p362 = pneg %p56
        %s363 = smul.u32 2, %s30
        %p364 = scmp.lt.s32.totalorder %s363, 3
        %s365 = scalar_select %p364, %s363, 3
        %s366 = smul.addr %s365, 8
        %s367 = scalar_lea.vmem %s1, %s366
        %p368 = pneg %p85
        %p369 = pneg %p82
        %s370 = sand.u32 %s98, 1
        %s371 = scalar_lea.sflag [#allocation3], %s370
        %s372 = sand.u32 %s98, 1
        %s373 = smul.addr %s372, 8
        %s374 = scalar_lea.vmem [#allocation2], %s373
        %p375 = pneg %p111
        %p376 = pneg %p108
        %p377 = pneg %p132
        %p378 = pneg %p129
        %p379 = pneg %p153
        %p380 = pneg %p150
        %p381 = pneg %p174
        %p382 = pneg %p171
        %p383 = pneg %p195
        %p384 = pneg %p192
        %p385 = pneg %p216
        %p386 = pneg %p213
        %p387 = pneg %p242
        %p388 = pneg %p239
        %s389 = sand.u32 %s229, 1
        %s390 = scalar_lea.sflag [#allocation4], %s389
        %s391 = sand.u32 %s229, 1
        %s392 = smul.addr %s391, 16
        %s393 = scalar_lea.vmem [#allocation8], %s392
        %s394 = smul.u32 2, %s31
        %p395 = scmp.lt.s32.totalorder %s394, 3
        %s396 = scalar_select %p395, %s394, 3
        %s397 = smul.addr %s396, 8
        %s398 = scalar_lea.vmem %s0, %s397
        %s399 = smul.u32 2, %s31
        %s400 = smul.u32 2, %s30
        %p401 = scmp.lt.s32.totalorder %s400, 3
        %s402 = scalar_select %p401, %s400, 3
        %s403 = smul.addr %s402, 8
        %s404 = scalar_lea.vmem %s1, %s403
        %s405 = smul.u32 2, %s30
        %s406 = smul.u32 2, %s30
        %v407 = vld [vmem:[%s398] sm:$0xff]
        %v408 = vld [vmem:[%s398 + $0x8] sm:$0xff]
        %v409 = vld [vmem:[%s404] sm:$0xff]
        %v410 = vld [vmem:[%s404 + $0x8] sm:$0xff]
        %v411 = vld [vmem:[%s343] sm:$0xff]
        %413 = vset.pattern.permute.xlu0 0
        %414 = vperm.xlu0 %413, %v409
        %v415 = vpop.permute.xlu0 %414
        %418 = vset.pattern.permute.xlu0 0
        %419 = vperm.xlu0 %418, %v410
        %v420 = vpop.permute.xlu0 %419
        %v422 = vlaneseq
        %v423 = vshrl.u32 %v422, 7
        %v424 = vsub.s32 0, %v423
        %v425 = vrot.slane %v411, %v424
        %v426 = vsub.f32 %v415, %v425
        %v427 = vsub.f32 %v420, %v425
        %v428 = vmul.f32 %v426, %v426
        %v429 = vmul.f32 %v427, %v427
        %v430 = vadd.f32 %v428, 0.0
        %v431 = vadd.f32 %v429, 0.0
        %432 = vset.pattern.permute.xlu0 1
        %433 = vperm.xlu0 %432, %v409
        %v434 = vpop.permute.xlu0 %433
        %436 = vset.pattern.permute.xlu0 1
        %437 = vperm.xlu0 %436, %v410
        %v438 = vpop.permute.xlu0 %437
        %v440 = vlaneseq
        %v441 = vshrl.u32 %v440, 7
        %v442 = vsub.s32 1, %v441
        %v443 = vrot.slane %v411, %v442
        %v444 = vsub.f32 %v434, %v443
        %v445 = vsub.f32 %v438, %v443
        %v446 = vmul.f32 %v444, %v444
        %v447 = vmul.f32 %v445, %v445
        %v448 = vadd.f32 %v430, %v446
        %v449 = vadd.f32 %v431, %v447
        %450 = vset.pattern.permute.xlu0 2
        %451 = vperm.xlu0 %450, %v409
        %v452 = vpop.permute.xlu0 %451
        %454 = vset.pattern.permute.xlu0 2
        %455 = vperm.xlu0 %454, %v410
        %v456 = vpop.permute.xlu0 %455
        %v458 = vlaneseq
        %v459 = vshrl.u32 %v458, 7
        %v460 = vsub.s32 2, %v459
        %v461 = vrot.slane %v411, %v460
        %v462 = vsub.f32 %v452, %v461
        %v463 = vsub.f32 %v456, %v461
        %v464 = vmul.f32 %v462, %v462
        %v465 = vmul.f32 %v463, %v463
        %v466 = vadd.f32 %v448, %v464
        %v467 = vadd.f32 %v449, %v465
        %v468 = vrsqrt.pop %v466
        %v469 = vmul.f32 %v466, %v468
        %vm470 = vcmp.eq.f32.partialorder %v466, inf
        %v471 = vsel %vm470, %v466, %v469
        %vm472 = vcmp.eq.f32.partialorder %v466, 0.0
        %v473 = vand.u32 %v466, 2147483648
        %v474 = vsel %vm472, %v473, %v471
        %v475 = vrsqrt.pop %v467
        %v476 = vmul.f32 %v467, %v475
        %vm477 = vcmp.eq.f32.partialorder %v467, inf
        %v478 = vsel %vm477, %v467, %v476
        %vm479 = vcmp.eq.f32.partialorder %v467, 0.0
        %v480 = vand.u32 %v467, 2147483648
        %v481 = vsel %vm479, %v480, %v478
        %v482 = vld [vmem:[%s3] sm:$0x1]
        %v483 = vlaneseq
        %v484 = vshrl.u32 %v483, 7
        %v485 = vsub.s32 0, %v484
        %v486 = vrot.slane %v474, %v485
        %488 = vbcast.lane.b32.xlu0 %v486, 256
        %v489 = vpop.permute.xlu0 %488
        %s491 = sor.u32 256, 8
        %492 = vbcast.lane.b32.xlu0 %v486, %s491
        %v493 = vpop.permute.xlu0 %492
        %v494 = vlaneseq
        %v495 = vshrl.u32 %v494, 7
        %v496 = vsub.s32 1, %v495
        %v497 = vrot.slane %v474, %v496
        %499 = vbcast.lane.b32.xlu0 %v497, 256
        %v500 = vpop.permute.xlu0 %499
        %s502 = sor.u32 256, 8
        %503 = vbcast.lane.b32.xlu0 %v497, %s502
        %v504 = vpop.permute.xlu0 %503
        %v505 = vlaneseq
        %v506 = vshrl.u32 %v505, 7
        %v507 = vsub.s32 2, %v506
        %v508 = vrot.slane %v474, %v507
        %510 = vbcast.lane.b32.xlu0 %v508, 256
        %v511 = vpop.permute.xlu0 %510
        %s513 = sor.u32 256, 8
        %514 = vbcast.lane.b32.xlu0 %v508, %s513
        %v515 = vpop.permute.xlu0 %514
        %v516 = vlaneseq
        %v517 = vshrl.u32 %v516, 7
        %v518 = vsub.s32 3, %v517
        %v519 = vrot.slane %v474, %v518
        %521 = vbcast.lane.b32.xlu0 %v519, 256
        %v522 = vpop.permute.xlu0 %521
        %s524 = sor.u32 256, 8
        %525 = vbcast.lane.b32.xlu0 %v519, %s524
        %v526 = vpop.permute.xlu0 %525
        %v527 = vlaneseq
        %v528 = vshrl.u32 %v527, 7
        %v529 = vsub.s32 4, %v528
        %v530 = vrot.slane %v474, %v529
        %532 = vbcast.lane.b32.xlu0 %v530, 256
        %v533 = vpop.permute.xlu0 %532
        %s535 = sor.u32 256, 8
        %536 = vbcast.lane.b32.xlu0 %v530, %s535
        %v537 = vpop.permute.xlu0 %536
        %v538 = vlaneseq
        %v539 = vshrl.u32 %v538, 7
        %v540 = vsub.s32 5, %v539
        %v541 = vrot.slane %v474, %v540
        %543 = vbcast.lane.b32.xlu0 %v541, 256
        %v544 = vpop.permute.xlu0 %543
        %s546 = sor.u32 256, 8
        %547 = vbcast.lane.b32.xlu0 %v541, %s546
        %v548 = vpop.permute.xlu0 %547
        %v549 = vlaneseq
        %v550 = vshrl.u32 %v549, 7
        %v551 = vsub.s32 6, %v550
        %v552 = vrot.slane %v474, %v551
        %554 = vbcast.lane.b32.xlu0 %v552, 256
        %v555 = vpop.permute.xlu0 %554
        %s557 = sor.u32 256, 8
        %558 = vbcast.lane.b32.xlu0 %v552, %s557
        %v559 = vpop.permute.xlu0 %558
        %v560 = vlaneseq
        %v561 = vshrl.u32 %v560, 7
        %v562 = vsub.s32 7, %v561
        %v563 = vrot.slane %v474, %v562
        %565 = vbcast.lane.b32.xlu0 %v563, 256
        %v566 = vpop.permute.xlu0 %565
        %s568 = sor.u32 256, 8
        %569 = vbcast.lane.b32.xlu0 %v563, %s568
        %v570 = vpop.permute.xlu0 %569
        %v571 = vlaneseq
        %v572 = vshrl.u32 %v571, 7
        %v573 = vsub.s32 0, %v572
        %v574 = vrot.slane %v481, %v573
        %576 = vbcast.lane.b32.xlu0 %v574, 256
        %v577 = vpop.permute.xlu0 %576
        %s579 = sor.u32 256, 8
        %580 = vbcast.lane.b32.xlu0 %v574, %s579
        %v581 = vpop.permute.xlu0 %580
        %v582 = vlaneseq
        %v583 = vshrl.u32 %v582, 7
        %v584 = vsub.s32 1, %v583
        %v585 = vrot.slane %v481, %v584
        %587 = vbcast.lane.b32.xlu0 %v585, 256
        %v588 = vpop.permute.xlu0 %587
        %s590 = sor.u32 256, 8
        %591 = vbcast.lane.b32.xlu0 %v585, %s590
        %v592 = vpop.permute.xlu0 %591
        %v593 = vlaneseq
        %v594 = vshrl.u32 %v593, 7
        %v595 = vsub.s32 2, %v594
        %v596 = vrot.slane %v481, %v595
        %598 = vbcast.lane.b32.xlu0 %v596, 256
        %v599 = vpop.permute.xlu0 %598
        %s601 = sor.u32 256, 8
        %602 = vbcast.lane.b32.xlu0 %v596, %s601
        %v603 = vpop.permute.xlu0 %602
        %v604 = vlaneseq
        %v605 = vshrl.u32 %v604, 7
        %v606 = vsub.s32 3, %v605
        %v607 = vrot.slane %v481, %v606
        %609 = vbcast.lane.b32.xlu0 %v607, 256
        %v610 = vpop.permute.xlu0 %609
        %s612 = sor.u32 256, 8
        %613 = vbcast.lane.b32.xlu0 %v607, %s612
        %v614 = vpop.permute.xlu0 %613
        %v615 = vlaneseq
        %v616 = vshrl.u32 %v615, 7
        %v617 = vsub.s32 4, %v616
        %v618 = vrot.slane %v481, %v617
        %620 = vbcast.lane.b32.xlu0 %v618, 256
        %v621 = vpop.permute.xlu0 %620
        %s623 = sor.u32 256, 8
        %624 = vbcast.lane.b32.xlu0 %v618, %s623
        %v625 = vpop.permute.xlu0 %624
        %v626 = vlaneseq
        %v627 = vshrl.u32 %v626, 7
        %v628 = vsub.s32 5, %v627
        %v629 = vrot.slane %v481, %v628
        %631 = vbcast.lane.b32.xlu0 %v629, 256
        %v632 = vpop.permute.xlu0 %631
        %s634 = sor.u32 256, 8
        %635 = vbcast.lane.b32.xlu0 %v629, %s634
        %v636 = vpop.permute.xlu0 %635
        %v637 = vlaneseq
        %v638 = vshrl.u32 %v637, 7
        %v639 = vsub.s32 6, %v638
        %v640 = vrot.slane %v481, %v639
        %642 = vbcast.lane.b32.xlu0 %v640, 256
        %v643 = vpop.permute.xlu0 %642
        %s645 = sor.u32 256, 8
        %646 = vbcast.lane.b32.xlu0 %v640, %s645
        %v647 = vpop.permute.xlu0 %646
        %v648 = vlaneseq
        %v649 = vshrl.u32 %v648, 7
        %v650 = vsub.s32 7, %v649
        %v651 = vrot.slane %v481, %v650
        %653 = vbcast.lane.b32.xlu0 %v651, 256
        %v654 = vpop.permute.xlu0 %653
        %s656 = sor.u32 256, 8
        %657 = vbcast.lane.b32.xlu0 %v651, %s656
        %v658 = vpop.permute.xlu0 %657
        %v660 = vlaneseq
        %v661 = vshrl.u32 %v660, 7
        %v662 = vsub.s32 0, %v661
        %v663 = vrot.slane %v482, %v662
        %v665 = vsub.f32 %v489, %v663
        %v666 = vsub.f32 %v493, %v663
        %v667 = vsub.f32 %v500, %v663
        %v668 = vsub.f32 %v504, %v663
        %v669 = vsub.f32 %v511, %v663
        %v670 = vsub.f32 %v515, %v663
        %v671 = vsub.f32 %v522, %v663
        %v672 = vsub.f32 %v526, %v663
        %v673 = vsub.f32 %v533, %v663
        %v674 = vsub.f32 %v537, %v663
        %v675 = vsub.f32 %v544, %v663
        %v676 = vsub.f32 %v548, %v663
        %v677 = vsub.f32 %v555, %v663
        %v678 = vsub.f32 %v559, %v663
        %v679 = vsub.f32 %v566, %v663
        %v680 = vsub.f32 %v570, %v663
        %v681 = vsub.f32 %v577, %v663
        %v682 = vsub.f32 %v581, %v663
        %v683 = vsub.f32 %v588, %v663
        %v684 = vsub.f32 %v592, %v663
        %v685 = vsub.f32 %v599, %v663
        %v686 = vsub.f32 %v603, %v663
        %v687 = vsub.f32 %v610, %v663
        %v688 = vsub.f32 %v614, %v663
        %v689 = vsub.f32 %v621, %v663
        %v690 = vsub.f32 %v625, %v663
        %v691 = vsub.f32 %v632, %v663
        %v692 = vsub.f32 %v636, %v663
        %v693 = vsub.f32 %v643, %v663
        %v694 = vsub.f32 %v647, %v663
        %v695 = vsub.f32 %v654, %v663
        %v696 = vsub.f32 %v658, %v663
        %v697 = vmul.f32 %v665, %v665
        %v698 = vmul.f32 %v666, %v666
        %v699 = vmul.f32 %v667, %v667
        %v700 = vmul.f32 %v668, %v668
        %v701 = vmul.f32 %v669, %v669
        %v702 = vmul.f32 %v670, %v670
        %v703 = vmul.f32 %v671, %v671
        %v704 = vmul.f32 %v672, %v672
        %v705 = vmul.f32 %v673, %v673
        %v706 = vmul.f32 %v674, %v674
        %v707 = vmul.f32 %v675, %v675
        %v708 = vmul.f32 %v676, %v676
        %v709 = vmul.f32 %v677, %v677
        %v710 = vmul.f32 %v678, %v678
        %v711 = vmul.f32 %v679, %v679
        %v712 = vmul.f32 %v680, %v680
        %v713 = vmul.f32 %v681, %v681
        %v714 = vmul.f32 %v682, %v682
        %v715 = vmul.f32 %v683, %v683
        %v716 = vmul.f32 %v684, %v684
        %v717 = vmul.f32 %v685, %v685
        %v718 = vmul.f32 %v686, %v686
        %v719 = vmul.f32 %v687, %v687
        %v720 = vmul.f32 %v688, %v688
        %v721 = vmul.f32 %v689, %v689
        %v722 = vmul.f32 %v690, %v690
        %v723 = vmul.f32 %v691, %v691
        %v724 = vmul.f32 %v692, %v692
        %v725 = vmul.f32 %v693, %v693
        %v726 = vmul.f32 %v694, %v694
        %v727 = vmul.f32 %v695, %v695
        %v728 = vmul.f32 %v696, %v696
        %v729 = vsub.f32 0.0, %v697
        %v730 = vsub.f32 0.0, %v698
        %v731 = vsub.f32 0.0, %v699
        %v732 = vsub.f32 0.0, %v700
        %v733 = vsub.f32 0.0, %v701
        %v734 = vsub.f32 0.0, %v702
        %v735 = vsub.f32 0.0, %v703
        %v736 = vsub.f32 0.0, %v704
        %v737 = vsub.f32 0.0, %v705
        %v738 = vsub.f32 0.0, %v706
        %v739 = vsub.f32 0.0, %v707
        %v740 = vsub.f32 0.0, %v708
        %v741 = vsub.f32 0.0, %v709
        %v742 = vsub.f32 0.0, %v710
        %v743 = vsub.f32 0.0, %v711
        %v744 = vsub.f32 0.0, %v712
        %v745 = vsub.f32 0.0, %v713
        %v746 = vsub.f32 0.0, %v714
        %v747 = vsub.f32 0.0, %v715
        %v748 = vsub.f32 0.0, %v716
        %v749 = vsub.f32 0.0, %v717
        %v750 = vsub.f32 0.0, %v718
        %v751 = vsub.f32 0.0, %v719
        %v752 = vsub.f32 0.0, %v720
        %v753 = vsub.f32 0.0, %v721
        %v754 = vsub.f32 0.0, %v722
        %v755 = vsub.f32 0.0, %v723
        %v756 = vsub.f32 0.0, %v724
        %v757 = vsub.f32 0.0, %v725
        %v758 = vsub.f32 0.0, %v726
        %v759 = vsub.f32 0.0, %v727
        %v760 = vsub.f32 0.0, %v728
        %v761 = vmul.f32 %v729, 1.442695
        %v762 = vpow.pop %v761
        %v763 = vmul.f32 %v730, 1.442695
        %v764 = vpow.pop %v763
        %v765 = vmul.f32 %v731, 1.442695
        %v766 = vpow.pop %v765
        %v767 = vmul.f32 %v732, 1.442695
        %v768 = vpow.pop %v767
        %v769 = vmul.f32 %v733, 1.442695
        %v770 = vpow.pop %v769
        %v771 = vmul.f32 %v734, 1.442695
        %v772 = vpow.pop %v771
        %v773 = vmul.f32 %v735, 1.442695
        %v774 = vpow.pop %v773
        %v775 = vmul.f32 %v736, 1.442695
        %v776 = vpow.pop %v775
        %v777 = vmul.f32 %v737, 1.442695
        %v778 = vpow.pop %v777
        %v779 = vmul.f32 %v738, 1.442695
        %v780 = vpow.pop %v779
        %v781 = vmul.f32 %v739, 1.442695
        %v782 = vpow.pop %v781
        %v783 = vmul.f32 %v740, 1.442695
        %v784 = vpow.pop %v783
        %v785 = vmul.f32 %v741, 1.442695
        %v786 = vpow.pop %v785
        %v787 = vmul.f32 %v742, 1.442695
        %v788 = vpow.pop %v787
        %v789 = vmul.f32 %v743, 1.442695
        %v790 = vpow.pop %v789
        %v791 = vmul.f32 %v744, 1.442695
        %v792 = vpow.pop %v791
        %v793 = vmul.f32 %v745, 1.442695
        %v794 = vpow.pop %v793
        %v795 = vmul.f32 %v746, 1.442695
        %v796 = vpow.pop %v795
        %v797 = vmul.f32 %v747, 1.442695
        %v798 = vpow.pop %v797
        %v799 = vmul.f32 %v748, 1.442695
        %v800 = vpow.pop %v799
        %v801 = vmul.f32 %v749, 1.442695
        %v802 = vpow.pop %v801
        %v803 = vmul.f32 %v750, 1.442695
        %v804 = vpow.pop %v803
        %v805 = vmul.f32 %v751, 1.442695
        %v806 = vpow.pop %v805
        %v807 = vmul.f32 %v752, 1.442695
        %v808 = vpow.pop %v807
        %v809 = vmul.f32 %v753, 1.442695
        %v810 = vpow.pop %v809
        %v811 = vmul.f32 %v754, 1.442695
        %v812 = vpow.pop %v811
        %v813 = vmul.f32 %v755, 1.442695
        %v814 = vpow.pop %v813
        %v815 = vmul.f32 %v756, 1.442695
        %v816 = vpow.pop %v815
        %v817 = vmul.f32 %v757, 1.442695
        %v818 = vpow.pop %v817
        %v819 = vmul.f32 %v758, 1.442695
        %v820 = vpow.pop %v819
        %v821 = vmul.f32 %v759, 1.442695
        %v822 = vpow.pop %v821
        %v823 = vmul.f32 %v760, 1.442695
        %v824 = vpow.pop %v823
        %v825 = vld [vmem:[#allocation5] sm:$0xff]
        %v826 = vld [vmem:[#allocation5 + $0x8] sm:$0xff]
        %v827 = vld [vmem:[#allocation5 + $0x10] sm:$0xff]
        %v828 = vld [vmem:[#allocation5 + $0x18] sm:$0xff]
        %v829 = vld [vmem:[#allocation5 + $0x20] sm:$0xff]
        %v830 = vld [vmem:[#allocation5 + $0x28] sm:$0xff]
        %v831 = vld [vmem:[#allocation5 + $0x30] sm:$0xff]
        %v832 = vld [vmem:[#allocation5 + $0x38] sm:$0xff]
        %v833 = vld [vmem:[#allocation5 + $0x40] sm:$0xff]
        %v834 = vld [vmem:[#allocation5 + $0x48] sm:$0xff]
        %v835 = vld [vmem:[#allocation5 + $0x50] sm:$0xff]
        %v836 = vld [vmem:[#allocation5 + $0x58] sm:$0xff]
        %v837 = vld [vmem:[#allocation5 + $0x60] sm:$0xff]
        %v838 = vld [vmem:[#allocation5 + $0x68] sm:$0xff]
        %v839 = vld [vmem:[#allocation5 + $0x70] sm:$0xff]
        %v840 = vld [vmem:[#allocation5 + $0x78] sm:$0xff]
        %v841 = vld [vmem:[%s3 + $0x1] sm:$0x1]
        %v843 = vlaneseq
        %v844 = vshrl.u32 %v843, 7
        %v845 = vsub.s32 0, %v844
        %v846 = vrot.slane %v841, %v845
        %v848 = vsub.f32 %v489, %v846
        %v849 = vsub.f32 %v493, %v846
        %v850 = vsub.f32 %v500, %v846
        %v851 = vsub.f32 %v504, %v846
        %v852 = vsub.f32 %v511, %v846
        %v853 = vsub.f32 %v515, %v846
        %v854 = vsub.f32 %v522, %v846
        %v855 = vsub.f32 %v526, %v846
        %v856 = vsub.f32 %v533, %v846
        %v857 = vsub.f32 %v537, %v846
        %v858 = vsub.f32 %v544, %v846
        %v859 = vsub.f32 %v548, %v846
        %v860 = vsub.f32 %v555, %v846
        %v861 = vsub.f32 %v559, %v846
        %v862 = vsub.f32 %v566, %v846
        %v863 = vsub.f32 %v570, %v846
        %v864 = vsub.f32 %v577, %v846
        %v865 = vsub.f32 %v581, %v846
        %v866 = vsub.f32 %v588, %v846
        %v867 = vsub.f32 %v592, %v846
        %v868 = vsub.f32 %v599, %v846
        %v869 = vsub.f32 %v603, %v846
        %v870 = vsub.f32 %v610, %v846
        %v871 = vsub.f32 %v614, %v846
        %v872 = vsub.f32 %v621, %v846
        %v873 = vsub.f32 %v625, %v846
        %v874 = vsub.f32 %v632, %v846
        %v875 = vsub.f32 %v636, %v846
        %v876 = vsub.f32 %v643, %v846
        %v877 = vsub.f32 %v647, %v846
        %v878 = vsub.f32 %v654, %v846
        %v879 = vsub.f32 %v658, %v846
        %v880 = vmul.f32 %v848, %v848
        %v881 = vmul.f32 %v849, %v849
        %v882 = vmul.f32 %v850, %v850
        %v883 = vmul.f32 %v851, %v851
        %v884 = vmul.f32 %v852, %v852
        %v885 = vmul.f32 %v853, %v853
        %v886 = vmul.f32 %v854, %v854
        %v887 = vmul.f32 %v855, %v855
        %v888 = vmul.f32 %v856, %v856
        %v889 = vmul.f32 %v857, %v857
        %v890 = vmul.f32 %v858, %v858
        %v891 = vmul.f32 %v859, %v859
        %v892 = vmul.f32 %v860, %v860
        %v893 = vmul.f32 %v861, %v861
        %v894 = vmul.f32 %v862, %v862
        %v895 = vmul.f32 %v863, %v863
        %v896 = vmul.f32 %v864, %v864
        %v897 = vmul.f32 %v865, %v865
        %v898 = vmul.f32 %v866, %v866
        %v899 = vmul.f32 %v867, %v867
        %v900 = vmul.f32 %v868, %v868
        %v901 = vmul.f32 %v869, %v869
        %v902 = vmul.f32 %v870, %v870
        %v903 = vmul.f32 %v871, %v871
        %v904 = vmul.f32 %v872, %v872
        %v905 = vmul.f32 %v873, %v873
        %v906 = vmul.f32 %v874, %v874
        %v907 = vmul.f32 %v875, %v875
        %v908 = vmul.f32 %v876, %v876
        %v909 = vmul.f32 %v877, %v877
        %v910 = vmul.f32 %v878, %v878
        %v911 = vmul.f32 %v879, %v879
        %v912 = vsub.f32 0.0, %v880
        %v913 = vsub.f32 0.0, %v881
        %v914 = vsub.f32 0.0, %v882
        %v915 = vsub.f32 0.0, %v883
        %v916 = vsub.f32 0.0, %v884
        %v917 = vsub.f32 0.0, %v885
        %v918 = vsub.f32 0.0, %v886
        %v919 = vsub.f32 0.0, %v887
        %v920 = vsub.f32 0.0, %v888
        %v921 = vsub.f32 0.0, %v889
        %v922 = vsub.f32 0.0, %v890
        %v923 = vsub.f32 0.0, %v891
        %v924 = vsub.f32 0.0, %v892
        %v925 = vsub.f32 0.0, %v893
        %v926 = vsub.f32 0.0, %v894
        %v927 = vsub.f32 0.0, %v895
        %v928 = vsub.f32 0.0, %v896
        %v929 = vsub.f32 0.0, %v897
        %v930 = vsub.f32 0.0, %v898
        %v931 = vsub.f32 0.0, %v899
        %v932 = vsub.f32 0.0, %v900
        %v933 = vsub.f32 0.0, %v901
        %v934 = vsub.f32 0.0, %v902
        %v935 = vsub.f32 0.0, %v903
        %v936 = vsub.f32 0.0, %v904
        %v937 = vsub.f32 0.0, %v905
        %v938 = vsub.f32 0.0, %v906
        %v939 = vsub.f32 0.0, %v907
        %v940 = vsub.f32 0.0, %v908
        %v941 = vsub.f32 0.0, %v909
        %v942 = vsub.f32 0.0, %v910
        %v943 = vsub.f32 0.0, %v911
        %v944 = vmul.f32 %v912, 1.442695
        %v945 = vpow.pop %v944
        %v946 = vmul.f32 %v913, 1.442695
        %v947 = vpow.pop %v946
        %v948 = vmul.f32 %v914, 1.442695
        %v949 = vpow.pop %v948
        %v950 = vmul.f32 %v915, 1.442695
        %v951 = vpow.pop %v950
        %v952 = vmul.f32 %v916, 1.442695
        %v953 = vpow.pop %v952
        %v954 = vmul.f32 %v917, 1.442695
        %v955 = vpow.pop %v954
        %v956 = vmul.f32 %v918, 1.442695
        %v957 = vpow.pop %v956
        %v958 = vmul.f32 %v919, 1.442695
        %v959 = vpow.pop %v958
        %v960 = vmul.f32 %v920, 1.442695
        %v961 = vpow.pop %v960
        %v962 = vmul.f32 %v921, 1.442695
        %v963 = vpow.pop %v962
        %v964 = vmul.f32 %v922, 1.442695
        %v965 = vpow.pop %v964
        %v966 = vmul.f32 %v923, 1.442695
        %v967 = vpow.pop %v966
        %v968 = vmul.f32 %v924, 1.442695
        %v969 = vpow.pop %v968
        %v970 = vmul.f32 %v925, 1.442695
        %v971 = vpow.pop %v970
        %v972 = vmul.f32 %v926, 1.442695
        %v973 = vpow.pop %v972
        %v974 = vmul.f32 %v927, 1.442695
        %v975 = vpow.pop %v974
        %v976 = vmul.f32 %v928, 1.442695
        %v977 = vpow.pop %v976
        %v978 = vmul.f32 %v929, 1.442695
        %v979 = vpow.pop %v978
        %v980 = vmul.f32 %v930, 1.442695
        %v981 = vpow.pop %v980
        %v982 = vmul.f32 %v931, 1.442695
        %v983 = vpow.pop %v982
        %v984 = vmul.f32 %v932, 1.442695
        %v985 = vpow.pop %v984
        %v986 = vmul.f32 %v933, 1.442695
        %v987 = vpow.pop %v986
        %v988 = vmul.f32 %v934, 1.442695
        %v989 = vpow.pop %v988
        %v990 = vmul.f32 %v935, 1.442695
        %v991 = vpow.pop %v990
        %v992 = vmul.f32 %v936, 1.442695
        %v993 = vpow.pop %v992
        %v994 = vmul.f32 %v937, 1.442695
        %v995 = vpow.pop %v994
        %v996 = vmul.f32 %v938, 1.442695
        %v997 = vpow.pop %v996
        %v998 = vmul.f32 %v939, 1.442695
        %v999 = vpow.pop %v998
        %v1000 = vmul.f32 %v940, 1.442695
        %v1001 = vpow.pop %v1000
        %v1002 = vmul.f32 %v941, 1.442695
        %v1003 = vpow.pop %v1002
        %v1004 = vmul.f32 %v942, 1.442695
        %v1005 = vpow.pop %v1004
        %v1006 = vmul.f32 %v943, 1.442695
        %v1007 = vpow.pop %v1006
        %v1008 = vld [vmem:[#allocation5 + $0x80] sm:$0xff]
        %v1009 = vld [vmem:[#allocation5 + $0x88] sm:$0xff]
        %v1010 = vld [vmem:[#allocation5 + $0x90] sm:$0xff]
        %v1011 = vld [vmem:[#allocation5 + $0x98] sm:$0xff]
        %v1012 = vld [vmem:[#allocation5 + $0xa0] sm:$0xff]
        %v1013 = vld [vmem:[#allocation5 + $0xa8] sm:$0xff]
        %v1014 = vld [vmem:[#allocation5 + $0xb0] sm:$0xff]
        %v1015 = vld [vmem:[#allocation5 + $0xb8] sm:$0xff]
        %v1016 = vld [vmem:[#allocation5 + $0xc0] sm:$0xff]
        %v1017 = vld [vmem:[#allocation5 + $0xc8] sm:$0xff]
        %v1018 = vld [vmem:[#allocation5 + $0xd0] sm:$0xff]
        %v1019 = vld [vmem:[#allocation5 + $0xd8] sm:$0xff]
        %v1020 = vld [vmem:[#allocation5 + $0xe0] sm:$0xff]
        %v1021 = vld [vmem:[#allocation5 + $0xe8] sm:$0xff]
        %v1022 = vld [vmem:[#allocation5 + $0xf0] sm:$0xff]
        %v1023 = vld [vmem:[#allocation5 + $0xf8] sm:$0xff]
        %1024 = vmatprep.subr.mxu0 0.0
        %1025 = vmatpush1.msra.mxu0 %v1008
        %1026 = vmatprep.subr.mxu0 0.0
        %1027 = vmatpush1.msra.mxu0 %v1009
        %1028 = vmatprep.subr.mxu0 0.0
        %1029 = vmatpush1.msra.mxu0 %v1010
        %1030 = vmatprep.subr.mxu0 0.0
        %1031 = vmatpush1.msra.mxu0 %v1011
        %1032 = vmatprep.subr.mxu0 0.0
        %1033 = vmatpush1.msra.mxu0 %v1012
        %1034 = vmatprep.subr.mxu0 0.0
        %1035 = vmatpush1.msra.mxu0 %v1013
        %1036 = vmatprep.subr.mxu0 0.0
        %1037 = vmatpush1.msra.mxu0 %v1014
        %1038 = vmatprep.subr.mxu0 0.0
        %1039 = vmatpush1.msra.mxu0 %v1015
        %1040 = vmatprep.subr.mxu0 0.0
        %1041 = vmatpush1.msra.mxu0 %v1016
        %1042 = vmatprep.subr.mxu0 0.0
        %1043 = vmatpush1.msra.mxu0 %v1017
        %1044 = vmatprep.subr.mxu0 0.0
        %1045 = vmatpush1.msra.mxu0 %v1018
        %1046 = vmatprep.subr.mxu0 0.0
        %1047 = vmatpush1.msra.mxu0 %v1019
        %1048 = vmatprep.subr.mxu0 0.0
        %1049 = vmatpush1.msra.mxu0 %v1020
        %1050 = vmatprep.subr.mxu0 0.0
        %1051 = vmatpush1.msra.mxu0 %v1021
        %1052 = vmatprep.subr.mxu0 0.0
        %1053 = vmatpush1.msra.mxu0 %v1022
        %1054 = vmatprep.subr.mxu0 0.0
        %1055 = vmatpush1.msra.mxu0 %v1023
        %1056 = vmatprep.subr.mxu0 0.0
        %1057 = vmatpush1.msra.mxu0 0.0
        %1058 = vmatprep.subr.mxu0 0.0
        %1059 = vmatpush1.msra.mxu0 0.0
        %1060 = vmatprep.subr.mxu0 0.0
        %1061 = vmatpush1.msra.mxu0 0.0
        %1062 = vmatprep.subr.mxu0 0.0
        %1063 = vmatpush1.msra.mxu0 0.0
        %1064 = vmatprep.subr.mxu0 0.0
        %1065 = vmatpush1.msra.mxu0 0.0
        %1066 = vmatprep.subr.mxu0 0.0
        %1067 = vmatpush1.msra.mxu0 0.0
        %1068 = vmatprep.subr.mxu0 0.0
        %1069 = vmatpush1.msra.mxu0 0.0
        %1070 = vmatprep.subr.mxu0 0.0
        %1071 = vmatpush1.msra.mxu0 0.0
        %1072 = vmatprep.subr.mxu0 0.0
        %1073 = vmatpush1.msra.mxu0 0.0
        %1074 = vmatprep.subr.mxu0 0.0
        %1075 = vmatpush1.msra.mxu0 0.0
        %1076 = vmatprep.subr.mxu0 0.0
        %1077 = vmatpush1.msra.mxu0 0.0
        %1078 = vmatprep.subr.mxu0 0.0
        %1079 = vmatpush1.msra.mxu0 0.0
        %1080 = vmatprep.subr.mxu0 0.0
        %1081 = vmatpush1.msra.mxu0 0.0
        %1082 = vmatprep.subr.mxu0 0.0
        %1083 = vmatpush1.msra.mxu0 0.0
        %1084 = vmatprep.subr.mxu0 0.0
        %1085 = vmatpush1.msra.mxu0 0.0
        %1086 = vmatprep.subr.mxu0 0.0
        %1087 = vmatpush1.msra.mxu0 0.0
        %1088 = vmatprep.mubr.f32.mxu0 0.0
        %1089 = vmatmul.mubr.f32.gmra.mrb[0].mxu0 %v945
        %v1090 = vpop.f32.mrb[0].mxu0
        %v1091 = vadd.f32 0.0, %v1090
        %v1092 = vpop.f32.mrb[0].mxu0
        %1093 = vmatprep.mubr.f32.mxu0 0.0
        %1094 = vmatmul.mubr.f32.gmra.mrb[0].mxu0 %v947
        %v1095 = vpop.f32.mrb[0].mxu0
        %v1096 = vadd.f32 0.0, %v1095
        %v1097 = vpop.f32.mrb[0].mxu0
        %1098 = vmatprep.mubr.f32.mxu0 0.0
        %1099 = vmatmul.mubr.f32.gmra.mrb[0].mxu0 %v949
        %v1100 = vpop.f32.mrb[0].mxu0
        %v1101 = vadd.f32 0.0, %v1100
        %v1102 = vpop.f32.mrb[0].mxu0
        %1103 = vmatprep.mubr.f32.mxu0 0.0
        %1104 = vmatmul.mubr.f32.gmra.mrb[0].mxu0 %v951
        %v1105 = vpop.f32.mrb[0].mxu0
        %v1106 = vadd.f32 0.0, %v1105
        %v1107 = vpop.f32.mrb[0].mxu0
        %1108 = vmatprep.mubr.f32.mxu0 0.0
        %1109 = vmatmul.mubr.f32.gmra.mrb[0].mxu0 %v953
        %v1110 = vpop.f32.mrb[0].mxu0
        %v1111 = vadd.f32 0.0, %v1110
        %v1112 = vpop.f32.mrb[0].mxu0
        %1113 = vmatprep.mubr.f32.mxu0 0.0
        %1114 = vmatmul.mubr.f32.gmra.mrb[0].mxu0 %v955
        %v1115 = vpop.f32.mrb[0].mxu0
        %v1116 = vadd.f32 0.0, %v1115
        %v1117 = vpop.f32.mrb[0].mxu0
        %1118 = vmatprep.mubr.f32.mxu0 0.0
        %1119 = vmatmul.mubr.f32.gmra.mrb[0].mxu0 %v957
        %v1120 = vpop.f32.mrb[0].mxu0
        %v1121 = vadd.f32 0.0, %v1120
        %v1122 = vpop.f32.mrb[0].mxu0
        %1123 = vmatprep.mubr.f32.mxu0 0.0
        %1124 = vmatmul.mubr.f32.gmra.mrb[0].mxu0 %v959
        %v1125 = vpop.f32.mrb[0].mxu0
        %v1126 = vadd.f32 0.0, %v1125
        %v1127 = vpop.f32.mrb[0].mxu0
        %1128 = vmatprep.mubr.f32.mxu0 0.0
        %1129 = vmatmul.mubr.f32.gmra.mrb[0].mxu0 %v961
        %v1130 = vpop.f32.mrb[0].mxu0
        %v1131 = vadd.f32 0.0, %v1130
        %v1132 = vpop.f32.mrb[0].mxu0
        %1133 = vmatprep.mubr.f32.mxu0 0.0
        %1134 = vmatmul.mubr.f32.gmra.mrb[0].mxu0 %v963
        %v1135 = vpop.f32.mrb[0].mxu0
        %v1136 = vadd.f32 0.0, %v1135
        %v1137 = vpop.f32.mrb[0].mxu0
        %1138 = vmatprep.mubr.f32.mxu0 0.0
        %1139 = vmatmul.mubr.f32.gmra.mrb[0].mxu0 %v965
        %v1140 = vpop.f32.mrb[0].mxu0
        %v1141 = vadd.f32 0.0, %v1140
        %v1142 = vpop.f32.mrb[0].mxu0
        %1143 = vmatprep.mubr.f32.mxu0 0.0
        %1144 = vmatmul.mubr.f32.gmra.mrb[0].mxu0 %v967
        %v1145 = vpop.f32.mrb[0].mxu0
        %v1146 = vadd.f32 0.0, %v1145
        %v1147 = vpop.f32.mrb[0].mxu0
        %1148 = vmatprep.mubr.f32.mxu0 0.0
        %1149 = vmatmul.mubr.f32.gmra.mrb[0].mxu0 %v969
        %v1150 = vpop.f32.mrb[0].mxu0
        %v1151 = vadd.f32 0.0, %v1150
        %v1152 = vpop.f32.mrb[0].mxu0
        %1153 = vmatprep.mubr.f32.mxu0 0.0
        %1154 = vmatmul.mubr.f32.gmra.mrb[0].mxu0 %v971
        %v1155 = vpop.f32.mrb[0].mxu0
        %v1156 = vadd.f32 0.0, %v1155
        %v1157 = vpop.f32.mrb[0].mxu0
        %1158 = vmatprep.mubr.f32.mxu0 0.0
        %1159 = vmatmul.mubr.f32.gmra.mrb[0].mxu0 %v973
        %v1160 = vpop.f32.mrb[0].mxu0
        %v1161 = vadd.f32 0.0, %v1160
        %v1162 = vpop.f32.mrb[0].mxu0
        %1163 = vmatprep.mubr.f32.mxu0 0.0
        %1164 = vmatmul.mubr.f32.gmra.mrb[0].mxu0 %v975
        %v1165 = vpop.f32.mrb[0].mxu0
        %v1166 = vadd.f32 0.0, %v1165
        %v1167 = vpop.f32.mrb[0].mxu0
        %1168 = vmatprep.mubr.f32.mxu0 0.0
        %1169 = vmatmul.mubr.f32.gmra.mrb[0].mxu0 %v977
        %v1170 = vpop.f32.mrb[0].mxu0
        %v1171 = vadd.f32 0.0, %v1170
        %v1172 = vpop.f32.mrb[0].mxu0
        %1173 = vmatprep.mubr.f32.mxu0 0.0
        %1174 = vmatmul.mubr.f32.gmra.mrb[0].mxu0 %v979
        %v1175 = vpop.f32.mrb[0].mxu0
        %v1176 = vadd.f32 0.0, %v1175
        %v1177 = vpop.f32.mrb[0].mxu0
        %1178 = vmatprep.mubr.f32.mxu0 0.0
        %1179 = vmatmul.mubr.f32.gmra.mrb[0].mxu0 %v981
        %v1180 = vpop.f32.mrb[0].mxu0
        %v1181 = vadd.f32 0.0, %v1180
        %v1182 = vpop.f32.mrb[0].mxu0
        %1183 = vmatprep.mubr.f32.mxu0 0.0
        %1184 = vmatmul.mubr.f32.gmra.mrb[0].mxu0 %v983
        %v1185 = vpop.f32.mrb[0].mxu0
        %v1186 = vadd.f32 0.0, %v1185
        %v1187 = vpop.f32.mrb[0].mxu0
        %1188 = vmatprep.mubr.f32.mxu0 0.0
        %1189 = vmatmul.mubr.f32.gmra.mrb[0].mxu0 %v985
        %v1190 = vpop.f32.mrb[0].mxu0
        %v1191 = vadd.f32 0.0, %v1190
        %v1192 = vpop.f32.mrb[0].mxu0
        %1193 = vmatprep.mubr.f32.mxu0 0.0
        %1194 = vmatmul.mubr.f32.gmra.mrb[0].mxu0 %v987
        %v1195 = vpop.f32.mrb[0].mxu0
        %v1196 = vadd.f32 0.0, %v1195
        %v1197 = vpop.f32.mrb[0].mxu0
        %1198 = vmatprep.mubr.f32.mxu0 0.0
        %1199 = vmatmul.mubr.f32.gmra.mrb[0].mxu0 %v989
        %v1200 = vpop.f32.mrb[0].mxu0
        %v1201 = vadd.f32 0.0, %v1200
        %v1202 = vpop.f32.mrb[0].mxu0
        %1203 = vmatprep.mubr.f32.mxu0 0.0
        %1204 = vmatmul.mubr.f32.gmra.mrb[0].mxu0 %v991
        %v1205 = vpop.f32.mrb[0].mxu0
        %v1206 = vadd.f32 0.0, %v1205
        %v1207 = vpop.f32.mrb[0].mxu0
        %1208 = vmatprep.mubr.f32.mxu0 0.0
        %1209 = vmatmul.mubr.f32.gmra.mrb[0].mxu0 %v993
        %v1210 = vpop.f32.mrb[0].mxu0
        %v1211 = vadd.f32 0.0, %v1210
        %v1212 = vpop.f32.mrb[0].mxu0
        %1213 = vmatprep.mubr.f32.mxu0 0.0
        %1214 = vmatmul.mubr.f32.gmra.mrb[0].mxu0 %v995
        %v1215 = vpop.f32.mrb[0].mxu0
        %v1216 = vadd.f32 0.0, %v1215
        %v1217 = vpop.f32.mrb[0].mxu0
        %1218 = vmatprep.mubr.f32.mxu0 0.0
        %1219 = vmatmul.mubr.f32.gmra.mrb[0].mxu0 %v997
        %v1220 = vpop.f32.mrb[0].mxu0
        %v1221 = vadd.f32 0.0, %v1220
        %v1222 = vpop.f32.mrb[0].mxu0
        %1223 = vmatprep.mubr.f32.mxu0 0.0
        %1224 = vmatmul.mubr.f32.gmra.mrb[0].mxu0 %v999
        %v1225 = vpop.f32.mrb[0].mxu0
        %v1226 = vadd.f32 0.0, %v1225
        %v1227 = vpop.f32.mrb[0].mxu0
        %1228 = vmatprep.mubr.f32.mxu0 0.0
        %1229 = vmatmul.mubr.f32.gmra.mrb[0].mxu0 %v1001
        %v1230 = vpop.f32.mrb[0].mxu0
        %v1231 = vadd.f32 0.0, %v1230
        %v1232 = vpop.f32.mrb[0].mxu0
        %1233 = vmatprep.mubr.f32.mxu0 0.0
        %1234 = vmatmul.mubr.f32.gmra.mrb[0].mxu0 %v1003
        %v1235 = vpop.f32.mrb[0].mxu0
        %v1236 = vadd.f32 0.0, %v1235
        %v1237 = vpop.f32.mrb[0].mxu0
        %1238 = vmatprep.mubr.f32.mxu0 0.0
        %1239 = vmatmul.mubr.f32.gmra.mrb[0].mxu0 %v1005
        %v1240 = vpop.f32.mrb[0].mxu0
        %v1241 = vadd.f32 0.0, %v1240
        %v1242 = vpop.f32.mrb[0].mxu0
        %1243 = vmatprep.mubr.f32.mxu0 0.0
        %1244 = vmatmul.mubr.f32.gmra.mrb[0].mxu0 %v1007
        %v1245 = vpop.f32.mrb[0].mxu0
        %v1246 = vadd.f32 0.0, %v1245
        %v1247 = vpop.f32.mrb[0].mxu0
        %1248 = vdwg.mxu0
        %1249 = vmatprep.subr.mxu0 0.0
        %1250 = vmatpush1.msra.mxu0 %v825
        %1251 = vmatprep.subr.mxu0 0.0
        %1252 = vmatpush1.msra.mxu0 %v826
        %1253 = vmatprep.subr.mxu0 0.0
        %1254 = vmatpush1.msra.mxu0 %v827
        %1255 = vmatprep.subr.mxu0 0.0
        %1256 = vmatpush1.msra.mxu0 %v828
        %1257 = vmatprep.subr.mxu0 0.0
        %1258 = vmatpush1.msra.mxu0 %v829
        %1259 = vmatprep.subr.mxu0 0.0
        %1260 = vmatpush1.msra.mxu0 %v830
        %1261 = vmatprep.subr.mxu0 0.0
        %1262 = vmatpush1.msra.mxu0 %v831
        %1263 = vmatprep.subr.mxu0 0.0
        %1264 = vmatpush1.msra.mxu0 %v832
        %1265 = vmatprep.subr.mxu0 0.0
        %1266 = vmatpush1.msra.mxu0 %v833
        %1267 = vmatprep.subr.mxu0 0.0
        %1268 = vmatpush1.msra.mxu0 %v834
        %1269 = vmatprep.subr.mxu0 0.0
        %1270 = vmatpush1.msra.mxu0 %v835
        %1271 = vmatprep.subr.mxu0 0.0
        %1272 = vmatpush1.msra.mxu0 %v836
        %1273 = vmatprep.subr.mxu0 0.0
        %1274 = vmatpush1.msra.mxu0 %v837
        %1275 = vmatprep.subr.mxu0 0.0
        %1276 = vmatpush1.msra.mxu0 %v838
        %1277 = vmatprep.subr.mxu0 0.0
        %1278 = vmatpush1.msra.mxu0 %v839
        %1279 = vmatprep.subr.mxu0 0.0
        %1280 = vmatpush1.msra.mxu0 %v840
        %1281 = vmatprep.subr.mxu0 0.0
        %1282 = vmatpush1.msra.mxu0 0.0
        %1283 = vmatprep.subr.mxu0 0.0
        %1284 = vmatpush1.msra.mxu0 0.0
        %1285 = vmatprep.subr.mxu0 0.0
        %1286 = vmatpush1.msra.mxu0 0.0
        %1287 = vmatprep.subr.mxu0 0.0
        %1288 = vmatpush1.msra.mxu0 0.0
        %1289 = vmatprep.subr.mxu0 0.0
        %1290 = vmatpush1.msra.mxu0 0.0
        %1291 = vmatprep.subr.mxu0 0.0
        %1292 = vmatpush1.msra.mxu0 0.0
        %1293 = vmatprep.subr.mxu0 0.0
        %1294 = vmatpush1.msra.mxu0 0.0
        %1295 = vmatprep.subr.mxu0 0.0
        %1296 = vmatpush1.msra.mxu0 0.0
        %1297 = vmatprep.subr.mxu0 0.0
        %1298 = vmatpush1.msra.mxu0 0.0
        %1299 = vmatprep.subr.mxu0 0.0
        %1300 = vmatpush1.msra.mxu0 0.0
        %1301 = vmatprep.subr.mxu0 0.0
        %1302 = vmatpush1.msra.mxu0 0.0
        %1303 = vmatprep.subr.mxu0 0.0
        %1304 = vmatpush1.msra.mxu0 0.0
        %1305 = vmatprep.subr.mxu0 0.0
        %1306 = vmatpush1.msra.mxu0 0.0
        %1307 = vmatprep.subr.mxu0 0.0
        %1308 = vmatpush1.msra.mxu0 0.0
        %1309 = vmatprep.subr.mxu0 0.0
        %1310 = vmatpush1.msra.mxu0 0.0
        %1311 = vmatprep.subr.mxu0 0.0
        %1312 = vmatpush1.msra.mxu0 0.0
        %1313 = vmatprep.mubr.f32.mxu0 0.0
        %1314 = vmatmul.mubr.f32.gmra.mrb[0].mxu0 %v762
        %v1315 = vpop.f32.mrb[0].mxu0
        %v1316 = vadd.f32 %v1091, %v1315
        %v1317 = vpop.f32.mrb[0].mxu0
        %1318 = vmatprep.mubr.f32.mxu0 0.0
        %1319 = vmatmul.mubr.f32.gmra.mrb[0].mxu0 %v764
        %v1320 = vpop.f32.mrb[0].mxu0
        %v1321 = vadd.f32 %v1096, %v1320
        %v1322 = vpop.f32.mrb[0].mxu0
        %1323 = vmatprep.mubr.f32.mxu0 0.0
        %1324 = vmatmul.mubr.f32.gmra.mrb[0].mxu0 %v766
        %v1325 = vpop.f32.mrb[0].mxu0
        %v1326 = vadd.f32 %v1101, %v1325
        %v1327 = vpop.f32.mrb[0].mxu0
        %1328 = vmatprep.mubr.f32.mxu0 0.0
        %1329 = vmatmul.mubr.f32.gmra.mrb[0].mxu0 %v768
        %v1330 = vpop.f32.mrb[0].mxu0
        %v1331 = vadd.f32 %v1106, %v1330
        %v1332 = vpop.f32.mrb[0].mxu0
        %1333 = vmatprep.mubr.f32.mxu0 0.0
        %1334 = vmatmul.mubr.f32.gmra.mrb[0].mxu0 %v770
        %v1335 = vpop.f32.mrb[0].mxu0
        %v1336 = vadd.f32 %v1111, %v1335
        %v1337 = vpop.f32.mrb[0].mxu0
        %1338 = vmatprep.mubr.f32.mxu0 0.0
        %1339 = vmatmul.mubr.f32.gmra.mrb[0].mxu0 %v772
        %v1340 = vpop.f32.mrb[0].mxu0
        %v1341 = vadd.f32 %v1116, %v1340
        %v1342 = vpop.f32.mrb[0].mxu0
        %1343 = vmatprep.mubr.f32.mxu0 0.0
        %1344 = vmatmul.mubr.f32.gmra.mrb[0].mxu0 %v774
        %v1345 = vpop.f32.mrb[0].mxu0
        %v1346 = vadd.f32 %v1121, %v1345
        %v1347 = vpop.f32.mrb[0].mxu0
        %1348 = vmatprep.mubr.f32.mxu0 0.0
        %1349 = vmatmul.mubr.f32.gmra.mrb[0].mxu0 %v776
        %v1350 = vpop.f32.mrb[0].mxu0
        %v1351 = vadd.f32 %v1126, %v1350
        %v1352 = vpop.f32.mrb[0].mxu0
        %1353 = vmatprep.mubr.f32.mxu0 0.0
        %1354 = vmatmul.mubr.f32.gmra.mrb[0].mxu0 %v778
        %v1355 = vpop.f32.mrb[0].mxu0
        %v1356 = vadd.f32 %v1131, %v1355
        %v1357 = vpop.f32.mrb[0].mxu0
        %1358 = vmatprep.mubr.f32.mxu0 0.0
        %1359 = vmatmul.mubr.f32.gmra.mrb[0].mxu0 %v780
        %v1360 = vpop.f32.mrb[0].mxu0
        %v1361 = vadd.f32 %v1136, %v1360
        %v1362 = vpop.f32.mrb[0].mxu0
        %1363 = vmatprep.mubr.f32.mxu0 0.0
        %1364 = vmatmul.mubr.f32.gmra.mrb[0].mxu0 %v782
        %v1365 = vpop.f32.mrb[0].mxu0
        %v1366 = vadd.f32 %v1141, %v1365
        %v1367 = vpop.f32.mrb[0].mxu0
        %1368 = vmatprep.mubr.f32.mxu0 0.0
        %1369 = vmatmul.mubr.f32.gmra.mrb[0].mxu0 %v784
        %v1370 = vpop.f32.mrb[0].mxu0
        %v1371 = vadd.f32 %v1146, %v1370
        %v1372 = vpop.f32.mrb[0].mxu0
        %1373 = vmatprep.mubr.f32.mxu0 0.0
        %1374 = vmatmul.mubr.f32.gmra.mrb[0].mxu0 %v786
        %v1375 = vpop.f32.mrb[0].mxu0
        %v1376 = vadd.f32 %v1151, %v1375
        %v1377 = vpop.f32.mrb[0].mxu0
        %1378 = vmatprep.mubr.f32.mxu0 0.0
        %1379 = vmatmul.mubr.f32.gmra.mrb[0].mxu0 %v788
        %v1380 = vpop.f32.mrb[0].mxu0
        %v1381 = vadd.f32 %v1156, %v1380
        %v1382 = vpop.f32.mrb[0].mxu0
        %1383 = vmatprep.mubr.f32.mxu0 0.0
        %1384 = vmatmul.mubr.f32.gmra.mrb[0].mxu0 %v790
        %v1385 = vpop.f32.mrb[0].mxu0
        %v1386 = vadd.f32 %v1161, %v1385
        %v1387 = vpop.f32.mrb[0].mxu0
        %1388 = vmatprep.mubr.f32.mxu0 0.0
        %1389 = vmatmul.mubr.f32.gmra.mrb[0].mxu0 %v792
        %v1390 = vpop.f32.mrb[0].mxu0
        %v1391 = vadd.f32 %v1166, %v1390
        %v1392 = vpop.f32.mrb[0].mxu0
        %1393 = vmatprep.mubr.f32.mxu0 0.0
        %1394 = vmatmul.mubr.f32.gmra.mrb[0].mxu0 %v794
        %v1395 = vpop.f32.mrb[0].mxu0
        %v1396 = vadd.f32 %v1171, %v1395
        %v1397 = vpop.f32.mrb[0].mxu0
        %1398 = vmatprep.mubr.f32.mxu0 0.0
        %1399 = vmatmul.mubr.f32.gmra.mrb[0].mxu0 %v796
        %v1400 = vpop.f32.mrb[0].mxu0
        %v1401 = vadd.f32 %v1176, %v1400
        %v1402 = vpop.f32.mrb[0].mxu0
        %1403 = vmatprep.mubr.f32.mxu0 0.0
        %1404 = vmatmul.mubr.f32.gmra.mrb[0].mxu0 %v798
        %v1405 = vpop.f32.mrb[0].mxu0
        %v1406 = vadd.f32 %v1181, %v1405
        %v1407 = vpop.f32.mrb[0].mxu0
        %1408 = vmatprep.mubr.f32.mxu0 0.0
        %1409 = vmatmul.mubr.f32.gmra.mrb[0].mxu0 %v800
        %v1410 = vpop.f32.mrb[0].mxu0
        %v1411 = vadd.f32 %v1186, %v1410
        %v1412 = vpop.f32.mrb[0].mxu0
        %1413 = vmatprep.mubr.f32.mxu0 0.0
        %1414 = vmatmul.mubr.f32.gmra.mrb[0].mxu0 %v802
        %v1415 = vpop.f32.mrb[0].mxu0
        %v1416 = vadd.f32 %v1191, %v1415
        %v1417 = vpop.f32.mrb[0].mxu0
        %1418 = vmatprep.mubr.f32.mxu0 0.0
        %1419 = vmatmul.mubr.f32.gmra.mrb[0].mxu0 %v804
        %v1420 = vpop.f32.mrb[0].mxu0
        %v1421 = vadd.f32 %v1196, %v1420
        %v1422 = vpop.f32.mrb[0].mxu0
        %1423 = vmatprep.mubr.f32.mxu0 0.0
        %1424 = vmatmul.mubr.f32.gmra.mrb[0].mxu0 %v806
        %v1425 = vpop.f32.mrb[0].mxu0
        %v1426 = vadd.f32 %v1201, %v1425
        %v1427 = vpop.f32.mrb[0].mxu0
        %1428 = vmatprep.mubr.f32.mxu0 0.0
        %1429 = vmatmul.mubr.f32.gmra.mrb[0].mxu0 %v808
        %v1430 = vpop.f32.mrb[0].mxu0
        %v1431 = vadd.f32 %v1206, %v1430
        %v1432 = vpop.f32.mrb[0].mxu0
        %1433 = vmatprep.mubr.f32.mxu0 0.0
        %1434 = vmatmul.mubr.f32.gmra.mrb[0].mxu0 %v810
        %v1435 = vpop.f32.mrb[0].mxu0
        %v1436 = vadd.f32 %v1211, %v1435
        %v1437 = vpop.f32.mrb[0].mxu0
        %1438 = vmatprep.mubr.f32.mxu0 0.0
        %1439 = vmatmul.mubr.f32.gmra.mrb[0].mxu0 %v812
        %v1440 = vpop.f32.mrb[0].mxu0
        %v1441 = vadd.f32 %v1216, %v1440
        %v1442 = vpop.f32.mrb[0].mxu0
        %1443 = vmatprep.mubr.f32.mxu0 0.0
        %1444 = vmatmul.mubr.f32.gmra.mrb[0].mxu0 %v814
        %v1445 = vpop.f32.mrb[0].mxu0
        %v1446 = vadd.f32 %v1221, %v1445
        %v1447 = vpop.f32.mrb[0].mxu0
        %1448 = vmatprep.mubr.f32.mxu0 0.0
        %1449 = vmatmul.mubr.f32.gmra.mrb[0].mxu0 %v816
        %v1450 = vpop.f32.mrb[0].mxu0
        %v1451 = vadd.f32 %v1226, %v1450
        %v1452 = vpop.f32.mrb[0].mxu0
        %1453 = vmatprep.mubr.f32.mxu0 0.0
        %1454 = vmatmul.mubr.f32.gmra.mrb[0].mxu0 %v818
        %v1455 = vpop.f32.mrb[0].mxu0
        %v1456 = vadd.f32 %v1231, %v1455
        %v1457 = vpop.f32.mrb[0].mxu0
        %1458 = vmatprep.mubr.f32.mxu0 0.0
        %1459 = vmatmul.mubr.f32.gmra.mrb[0].mxu0 %v820
        %v1460 = vpop.f32.mrb[0].mxu0
        %v1461 = vadd.f32 %v1236, %v1460
        %v1462 = vpop.f32.mrb[0].mxu0
        %1463 = vmatprep.mubr.f32.mxu0 0.0
        %1464 = vmatmul.mubr.f32.gmra.mrb[0].mxu0 %v822
        %v1465 = vpop.f32.mrb[0].mxu0
        %v1466 = vadd.f32 %v1241, %v1465
        %v1467 = vpop.f32.mrb[0].mxu0
        %1468 = vmatprep.mubr.f32.mxu0 0.0
        %1469 = vmatmul.mubr.f32.gmra.mrb[0].mxu0 %v824
        %v1470 = vpop.f32.mrb[0].mxu0
        %v1471 = vadd.f32 %v1246, %v1470
        %v1472 = vpop.f32.mrb[0].mxu0
        %1473 = vdwg.mxu0
        %v1474 = vld [vmem:[%s3 + $0x2] sm:$0x1]
        %v1476 = vlaneseq
        %v1477 = vshrl.u32 %v1476, 7
        %v1478 = vsub.s32 0, %v1477
        %v1479 = vrot.slane %v1474, %v1478
        %v1481 = vsub.f32 %v489, %v1479
        %v1482 = vsub.f32 %v493, %v1479
        %v1483 = vsub.f32 %v500, %v1479
        %v1484 = vsub.f32 %v504, %v1479
        %v1485 = vsub.f32 %v511, %v1479
        %v1486 = vsub.f32 %v515, %v1479
        %v1487 = vsub.f32 %v522, %v1479
        %v1488 = vsub.f32 %v526, %v1479
        %v1489 = vsub.f32 %v533, %v1479
        %v1490 = vsub.f32 %v537, %v1479
        %v1491 = vsub.f32 %v544, %v1479
        %v1492 = vsub.f32 %v548, %v1479
        %v1493 = vsub.f32 %v555, %v1479
        %v1494 = vsub.f32 %v559, %v1479
        %v1495 = vsub.f32 %v566, %v1479
        %v1496 = vsub.f32 %v570, %v1479
        %v1497 = vsub.f32 %v577, %v1479
        %v1498 = vsub.f32 %v581, %v1479
        %v1499 = vsub.f32 %v588, %v1479
        %v1500 = vsub.f32 %v592, %v1479
        %v1501 = vsub.f32 %v599, %v1479
        %v1502 = vsub.f32 %v603, %v1479
        %v1503 = vsub.f32 %v610, %v1479
        %v1504 = vsub.f32 %v614, %v1479
        %v1505 = vsub.f32 %v621, %v1479
        %v1506 = vsub.f32 %v625, %v1479
        %v1507 = vsub.f32 %v632, %v1479
        %v1508 = vsub.f32 %v636, %v1479
        %v1509 = vsub.f32 %v643, %v1479
        %v1510 = vsub.f32 %v647, %v1479
        %v1511 = vsub.f32 %v654, %v1479
        %v1512 = vsub.f32 %v658, %v1479
        %v1513 = vmul.f32 %v1481, %v1481
        %v1514 = vmul.f32 %v1482, %v1482
        %v1515 = vmul.f32 %v1483, %v1483
        %v1516 = vmul.f32 %v1484, %v1484
        %v1517 = vmul.f32 %v1485, %v1485
        %v1518 = vmul.f32 %v1486, %v1486
        %v1519 = vmul.f32 %v1487, %v1487
        %v1520 = vmul.f32 %v1488, %v1488
        %v1521 = vmul.f32 %v1489, %v1489
        %v1522 = vmul.f32 %v1490, %v1490
        %v1523 = vmul.f32 %v1491, %v1491
        %v1524 = vmul.f32 %v1492, %v1492
        %v1525 = vmul.f32 %v1493, %v1493
        %v1526 = vmul.f32 %v1494, %v1494
        %v1527 = vmul.f32 %v1495, %v1495
        %v1528 = vmul.f32 %v1496, %v1496
        %v1529 = vmul.f32 %v1497, %v1497
        %v1530 = vmul.f32 %v1498, %v1498
        %v1531 = vmul.f32 %v1499, %v1499
        %v1532 = vmul.f32 %v1500, %v1500
        %v1533 = vmul.f32 %v1501, %v1501
        %v1534 = vmul.f32 %v1502, %v1502
        %v1535 = vmul.f32 %v1503, %v1503
        %v1536 = vmul.f32 %v1504, %v1504
        %v1537 = vmul.f32 %v1505, %v1505
        %v1538 = vmul.f32 %v1506, %v1506
        %v1539 = vmul.f32 %v1507, %v1507
        %v1540 = vmul.f32 %v1508, %v1508
        %v1541 = vmul.f32 %v1509, %v1509
        %v1542 = vmul.f32 %v1510, %v1510
        %v1543 = vmul.f32 %v1511, %v1511
        %v1544 = vmul.f32 %v1512, %v1512
        %v1545 = vsub.f32 0.0, %v1513
        %v1546 = vsub.f32 0.0, %v1514
        %v1547 = vsub.f32 0.0, %v1515
        %v1548 = vsub.f32 0.0, %v1516
        %v1549 = vsub.f32 0.0, %v1517
        %v1550 = vsub.f32 0.0, %v1518
        %v1551 = vsub.f32 0.0, %v1519
        %v1552 = vsub.f32 0.0, %v1520
        %v1553 = vsub.f32 0.0, %v1521
        %v1554 = vsub.f32 0.0, %v1522
        %v1555 = vsub.f32 0.0, %v1523
        %v1556 = vsub.f32 0.0, %v1524
        %v1557 = vsub.f32 0.0, %v1525
        %v1558 = vsub.f32 0.0, %v1526
        %v1559 = vsub.f32 0.0, %v1527
        %v1560 = vsub.f32 0.0, %v1528
        %v1561 = vsub.f32 0.0, %v1529
        %v1562 = vsub.f32 0.0, %v1530
        %v1563 = vsub.f32 0.0, %v1531
        %v1564 = vsub.f32 0.0, %v1532
        %v1565 = vsub.f32 0.0, %v1533
        %v1566 = vsub.f32 0.0, %v1534
        %v1567 = vsub.f32 0.0, %v1535
        %v1568 = vsub.f32 0.0, %v1536
        %v1569 = vsub.f32 0.0, %v1537
        %v1570 = vsub.f32 0.0, %v1538
        %v1571 = vsub.f32 0.0, %v1539
        %v1572 = vsub.f32 0.0, %v1540
        %v1573 = vsub.f32 0.0, %v1541
        %v1574 = vsub.f32 0.0, %v1542
        %v1575 = vsub.f32 0.0, %v1543
        %v1576 = vsub.f32 0.0, %v1544
        %v1577 = vmul.f32 %v1545, 1.442695
        %v1578 = vpow.pop %v1577
        %v1579 = vmul.f32 %v1546, 1.442695
        %v1580 = vpow.pop %v1579
        %v1581 = vmul.f32 %v1547, 1.442695
        %v1582 = vpow.pop %v1581
        %v1583 = vmul.f32 %v1548, 1.442695
        %v1584 = vpow.pop %v1583
        %v1585 = vmul.f32 %v1549, 1.442695
        %v1586 = vpow.pop %v1585
        %v1587 = vmul.f32 %v1550, 1.442695
        %v1588 = vpow.pop %v1587
        %v1589 = vmul.f32 %v1551, 1.442695
        %v1590 = vpow.pop %v1589
        %v1591 = vmul.f32 %v1552, 1.442695
        %v1592 = vpow.pop %v1591
        %v1593 = vmul.f32 %v1553, 1.442695
        %v1594 = vpow.pop %v1593
        %v1595 = vmul.f32 %v1554, 1.442695
        %v1596 = vpow.pop %v1595
        %v1597 = vmul.f32 %v1555, 1.442695
        %v1598 = vpow.pop %v1597
        %v1599 = vmul.f32 %v1556, 1.442695
        %v1600 = vpow.pop %v1599
        %v1601 = vmul.f32 %v1557, 1.442695
        %v1602 = vpow.pop %v1601
        %v1603 = vmul.f32 %v1558, 1.442695
        %v1604 = vpow.pop %v1603
        %v1605 = vmul.f32 %v1559, 1.442695
        %v1606 = vpow.pop %v1605
        %v1607 = vmul.f32 %v1560, 1.442695
        %v1608 = vpow.pop %v1607
        %v1609 = vmul.f32 %v1561, 1.442695
        %v1610 = vpow.pop %v1609
        %v1611 = vmul.f32 %v1562, 1.442695
        %v1612 = vpow.pop %v1611
        %v1613 = vmul.f32 %v1563, 1.442695
        %v1614 = vpow.pop %v1613
        %v1615 = vmul.f32 %v1564, 1.442695
        %v1616 = vpow.pop %v1615
        %v1617 = vmul.f32 %v1565, 1.442695
        %v1618 = vpow.pop %v1617
        %v1619 = vmul.f32 %v1566, 1.442695
        %v1620 = vpow.pop %v1619
        %v1621 = vmul.f32 %v1567, 1.442695
        %v1622 = vpow.pop %v1621
        %v1623 = vmul.f32 %v1568, 1.442695
        %v1624 = vpow.pop %v1623
        %v1625 = vmul.f32 %v1569, 1.442695
        %v1626 = vpow.pop %v1625
        %v1627 = vmul.f32 %v1570, 1.442695
        %v1628 = vpow.pop %v1627
        %v1629 = vmul.f32 %v1571, 1.442695
        %v1630 = vpow.pop %v1629
        %v1631 = vmul.f32 %v1572, 1.442695
        %v1632 = vpow.pop %v1631
        %v1633 = vmul.f32 %v1573, 1.442695
        %v1634 = vpow.pop %v1633
        %v1635 = vmul.f32 %v1574, 1.442695
        %v1636 = vpow.pop %v1635
        %v1637 = vmul.f32 %v1575, 1.442695
        %v1638 = vpow.pop %v1637
        %v1639 = vmul.f32 %v1576, 1.442695
        %v1640 = vpow.pop %v1639
        %v1641 = vld [vmem:[#allocation5 + $0x100] sm:$0xff]
        %v1642 = vld [vmem:[#allocation5 + $0x108] sm:$0xff]
        %v1643 = vld [vmem:[#allocation5 + $0x110] sm:$0xff]
        %v1644 = vld [vmem:[#allocation5 + $0x118] sm:$0xff]
        %v1645 = vld [vmem:[#allocation5 + $0x120] sm:$0xff]
        %v1646 = vld [vmem:[#allocation5 + $0x128] sm:$0xff]
        %v1647 = vld [vmem:[#allocation5 + $0x130] sm:$0xff]
        %v1648 = vld [vmem:[#allocation5 + $0x138] sm:$0xff]
        %v1649 = vld [vmem:[#allocation5 + $0x140] sm:$0xff]
        %v1650 = vld [vmem:[#allocation5 + $0x148] sm:$0xff]
        %v1651 = vld [vmem:[#allocation5 + $0x150] sm:$0xff]
        %v1652 = vld [vmem:[#allocation5 + $0x158] sm:$0xff]
        %v1653 = vld [vmem:[#allocation5 + $0x160] sm:$0xff]
        %v1654 = vld [vmem:[#allocation5 + $0x168] sm:$0xff]
        %v1655 = vld [vmem:[#allocation5 + $0x170] sm:$0xff]
        %v1656 = vld [vmem:[#allocation5 + $0x178] sm:$0xff]
        %1657 = vmatprep.subr.mxu0 0.0
        %1658 = vmatpush1.msra.mxu0 %v1641
        %1659 = vmatprep.subr.mxu0 0.0
        %1660 = vmatpush1.msra.mxu0 %v1642
        %1661 = vmatprep.subr.mxu0 0.0
        %1662 = vmatpush1.msra.mxu0 %v1643
        %1663 = vmatprep.subr.mxu0 0.0
        %1664 = vmatpush1.msra.mxu0 %v1644
        %1665 = vmatprep.subr.mxu0 0.0
        %1666 = vmatpush1.msra.mxu0 %v1645
        %1667 = vmatprep.subr.mxu0 0.0
        %1668 = vmatpush1.msra.mxu0 %v1646
        %1669 = vmatprep.subr.mxu0 0.0
        %1670 = vmatpush1.msra.mxu0 %v1647
        %1671 = vmatprep.subr.mxu0 0.0
        %1672 = vmatpush1.msra.mxu0 %v1648
        %1673 = vmatprep.subr.mxu0 0.0
        %1674 = vmatpush1.msra.mxu0 %v1649
        %1675 = vmatprep.subr.mxu0 0.0
        %1676 = vmatpush1.msra.mxu0 %v1650
        %1677 = vmatprep.subr.mxu0 0.0
        %1678 = vmatpush1.msra.mxu0 %v1651
        %1679 = vmatprep.subr.mxu0 0.0
        %1680 = vmatpush1.msra.mxu0 %v1652
        %1681 = vmatprep.subr.mxu0 0.0
        %1682 = vmatpush1.msra.mxu0 %v1653
        %1683 = vmatprep.subr.mxu0 0.0
        %1684 = vmatpush1.msra.mxu0 %v1654
        %1685 = vmatprep.subr.mxu0 0.0
        %1686 = vmatpush1.msra.mxu0 %v1655
        %1687 = vmatprep.subr.mxu0 0.0
        %1688 = vmatpush1.msra.mxu0 %v1656
        %1689 = vmatprep.subr.mxu0 0.0
        %1690 = vmatpush1.msra.mxu0 0.0
        %1691 = vmatprep.subr.mxu0 0.0
        %1692 = vmatpush1.msra.mxu0 0.0
        %1693 = vmatprep.subr.mxu0 0.0
        %1694 = vmatpush1.msra.mxu0 0.0
        %1695 = vmatprep.subr.mxu0 0.0
        %1696 = vmatpush1.msra.mxu0 0.0
        %1697 = vmatprep.subr.mxu0 0.0
        %1698 = vmatpush1.msra.mxu0 0.0
        %1699 = vmatprep.subr.mxu0 0.0
        %1700 = vmatpush1.msra.mxu0 0.0
        %1701 = vmatprep.subr.mxu0 0.0
        %1702 = vmatpush1.msra.mxu0 0.0
        %1703 = vmatprep.subr.mxu0 0.0
        %1704 = vmatpush1.msra.mxu0 0.0
        %1705 = vmatprep.subr.mxu0 0.0
        %1706 = vmatpush1.msra.mxu0 0.0
        %1707 = vmatprep.subr.mxu0 0.0
        %1708 = vmatpush1.msra.mxu0 0.0
        %1709 = vmatprep.subr.mxu0 0.0
        %1710 = vmatpush1.msra.mxu0 0.0
        %1711 = vmatprep.subr.mxu0 0.0
        %1712 = vmatpush1.msra.mxu0 0.0
        %1713 = vmatprep.subr.mxu0 0.0
        %1714 = vmatpush1.msra.mxu0 0.0
        %1715 = vmatprep.subr.mxu0 0.0
        %1716 = vmatpush1.msra.mxu0 0.0
        %1717 = vmatprep.subr.mxu0 0.0
        %1718 = vmatpush1.msra.mxu0 0.0
        %1719 = vmatprep.subr.mxu0 0.0
        %1720 = vmatpush1.msra.mxu0 0.0
        %1721 = vmatprep.mubr.f32.mxu0 0.0
        %1722 = vmatmul.mubr.f32.gmra.mrb[0].mxu0 %v1578
        %v1723 = vpop.f32.mrb[0].mxu0
        %v1724 = vadd.f32 0.0, %v1723
        %v1725 = vpop.f32.mrb[0].mxu0
        %1726 = vmatprep.mubr.f32.mxu0 0.0
        %1727 = vmatmul.mubr.f32.gmra.mrb[0].mxu0 %v1580
        %v1728 = vpop.f32.mrb[0].mxu0
        %v1729 = vadd.f32 0.0, %v1728
        %v1730 = vpop.f32.mrb[0].mxu0
        %1731 = vmatprep.mubr.f32.mxu0 0.0
        %1732 = vmatmul.mubr.f32.gmra.mrb[0].mxu0 %v1582
        %v1733 = vpop.f32.mrb[0].mxu0
        %v1734 = vadd.f32 0.0, %v1733
        %v1735 = vpop.f32.mrb[0].mxu0
        %1736 = vmatprep.mubr.f32.mxu0 0.0
        %1737 = vmatmul.mubr.f32.gmra.mrb[0].mxu0 %v1584
        %v1738 = vpop.f32.mrb[0].mxu0
        %v1739 = vadd.f32 0.0, %v1738
        %v1740 = vpop.f32.mrb[0].mxu0
        %1741 = vmatprep.mubr.f32.mxu0 0.0
        %1742 = vmatmul.mubr.f32.gmra.mrb[0].mxu0 %v1586
        %v1743 = vpop.f32.mrb[0].mxu0
        %v1744 = vadd.f32 0.0, %v1743
        %v1745 = vpop.f32.mrb[0].mxu0
        %1746 = vmatprep.mubr.f32.mxu0 0.0
        %1747 = vmatmul.mubr.f32.gmra.mrb[0].mxu0 %v1588
        %v1748 = vpop.f32.mrb[0].mxu0
        %v1749 = vadd.f32 0.0, %v1748
        %v1750 = vpop.f32.mrb[0].mxu0
        %1751 = vmatprep.mubr.f32.mxu0 0.0
        %1752 = vmatmul.mubr.f32.gmra.mrb[0].mxu0 %v1590
        %v1753 = vpop.f32.mrb[0].mxu0
        %v1754 = vadd.f32 0.0, %v1753
        %v1755 = vpop.f32.mrb[0].mxu0
        %1756 = vmatprep.mubr.f32.mxu0 0.0
        %1757 = vmatmul.mubr.f32.gmra.mrb[0].mxu0 %v1592
        %v1758 = vpop.f32.mrb[0].mxu0
        %v1759 = vadd.f32 0.0, %v1758
        %v1760 = vpop.f32.mrb[0].mxu0
        %1761 = vmatprep.mubr.f32.mxu0 0.0
        %1762 = vmatmul.mubr.f32.gmra.mrb[0].mxu0 %v1594
        %v1763 = vpop.f32.mrb[0].mxu0
        %v1764 = vadd.f32 0.0, %v1763
        %v1765 = vpop.f32.mrb[0].mxu0
        %1766 = vmatprep.mubr.f32.mxu0 0.0
        %1767 = vmatmul.mubr.f32.gmra.mrb[0].mxu0 %v1596
        %v1768 = vpop.f32.mrb[0].mxu0
        %v1769 = vadd.f32 0.0, %v1768
        %v1770 = vpop.f32.mrb[0].mxu0
        %1771 = vmatprep.mubr.f32.mxu0 0.0
        %1772 = vmatmul.mubr.f32.gmra.mrb[0].mxu0 %v1598
        %v1773 = vpop.f32.mrb[0].mxu0
        %v1774 = vadd.f32 0.0, %v1773
        %v1775 = vpop.f32.mrb[0].mxu0
        %1776 = vmatprep.mubr.f32.mxu0 0.0
        %1777 = vmatmul.mubr.f32.gmra.mrb[0].mxu0 %v1600
        %v1778 = vpop.f32.mrb[0].mxu0
        %v1779 = vadd.f32 0.0, %v1778
        %v1780 = vpop.f32.mrb[0].mxu0
        %1781 = vmatprep.mubr.f32.mxu0 0.0
        %1782 = vmatmul.mubr.f32.gmra.mrb[0].mxu0 %v1602
        %v1783 = vpop.f32.mrb[0].mxu0
        %v1784 = vadd.f32 0.0, %v1783
        %v1785 = vpop.f32.mrb[0].mxu0
        %1786 = vmatprep.mubr.f32.mxu0 0.0
        %1787 = vmatmul.mubr.f32.gmra.mrb[0].mxu0 %v1604
        %v1788 = vpop.f32.mrb[0].mxu0
        %v1789 = vadd.f32 0.0, %v1788
        %v1790 = vpop.f32.mrb[0].mxu0
        %1791 = vmatprep.mubr.f32.mxu0 0.0
        %1792 = vmatmul.mubr.f32.gmra.mrb[0].mxu0 %v1606
        %v1793 = vpop.f32.mrb[0].mxu0
        %v1794 = vadd.f32 0.0, %v1793
        %v1795 = vpop.f32.mrb[0].mxu0
        %1796 = vmatprep.mubr.f32.mxu0 0.0
        %1797 = vmatmul.mubr.f32.gmra.mrb[0].mxu0 %v1608
        %v1798 = vpop.f32.mrb[0].mxu0
        %v1799 = vadd.f32 0.0, %v1798
        %v1800 = vpop.f32.mrb[0].mxu0
        %1801 = vmatprep.mubr.f32.mxu0 0.0
        %1802 = vmatmul.mubr.f32.gmra.mrb[0].mxu0 %v1610
        %v1803 = vpop.f32.mrb[0].mxu0
        %v1804 = vadd.f32 0.0, %v1803
        %v1805 = vpop.f32.mrb[0].mxu0
        %1806 = vmatprep.mubr.f32.mxu0 0.0
        %1807 = vmatmul.mubr.f32.gmra.mrb[0].mxu0 %v1612
        %v1808 = vpop.f32.mrb[0].mxu0
        %v1809 = vadd.f32 0.0, %v1808
        %v1810 = vpop.f32.mrb[0].mxu0
        %1811 = vmatprep.mubr.f32.mxu0 0.0
        %1812 = vmatmul.mubr.f32.gmra.mrb[0].mxu0 %v1614
        %v1813 = vpop.f32.mrb[0].mxu0
        %v1814 = vadd.f32 0.0, %v1813
        %v1815 = vpop.f32.mrb[0].mxu0
        %1816 = vmatprep.mubr.f32.mxu0 0.0
        %1817 = vmatmul.mubr.f32.gmra.mrb[0].mxu0 %v1616
        %v1818 = vpop.f32.mrb[0].mxu0
        %v1819 = vadd.f32 0.0, %v1818
        %v1820 = vpop.f32.mrb[0].mxu0
        %1821 = vmatprep.mubr.f32.mxu0 0.0
        %1822 = vmatmul.mubr.f32.gmra.mrb[0].mxu0 %v1618
        %v1823 = vpop.f32.mrb[0].mxu0
        %v1824 = vadd.f32 0.0, %v1823
        %v1825 = vpop.f32.mrb[0].mxu0
        %1826 = vmatprep.mubr.f32.mxu0 0.0
        %1827 = vmatmul.mubr.f32.gmra.mrb[0].mxu0 %v1620
        %v1828 = vpop.f32.mrb[0].mxu0
        %v1829 = vadd.f32 0.0, %v1828
        %v1830 = vpop.f32.mrb[0].mxu0
        %1831 = vmatprep.mubr.f32.mxu0 0.0
        %1832 = vmatmul.mubr.f32.gmra.mrb[0].mxu0 %v1622
        %v1833 = vpop.f32.mrb[0].mxu0
        %v1834 = vadd.f32 0.0, %v1833
        %v1835 = vpop.f32.mrb[0].mxu0
        %1836 = vmatprep.mubr.f32.mxu0 0.0
        %1837 = vmatmul.mubr.f32.gmra.mrb[0].mxu0 %v1624
        %v1838 = vpop.f32.mrb[0].mxu0
        %v1839 = vadd.f32 0.0, %v1838
        %v1840 = vpop.f32.mrb[0].mxu0
        %1841 = vmatprep.mubr.f32.mxu0 0.0
        %1842 = vmatmul.mubr.f32.gmra.mrb[0].mxu0 %v1626
        %v1843 = vpop.f32.mrb[0].mxu0
        %v1844 = vadd.f32 0.0, %v1843
        %v1845 = vpop.f32.mrb[0].mxu0
        %1846 = vmatprep.mubr.f32.mxu0 0.0
        %1847 = vmatmul.mubr.f32.gmra.mrb[0].mxu0 %v1628
        %v1848 = vpop.f32.mrb[0].mxu0
        %v1849 = vadd.f32 0.0, %v1848
        %v1850 = vpop.f32.mrb[0].mxu0
        %1851 = vmatprep.mubr.f32.mxu0 0.0
        %1852 = vmatmul.mubr.f32.gmra.mrb[0].mxu0 %v1630
        %v1853 = vpop.f32.mrb[0].mxu0
        %v1854 = vadd.f32 0.0, %v1853
        %v1855 = vpop.f32.mrb[0].mxu0
        %1856 = vmatprep.mubr.f32.mxu0 0.0
        %1857 = vmatmul.mubr.f32.gmra.mrb[0].mxu0 %v1632
        %v1858 = vpop.f32.mrb[0].mxu0
        %v1859 = vadd.f32 0.0, %v1858
        %v1860 = vpop.f32.mrb[0].mxu0
        %1861 = vmatprep.mubr.f32.mxu0 0.0
        %1862 = vmatmul.mubr.f32.gmra.mrb[0].mxu0 %v1634
        %v1863 = vpop.f32.mrb[0].mxu0
        %v1864 = vadd.f32 0.0, %v1863
        %v1865 = vpop.f32.mrb[0].mxu0
        %1866 = vmatprep.mubr.f32.mxu0 0.0
        %1867 = vmatmul.mubr.f32.gmra.mrb[0].mxu0 %v1636
        %v1868 = vpop.f32.mrb[0].mxu0
        %v1869 = vadd.f32 0.0, %v1868
        %v1870 = vpop.f32.mrb[0].mxu0
        %1871 = vmatprep.mubr.f32.mxu0 0.0
        %1872 = vmatmul.mubr.f32.gmra.mrb[0].mxu0 %v1638
        %v1873 = vpop.f32.mrb[0].mxu0
        %v1874 = vadd.f32 0.0, %v1873
        %v1875 = vpop.f32.mrb[0].mxu0
        %1876 = vmatprep.mubr.f32.mxu0 0.0
        %1877 = vmatmul.mubr.f32.gmra.mrb[0].mxu0 %v1640
        %v1878 = vpop.f32.mrb[0].mxu0
        %v1879 = vadd.f32 0.0, %v1878
        %v1880 = vpop.f32.mrb[0].mxu0
        %1881 = vdwg.mxu0
        %v1882 = vadd.f32 %v1316, %v1724
        %v1883 = vadd.f32 %v1321, %v1729
        %v1884 = vadd.f32 %v1326, %v1734
        %v1885 = vadd.f32 %v1331, %v1739
        %v1886 = vadd.f32 %v1336, %v1744
        %v1887 = vadd.f32 %v1341, %v1749
        %v1888 = vadd.f32 %v1346, %v1754
        %v1889 = vadd.f32 %v1351, %v1759
        %v1890 = vadd.f32 %v1356, %v1764
        %v1891 = vadd.f32 %v1361, %v1769
        %v1892 = vadd.f32 %v1366, %v1774
        %v1893 = vadd.f32 %v1371, %v1779
        %v1894 = vadd.f32 %v1376, %v1784
        %v1895 = vadd.f32 %v1381, %v1789
        %v1896 = vadd.f32 %v1386, %v1794
        %v1897 = vadd.f32 %v1391, %v1799
        %v1898 = vadd.f32 %v1396, %v1804
        %v1899 = vadd.f32 %v1401, %v1809
        %v1900 = vadd.f32 %v1406, %v1814
        %v1901 = vadd.f32 %v1411, %v1819
        %v1902 = vadd.f32 %v1416, %v1824
        %v1903 = vadd.f32 %v1421, %v1829
        %v1904 = vadd.f32 %v1426, %v1834
        %v1905 = vadd.f32 %v1431, %v1839
        %v1906 = vadd.f32 %v1436, %v1844
        %v1907 = vadd.f32 %v1441, %v1849
        %v1908 = vadd.f32 %v1446, %v1854
        %v1909 = vadd.f32 %v1451, %v1859
        %v1910 = vadd.f32 %v1456, %v1864
        %v1911 = vadd.f32 %v1461, %v1869
        %v1912 = vadd.f32 %v1466, %v1874
        %v1913 = vadd.f32 %v1471, %v1879
        %v1914 = vld [vmem:[%s5] sm:$0x1]
        %v1916 = vlaneseq
        %v1917 = vshrl.u32 %v1916, 7
        %v1918 = vsub.s32 0, %v1917
        %v1919 = vrot.slane %v1914, %v1918
        %v1921 = vadd.f32 %v1882, %v1919
        %v1922 = vadd.f32 %v1883, %v1919
        %v1923 = vadd.f32 %v1884, %v1919
        %v1924 = vadd.f32 %v1885, %v1919
        %v1925 = vadd.f32 %v1886, %v1919
        %v1926 = vadd.f32 %v1887, %v1919
        %v1927 = vadd.f32 %v1888, %v1919
        %v1928 = vadd.f32 %v1889, %v1919
        %v1929 = vadd.f32 %v1890, %v1919
        %v1930 = vadd.f32 %v1891, %v1919
        %v1931 = vadd.f32 %v1892, %v1919
        %v1932 = vadd.f32 %v1893, %v1919
        %v1933 = vadd.f32 %v1894, %v1919
        %v1934 = vadd.f32 %v1895, %v1919
        %v1935 = vadd.f32 %v1896, %v1919
        %v1936 = vadd.f32 %v1897, %v1919
        %v1937 = vadd.f32 %v1898, %v1919
        %v1938 = vadd.f32 %v1899, %v1919
        %v1939 = vadd.f32 %v1900, %v1919
        %v1940 = vadd.f32 %v1901, %v1919
        %v1941 = vadd.f32 %v1902, %v1919
        %v1942 = vadd.f32 %v1903, %v1919
        %v1943 = vadd.f32 %v1904, %v1919
        %v1944 = vadd.f32 %v1905, %v1919
        %v1945 = vadd.f32 %v1906, %v1919
        %v1946 = vadd.f32 %v1907, %v1919
        %v1947 = vadd.f32 %v1908, %v1919
        %v1948 = vadd.f32 %v1909, %v1919
        %v1949 = vadd.f32 %v1910, %v1919
        %v1950 = vadd.f32 %v1911, %v1919
        %v1951 = vadd.f32 %v1912, %v1919
        %v1952 = vadd.f32 %v1913, %v1919
        %v1953 = vmax.f32 %v1921, 0.0
        %v1954 = vmax.f32 %v1922, 0.0
        %v1955 = vmax.f32 %v1923, 0.0
        %v1956 = vmax.f32 %v1924, 0.0
        %v1957 = vmax.f32 %v1925, 0.0
        %v1958 = vmax.f32 %v1926, 0.0
        %v1959 = vmax.f32 %v1927, 0.0
        %v1960 = vmax.f32 %v1928, 0.0
        %v1961 = vmax.f32 %v1929, 0.0
        %v1962 = vmax.f32 %v1930, 0.0
        %v1963 = vmax.f32 %v1931, 0.0
        %v1964 = vmax.f32 %v1932, 0.0
        %v1965 = vmax.f32 %v1933, 0.0
        %v1966 = vmax.f32 %v1934, 0.0
        %v1967 = vmax.f32 %v1935, 0.0
        %v1968 = vmax.f32 %v1936, 0.0
        %v1969 = vmax.f32 %v1937, 0.0
        %v1970 = vmax.f32 %v1938, 0.0
        %v1971 = vmax.f32 %v1939, 0.0
        %v1972 = vmax.f32 %v1940, 0.0
        %v1973 = vmax.f32 %v1941, 0.0
        %v1974 = vmax.f32 %v1942, 0.0
        %v1975 = vmax.f32 %v1943, 0.0
        %v1976 = vmax.f32 %v1944, 0.0
        %v1977 = vmax.f32 %v1945, 0.0
        %v1978 = vmax.f32 %v1946, 0.0
        %v1979 = vmax.f32 %v1947, 0.0
        %v1980 = vmax.f32 %v1948, 0.0
        %v1981 = vmax.f32 %v1949, 0.0
        %v1982 = vmax.f32 %v1950, 0.0
        %v1983 = vmax.f32 %v1951, 0.0
        %v1984 = vmax.f32 %v1952, 0.0
        %v1985 = vand.u32 2147483647, %v1921
        %v1986 = vand.u32 2147483647, %v1922
        %v1987 = vand.u32 2147483647, %v1923
        %v1988 = vand.u32 2147483647, %v1924
        %v1989 = vand.u32 2147483647, %v1925
        %v1990 = vand.u32 2147483647, %v1926
        %v1991 = vand.u32 2147483647, %v1927
        %v1992 = vand.u32 2147483647, %v1928
        %v1993 = vand.u32 2147483647, %v1929
        %v1994 = vand.u32 2147483647, %v1930
        %v1995 = vand.u32 2147483647, %v1931
        %v1996 = vand.u32 2147483647, %v1932
        %v1997 = vand.u32 2147483647, %v1933
        %v1998 = vand.u32 2147483647, %v1934
        %v1999 = vand.u32 2147483647, %v1935
        %v2000 = vand.u32 2147483647, %v1936
        %v2001 = vand.u32 2147483647, %v1937
        %v2002 = vand.u32 2147483647, %v1938
        %v2003 = vand.u32 2147483647, %v1939
        %v2004 = vand.u32 2147483647, %v1940
        %v2005 = vand.u32 2147483647, %v1941
        %v2006 = vand.u32 2147483647, %v1942
        %v2007 = vand.u32 2147483647, %v1943
        %v2008 = vand.u32 2147483647, %v1944
        %v2009 = vand.u32 2147483647, %v1945
        %v2010 = vand.u32 2147483647, %v1946
        %v2011 = vand.u32 2147483647, %v1947
        %v2012 = vand.u32 2147483647, %v1948
        %v2013 = vand.u32 2147483647, %v1949
        %v2014 = vand.u32 2147483647, %v1950
        %v2015 = vand.u32 2147483647, %v1951
        %v2016 = vand.u32 2147483647, %v1952
        %v2017 = vsub.f32 0.0, %v1985
        %v2018 = vsub.f32 0.0, %v1986
        %v2019 = vsub.f32 0.0, %v1987
        %v2020 = vsub.f32 0.0, %v1988
        %v2021 = vsub.f32 0.0, %v1989
        %v2022 = vsub.f32 0.0, %v1990
        %v2023 = vsub.f32 0.0, %v1991
        %v2024 = vsub.f32 0.0, %v1992
        %v2025 = vsub.f32 0.0, %v1993
        %v2026 = vsub.f32 0.0, %v1994
        %v2027 = vsub.f32 0.0, %v1995
        %v2028 = vsub.f32 0.0, %v1996
        %v2029 = vsub.f32 0.0, %v1997
        %v2030 = vsub.f32 0.0, %v1998
        %v2031 = vsub.f32 0.0, %v1999
        %v2032 = vsub.f32 0.0, %v2000
        %v2033 = vsub.f32 0.0, %v2001
        %v2034 = vsub.f32 0.0, %v2002
        %v2035 = vsub.f32 0.0, %v2003
        %v2036 = vsub.f32 0.0, %v2004
        %v2037 = vsub.f32 0.0, %v2005
        %v2038 = vsub.f32 0.0, %v2006
        %v2039 = vsub.f32 0.0, %v2007
        %v2040 = vsub.f32 0.0, %v2008
        %v2041 = vsub.f32 0.0, %v2009
        %v2042 = vsub.f32 0.0, %v2010
        %v2043 = vsub.f32 0.0, %v2011
        %v2044 = vsub.f32 0.0, %v2012
        %v2045 = vsub.f32 0.0, %v2013
        %v2046 = vsub.f32 0.0, %v2014
        %v2047 = vsub.f32 0.0, %v2015
        %v2048 = vsub.f32 0.0, %v2016
        %v2049 = vmul.f32 %v2017, 1.442695
        %v2050 = vpow.pop %v2049
        %v2051 = vmul.f32 %v2018, 1.442695
        %v2052 = vpow.pop %v2051
        %v2053 = vmul.f32 %v2019, 1.442695
        %v2054 = vpow.pop %v2053
        %v2055 = vmul.f32 %v2020, 1.442695
        %v2056 = vpow.pop %v2055
        %v2057 = vmul.f32 %v2021, 1.442695
        %v2058 = vpow.pop %v2057
        %v2059 = vmul.f32 %v2022, 1.442695
        %v2060 = vpow.pop %v2059
        %v2061 = vmul.f32 %v2023, 1.442695
        %v2062 = vpow.pop %v2061
        %v2063 = vmul.f32 %v2024, 1.442695
        %v2064 = vpow.pop %v2063
        %v2065 = vmul.f32 %v2025, 1.442695
        %v2066 = vpow.pop %v2065
        %v2067 = vmul.f32 %v2026, 1.442695
        %v2068 = vpow.pop %v2067
        %v2069 = vmul.f32 %v2027, 1.442695
        %v2070 = vpow.pop %v2069
        %v2071 = vmul.f32 %v2028, 1.442695
        %v2072 = vpow.pop %v2071
        %v2073 = vmul.f32 %v2029, 1.442695
        %v2074 = vpow.pop %v2073
        %v2075 = vmul.f32 %v2030, 1.442695
        %v2076 = vpow.pop %v2075
        %v2077 = vmul.f32 %v2031, 1.442695
        %v2078 = vpow.pop %v2077
        %v2079 = vmul.f32 %v2032, 1.442695
        %v2080 = vpow.pop %v2079
        %v2081 = vmul.f32 %v2033, 1.442695
        %v2082 = vpow.pop %v2081
        %v2083 = vmul.f32 %v2034, 1.442695
        %v2084 = vpow.pop %v2083
        %v2085 = vmul.f32 %v2035, 1.442695
        %v2086 = vpow.pop %v2085
        %v2087 = vmul.f32 %v2036, 1.442695
        %v2088 = vpow.pop %v2087
        %v2089 = vmul.f32 %v2037, 1.442695
        %v2090 = vpow.pop %v2089
        %v2091 = vmul.f32 %v2038, 1.442695
        %v2092 = vpow.pop %v2091
        %v2093 = vmul.f32 %v2039, 1.442695
        %v2094 = vpow.pop %v2093
        %v2095 = vmul.f32 %v2040, 1.442695
        %v2096 = vpow.pop %v2095
        %v2097 = vmul.f32 %v2041, 1.442695
        %v2098 = vpow.pop %v2097
        %v2099 = vmul.f32 %v2042, 1.442695
        %v2100 = vpow.pop %v2099
        %v2101 = vmul.f32 %v2043, 1.442695
        %v2102 = vpow.pop %v2101
        %v2103 = vmul.f32 %v2044, 1.442695
        %v2104 = vpow.pop %v2103
        %v2105 = vmul.f32 %v2045, 1.442695
        %v2106 = vpow.pop %v2105
        %v2107 = vmul.f32 %v2046, 1.442695
        %v2108 = vpow.pop %v2107
        %v2109 = vmul.f32 %v2047, 1.442695
        %v2110 = vpow.pop %v2109
        %v2111 = vmul.f32 %v2048, 1.442695
        %v2112 = vpow.pop %v2111
        %v2113 = vadd.f32 %v2050, 1.0
        %v2114 = vlog2.pop %v2113
        %v2115 = vmul.f32 %v2114, 0.6931472
        %v2116 = vmul.f32 -0.5, %v2050
        %v2117 = vadd.f32 %v2116, 1.0
        %v2118 = vmul.f32 %v2117, %v2050
        %v2119 = vand.u32 2147483647, %v2050
        %vm2120 = vcmp.lt.f32.partialorder %v2119, 0.0004427343
        %v2121 = vsel %vm2120, %v2118, %v2115
        %v2122 = vadd.f32 %v2052, 1.0
        %v2123 = vlog2.pop %v2122
        %v2124 = vmul.f32 %v2123, 0.6931472
        %v2125 = vmul.f32 -0.5, %v2052
        %v2126 = vadd.f32 %v2125, 1.0
        %v2127 = vmul.f32 %v2126, %v2052
        %v2128 = vand.u32 2147483647, %v2052
        %vm2129 = vcmp.lt.f32.partialorder %v2128, 0.0004427343
        %v2130 = vsel %vm2129, %v2127, %v2124
        %v2131 = vadd.f32 %v2054, 1.0
        %v2132 = vlog2.pop %v2131
        %v2133 = vmul.f32 %v2132, 0.6931472
        %v2134 = vmul.f32 -0.5, %v2054
        %v2135 = vadd.f32 %v2134, 1.0
        %v2136 = vmul.f32 %v2135, %v2054
        %v2137 = vand.u32 2147483647, %v2054
        %vm2138 = vcmp.lt.f32.partialorder %v2137, 0.0004427343
        %v2139 = vsel %vm2138, %v2136, %v2133
        %v2140 = vadd.f32 %v2056, 1.0
        %v2141 = vlog2.pop %v2140
        %v2142 = vmul.f32 %v2141, 0.6931472
        %v2143 = vmul.f32 -0.5, %v2056
        %v2144 = vadd.f32 %v2143, 1.0
        %v2145 = vmul.f32 %v2144, %v2056
        %v2146 = vand.u32 2147483647, %v2056
        %vm2147 = vcmp.lt.f32.partialorder %v2146, 0.0004427343
        %v2148 = vsel %vm2147, %v2145, %v2142
        %v2149 = vadd.f32 %v2058, 1.0
        %v2150 = vlog2.pop %v2149
        %v2151 = vmul.f32 %v2150, 0.6931472
        %v2152 = vmul.f32 -0.5, %v2058
        %v2153 = vadd.f32 %v2152, 1.0
        %v2154 = vmul.f32 %v2153, %v2058
        %v2155 = vand.u32 2147483647, %v2058
        %vm2156 = vcmp.lt.f32.partialorder %v2155, 0.0004427343
        %v2157 = vsel %vm2156, %v2154, %v2151
        %v2158 = vadd.f32 %v2060, 1.0
        %v2159 = vlog2.pop %v2158
        %v2160 = vmul.f32 %v2159, 0.6931472
        %v2161 = vmul.f32 -0.5, %v2060
        %v2162 = vadd.f32 %v2161, 1.0
        %v2163 = vmul.f32 %v2162, %v2060
        %v2164 = vand.u32 2147483647, %v2060
        %vm2165 = vcmp.lt.f32.partialorder %v2164, 0.0004427343
        %v2166 = vsel %vm2165, %v2163, %v2160
        %v2167 = vadd.f32 %v2062, 1.0
        %v2168 = vlog2.pop %v2167
        %v2169 = vmul.f32 %v2168, 0.6931472
        %v2170 = vmul.f32 -0.5, %v2062
        %v2171 = vadd.f32 %v2170, 1.0
        %v2172 = vmul.f32 %v2171, %v2062
        %v2173 = vand.u32 2147483647, %v2062
        %vm2174 = vcmp.lt.f32.partialorder %v2173, 0.0004427343
        %v2175 = vsel %vm2174, %v2172, %v2169
        %v2176 = vadd.f32 %v2064, 1.0
        %v2177 = vlog2.pop %v2176
        %v2178 = vmul.f32 %v2177, 0.6931472
        %v2179 = vmul.f32 -0.5, %v2064
        %v2180 = vadd.f32 %v2179, 1.0
        %v2181 = vmul.f32 %v2180, %v2064
        %v2182 = vand.u32 2147483647, %v2064
        %vm2183 = vcmp.lt.f32.partialorder %v2182, 0.0004427343
        %v2184 = vsel %vm2183, %v2181, %v2178
        %v2185 = vadd.f32 %v2066, 1.0
        %v2186 = vlog2.pop %v2185
        %v2187 = vmul.f32 %v2186, 0.6931472
        %v2188 = vmul.f32 -0.5, %v2066
        %v2189 = vadd.f32 %v2188, 1.0
        %v2190 = vmul.f32 %v2189, %v2066
        %v2191 = vand.u32 2147483647, %v2066
        %vm2192 = vcmp.lt.f32.partialorder %v2191, 0.0004427343
        %v2193 = vsel %vm2192, %v2190, %v2187
        %v2194 = vadd.f32 %v2068, 1.0
        %v2195 = vlog2.pop %v2194
        %v2196 = vmul.f32 %v2195, 0.6931472
        %v2197 = vmul.f32 -0.5, %v2068
        %v2198 = vadd.f32 %v2197, 1.0
        %v2199 = vmul.f32 %v2198, %v2068
        %v2200 = vand.u32 2147483647, %v2068
        %vm2201 = vcmp.lt.f32.partialorder %v2200, 0.0004427343
        %v2202 = vsel %vm2201, %v2199, %v2196
        %v2203 = vadd.f32 %v2070, 1.0
        %v2204 = vlog2.pop %v2203
        %v2205 = vmul.f32 %v2204, 0.6931472
        %v2206 = vmul.f32 -0.5, %v2070
        %v2207 = vadd.f32 %v2206, 1.0
        %v2208 = vmul.f32 %v2207, %v2070
        %v2209 = vand.u32 2147483647, %v2070
        %vm2210 = vcmp.lt.f32.partialorder %v2209, 0.0004427343
        %v2211 = vsel %vm2210, %v2208, %v2205
        %v2212 = vadd.f32 %v2072, 1.0
        %v2213 = vlog2.pop %v2212
        %v2214 = vmul.f32 %v2213, 0.6931472
        %v2215 = vmul.f32 -0.5, %v2072
        %v2216 = vadd.f32 %v2215, 1.0
        %v2217 = vmul.f32 %v2216, %v2072
        %v2218 = vand.u32 2147483647, %v2072
        %vm2219 = vcmp.lt.f32.partialorder %v2218, 0.0004427343
        %v2220 = vsel %vm2219, %v2217, %v2214
        %v2221 = vadd.f32 %v2074, 1.0
        %v2222 = vlog2.pop %v2221
        %v2223 = vmul.f32 %v2222, 0.6931472
        %v2224 = vmul.f32 -0.5, %v2074
        %v2225 = vadd.f32 %v2224, 1.0
        %v2226 = vmul.f32 %v2225, %v2074
        %v2227 = vand.u32 2147483647, %v2074
        %vm2228 = vcmp.lt.f32.partialorder %v2227, 0.0004427343
        %v2229 = vsel %vm2228, %v2226, %v2223
        %v2230 = vadd.f32 %v2076, 1.0
        %v2231 = vlog2.pop %v2230
        %v2232 = vmul.f32 %v2231, 0.6931472
        %v2233 = vmul.f32 -0.5, %v2076
        %v2234 = vadd.f32 %v2233, 1.0
        %v2235 = vmul.f32 %v2234, %v2076
        %v2236 = vand.u32 2147483647, %v2076
        %vm2237 = vcmp.lt.f32.partialorder %v2236, 0.0004427343
        %v2238 = vsel %vm2237, %v2235, %v2232
        %v2239 = vadd.f32 %v2078, 1.0
        %v2240 = vlog2.pop %v2239
        %v2241 = vmul.f32 %v2240, 0.6931472
        %v2242 = vmul.f32 -0.5, %v2078
        %v2243 = vadd.f32 %v2242, 1.0
        %v2244 = vmul.f32 %v2243, %v2078
        %v2245 = vand.u32 2147483647, %v2078
        %vm2246 = vcmp.lt.f32.partialorder %v2245, 0.0004427343
        %v2247 = vsel %vm2246, %v2244, %v2241
        %v2248 = vadd.f32 %v2080, 1.0
        %v2249 = vlog2.pop %v2248
        %v2250 = vmul.f32 %v2249, 0.6931472
        %v2251 = vmul.f32 -0.5, %v2080
        %v2252 = vadd.f32 %v2251, 1.0
        %v2253 = vmul.f32 %v2252, %v2080
        %v2254 = vand.u32 2147483647, %v2080
        %vm2255 = vcmp.lt.f32.partialorder %v2254, 0.0004427343
        %v2256 = vsel %vm2255, %v2253, %v2250
        %v2257 = vadd.f32 %v2082, 1.0
        %v2258 = vlog2.pop %v2257
        %v2259 = vmul.f32 %v2258, 0.6931472
        %v2260 = vmul.f32 -0.5, %v2082
        %v2261 = vadd.f32 %v2260, 1.0
        %v2262 = vmul.f32 %v2261, %v2082
        %v2263 = vand.u32 2147483647, %v2082
        %vm2264 = vcmp.lt.f32.partialorder %v2263, 0.0004427343
        %v2265 = vsel %vm2264, %v2262, %v2259
        %v2266 = vadd.f32 %v2084, 1.0
        %v2267 = vlog2.pop %v2266
        %v2268 = vmul.f32 %v2267, 0.6931472
        %v2269 = vmul.f32 -0.5, %v2084
        %v2270 = vadd.f32 %v2269, 1.0
        %v2271 = vmul.f32 %v2270, %v2084
        %v2272 = vand.u32 2147483647, %v2084
        %vm2273 = vcmp.lt.f32.partialorder %v2272, 0.0004427343
        %v2274 = vsel %vm2273, %v2271, %v2268
        %v2275 = vadd.f32 %v2086, 1.0
        %v2276 = vlog2.pop %v2275
        %v2277 = vmul.f32 %v2276, 0.6931472
        %v2278 = vmul.f32 -0.5, %v2086
        %v2279 = vadd.f32 %v2278, 1.0
        %v2280 = vmul.f32 %v2279, %v2086
        %v2281 = vand.u32 2147483647, %v2086
        %vm2282 = vcmp.lt.f32.partialorder %v2281, 0.0004427343
        %v2283 = vsel %vm2282, %v2280, %v2277
        %v2284 = vadd.f32 %v2088, 1.0
        %v2285 = vlog2.pop %v2284
        %v2286 = vmul.f32 %v2285, 0.6931472
        %v2287 = vmul.f32 -0.5, %v2088
        %v2288 = vadd.f32 %v2287, 1.0
        %v2289 = vmul.f32 %v2288, %v2088
        %v2290 = vand.u32 2147483647, %v2088
        %vm2291 = vcmp.lt.f32.partialorder %v2290, 0.0004427343
        %v2292 = vsel %vm2291, %v2289, %v2286
        %v2293 = vadd.f32 %v2090, 1.0
        %v2294 = vlog2.pop %v2293
        %v2295 = vmul.f32 %v2294, 0.6931472
        %v2296 = vmul.f32 -0.5, %v2090
        %v2297 = vadd.f32 %v2296, 1.0
        %v2298 = vmul.f32 %v2297, %v2090
        %v2299 = vand.u32 2147483647, %v2090
        %vm2300 = vcmp.lt.f32.partialorder %v2299, 0.0004427343
        %v2301 = vsel %vm2300, %v2298, %v2295
        %v2302 = vadd.f32 %v2092, 1.0
        %v2303 = vlog2.pop %v2302
        %v2304 = vmul.f32 %v2303, 0.6931472
        %v2305 = vmul.f32 -0.5, %v2092
        %v2306 = vadd.f32 %v2305, 1.0
        %v2307 = vmul.f32 %v2306, %v2092
        %v2308 = vand.u32 2147483647, %v2092
        %vm2309 = vcmp.lt.f32.partialorder %v2308, 0.0004427343
        %v2310 = vsel %vm2309, %v2307, %v2304
        %v2311 = vadd.f32 %v2094, 1.0
        %v2312 = vlog2.pop %v2311
        %v2313 = vmul.f32 %v2312, 0.6931472
        %v2314 = vmul.f32 -0.5, %v2094
        %v2315 = vadd.f32 %v2314, 1.0
        %v2316 = vmul.f32 %v2315, %v2094
        %v2317 = vand.u32 2147483647, %v2094
        %vm2318 = vcmp.lt.f32.partialorder %v2317, 0.0004427343
        %v2319 = vsel %vm2318, %v2316, %v2313
        %v2320 = vadd.f32 %v2096, 1.0
        %v2321 = vlog2.pop %v2320
        %v2322 = vmul.f32 %v2321, 0.6931472
        %v2323 = vmul.f32 -0.5, %v2096
        %v2324 = vadd.f32 %v2323, 1.0
        %v2325 = vmul.f32 %v2324, %v2096
        %v2326 = vand.u32 2147483647, %v2096
        %vm2327 = vcmp.lt.f32.partialorder %v2326, 0.0004427343
        %v2328 = vsel %vm2327, %v2325, %v2322
        %v2329 = vadd.f32 %v2098, 1.0
        %v2330 = vlog2.pop %v2329
        %v2331 = vmul.f32 %v2330, 0.6931472
        %v2332 = vmul.f32 -0.5, %v2098
        %v2333 = vadd.f32 %v2332, 1.0
        %v2334 = vmul.f32 %v2333, %v2098
        %v2335 = vand.u32 2147483647, %v2098
        %vm2336 = vcmp.lt.f32.partialorder %v2335, 0.0004427343
        %v2337 = vsel %vm2336, %v2334, %v2331
        %v2338 = vadd.f32 %v2100, 1.0
        %v2339 = vlog2.pop %v2338
        %v2340 = vmul.f32 %v2339, 0.6931472
        %v2341 = vmul.f32 -0.5, %v2100
        %v2342 = vadd.f32 %v2341, 1.0
        %v2343 = vmul.f32 %v2342, %v2100
        %v2344 = vand.u32 2147483647, %v2100
        %vm2345 = vcmp.lt.f32.partialorder %v2344, 0.0004427343
        %v2346 = vsel %vm2345, %v2343, %v2340
        %v2347 = vadd.f32 %v2102, 1.0
        %v2348 = vlog2.pop %v2347
        %v2349 = vmul.f32 %v2348, 0.6931472
        %v2350 = vmul.f32 -0.5, %v2102
        %v2351 = vadd.f32 %v2350, 1.0
        %v2352 = vmul.f32 %v2351, %v2102
        %v2353 = vand.u32 2147483647, %v2102
        %vm2354 = vcmp.lt.f32.partialorder %v2353, 0.0004427343
        %v2355 = vsel %vm2354, %v2352, %v2349
        %v2356 = vadd.f32 %v2104, 1.0
        %v2357 = vlog2.pop %v2356
        %v2358 = vmul.f32 %v2357, 0.6931472
        %v2359 = vmul.f32 -0.5, %v2104
        %v2360 = vadd.f32 %v2359, 1.0
        %v2361 = vmul.f32 %v2360, %v2104
        %v2362 = vand.u32 2147483647, %v2104
        %vm2363 = vcmp.lt.f32.partialorder %v2362, 0.0004427343
        %v2364 = vsel %vm2363, %v2361, %v2358
        %v2365 = vadd.f32 %v2106, 1.0
        %v2366 = vlog2.pop %v2365
        %v2367 = vmul.f32 %v2366, 0.6931472
        %v2368 = vmul.f32 -0.5, %v2106
        %v2369 = vadd.f32 %v2368, 1.0
        %v2370 = vmul.f32 %v2369, %v2106
        %v2371 = vand.u32 2147483647, %v2106
        %vm2372 = vcmp.lt.f32.partialorder %v2371, 0.0004427343
        %v2373 = vsel %vm2372, %v2370, %v2367
        %v2374 = vadd.f32 %v2108, 1.0
        %v2375 = vlog2.pop %v2374
        %v2376 = vmul.f32 %v2375, 0.6931472
        %v2377 = vmul.f32 -0.5, %v2108
        %v2378 = vadd.f32 %v2377, 1.0
        %v2379 = vmul.f32 %v2378, %v2108
        %v2380 = vand.u32 2147483647, %v2108
        %vm2381 = vcmp.lt.f32.partialorder %v2380, 0.0004427343
        %v2382 = vsel %vm2381, %v2379, %v2376
        %v2383 = vadd.f32 %v2110, 1.0
        %v2384 = vlog2.pop %v2383
        %v2385 = vmul.f32 %v2384, 0.6931472
        %v2386 = vmul.f32 -0.5, %v2110
        %v2387 = vadd.f32 %v2386, 1.0
        %v2388 = vmul.f32 %v2387, %v2110
        %v2389 = vand.u32 2147483647, %v2110
        %vm2390 = vcmp.lt.f32.partialorder %v2389, 0.0004427343
        %v2391 = vsel %vm2390, %v2388, %v2385
        %v2392 = vadd.f32 %v2112, 1.0
        %v2393 = vlog2.pop %v2392
        %v2394 = vmul.f32 %v2393, 0.6931472
        %v2395 = vmul.f32 -0.5, %v2112
        %v2396 = vadd.f32 %v2395, 1.0
        %v2397 = vmul.f32 %v2396, %v2112
        %v2398 = vand.u32 2147483647, %v2112
        %vm2399 = vcmp.lt.f32.partialorder %v2398, 0.0004427343
        %v2400 = vsel %vm2399, %v2397, %v2394
        %v2401 = vadd.f32 %v1953, %v2121
        %v2402 = vadd.f32 %v1954, %v2130
        %v2403 = vadd.f32 %v1955, %v2139
        %v2404 = vadd.f32 %v1956, %v2148
        %v2405 = vadd.f32 %v1957, %v2157
        %v2406 = vadd.f32 %v1958, %v2166
        %v2407 = vadd.f32 %v1959, %v2175
        %v2408 = vadd.f32 %v1960, %v2184
        %v2409 = vadd.f32 %v1961, %v2193
        %v2410 = vadd.f32 %v1962, %v2202
        %v2411 = vadd.f32 %v1963, %v2211
        %v2412 = vadd.f32 %v1964, %v2220
        %v2413 = vadd.f32 %v1965, %v2229
        %v2414 = vadd.f32 %v1966, %v2238
        %v2415 = vadd.f32 %v1967, %v2247
        %v2416 = vadd.f32 %v1968, %v2256
        %v2417 = vadd.f32 %v1969, %v2265
        %v2418 = vadd.f32 %v1970, %v2274
        %v2419 = vadd.f32 %v1971, %v2283
        %v2420 = vadd.f32 %v1972, %v2292
        %v2421 = vadd.f32 %v1973, %v2301
        %v2422 = vadd.f32 %v1974, %v2310
        %v2423 = vadd.f32 %v1975, %v2319
        %v2424 = vadd.f32 %v1976, %v2328
        %v2425 = vadd.f32 %v1977, %v2337
        %v2426 = vadd.f32 %v1978, %v2346
        %v2427 = vadd.f32 %v1979, %v2355
        %v2428 = vadd.f32 %v1980, %v2364
        %v2429 = vadd.f32 %v1981, %v2373
        %v2430 = vadd.f32 %v1982, %v2382
        %v2431 = vadd.f32 %v1983, %v2391
        %v2432 = vadd.f32 %v1984, %v2400
        %v2433 = vsub.f32 %v2401, 0.6931472
        %v2434 = vsub.f32 %v2402, 0.6931472
        %v2435 = vsub.f32 %v2403, 0.6931472
        %v2436 = vsub.f32 %v2404, 0.6931472
        %v2437 = vsub.f32 %v2405, 0.6931472
        %v2438 = vsub.f32 %v2406, 0.6931472
        %v2439 = vsub.f32 %v2407, 0.6931472
        %v2440 = vsub.f32 %v2408, 0.6931472
        %v2441 = vsub.f32 %v2409, 0.6931472
        %v2442 = vsub.f32 %v2410, 0.6931472
        %v2443 = vsub.f32 %v2411, 0.6931472
        %v2444 = vsub.f32 %v2412, 0.6931472
        %v2445 = vsub.f32 %v2413, 0.6931472
        %v2446 = vsub.f32 %v2414, 0.6931472
        %v2447 = vsub.f32 %v2415, 0.6931472
        %v2448 = vsub.f32 %v2416, 0.6931472
        %v2449 = vsub.f32 %v2417, 0.6931472
        %v2450 = vsub.f32 %v2418, 0.6931472
        %v2451 = vsub.f32 %v2419, 0.6931472
        %v2452 = vsub.f32 %v2420, 0.6931472
        %v2453 = vsub.f32 %v2421, 0.6931472
        %v2454 = vsub.f32 %v2422, 0.6931472
        %v2455 = vsub.f32 %v2423, 0.6931472
        %v2456 = vsub.f32 %v2424, 0.6931472
        %v2457 = vsub.f32 %v2425, 0.6931472
        %v2458 = vsub.f32 %v2426, 0.6931472
        %v2459 = vsub.f32 %v2427, 0.6931472
        %v2460 = vsub.f32 %v2428, 0.6931472
        %v2461 = vsub.f32 %v2429, 0.6931472
        %v2462 = vsub.f32 %v2430, 0.6931472
        %v2463 = vsub.f32 %v2431, 0.6931472
        %v2464 = vsub.f32 %v2432, 0.6931472
        %v2465 = vld [vmem:[#allocation7] sm:$0xff]
        %v2466 = vld [vmem:[#allocation7 + $0x8] sm:$0xff]
        %v2467 = vld [vmem:[#allocation7 + $0x10] sm:$0xff]
        %v2468 = vld [vmem:[#allocation7 + $0x18] sm:$0xff]
        %v2469 = vld [vmem:[#allocation7 + $0x20] sm:$0xff]
        %v2470 = vld [vmem:[#allocation7 + $0x28] sm:$0xff]
        %v2471 = vld [vmem:[#allocation7 + $0x30] sm:$0xff]
        %v2472 = vld [vmem:[#allocation7 + $0x38] sm:$0xff]
        %v2473 = vld [vmem:[#allocation7 + $0x40] sm:$0xff]
        %v2474 = vld [vmem:[#allocation7 + $0x48] sm:$0xff]
        %v2475 = vld [vmem:[#allocation7 + $0x50] sm:$0xff]
        %v2476 = vld [vmem:[#allocation7 + $0x58] sm:$0xff]
        %v2477 = vld [vmem:[#allocation7 + $0x60] sm:$0xff]
        %v2478 = vld [vmem:[#allocation7 + $0x68] sm:$0xff]
        %v2479 = vld [vmem:[#allocation7 + $0x70] sm:$0xff]
        %v2480 = vld [vmem:[#allocation7 + $0x78] sm:$0xff]
        %v2481 = vld [vmem:[%s7] sm:$0x1]
        %v2483 = vlaneseq
        %v2484 = vshrl.u32 %v2483, 7
        %v2485 = vsub.s32 0, %v2484
        %v2486 = vrot.slane %v2481, %v2485
        %2488 = vmatprep.subr.mxu0 0.0
        %2489 = vmatpush1.msra.mxu0 %v2465
        %2490 = vmatprep.subr.mxu0 0.0
        %2491 = vmatpush1.msra.mxu0 %v2466
        %2492 = vmatprep.subr.mxu0 0.0
        %2493 = vmatpush1.msra.mxu0 %v2467
        %2494 = vmatprep.subr.mxu0 0.0
        %2495 = vmatpush1.msra.mxu0 %v2468
        %2496 = vmatprep.subr.mxu0 0.0
        %2497 = vmatpush1.msra.mxu0 %v2469
        %2498 = vmatprep.subr.mxu0 0.0
        %2499 = vmatpush1.msra.mxu0 %v2470
        %2500 = vmatprep.subr.mxu0 0.0
        %2501 = vmatpush1.msra.mxu0 %v2471
        %2502 = vmatprep.subr.mxu0 0.0
        %2503 = vmatpush1.msra.mxu0 %v2472
        %2504 = vmatprep.subr.mxu0 0.0
        %2505 = vmatpush1.msra.mxu0 %v2473
        %2506 = vmatprep.subr.mxu0 0.0
        %2507 = vmatpush1.msra.mxu0 %v2474
        %2508 = vmatprep.subr.mxu0 0.0
        %2509 = vmatpush1.msra.mxu0 %v2475
        %2510 = vmatprep.subr.mxu0 0.0
        %2511 = vmatpush1.msra.mxu0 %v2476
        %2512 = vmatprep.subr.mxu0 0.0
        %2513 = vmatpush1.msra.mxu0 %v2477
        %2514 = vmatprep.subr.mxu0 0.0
        %2515 = vmatpush1.msra.mxu0 %v2478
        %2516 = vmatprep.subr.mxu0 0.0
        %2517 = vmatpush1.msra.mxu0 %v2479
        %2518 = vmatprep.subr.mxu0 0.0
        %2519 = vmatpush1.msra.mxu0 %v2480
        %2520 = vmatprep.subr.mxu0 0.0
        %2521 = vmatpush1.msra.mxu0 0.0
        %2522 = vmatprep.subr.mxu0 0.0
        %2523 = vmatpush1.msra.mxu0 0.0
        %2524 = vmatprep.subr.mxu0 0.0
        %2525 = vmatpush1.msra.mxu0 0.0
        %2526 = vmatprep.subr.mxu0 0.0
        %2527 = vmatpush1.msra.mxu0 0.0
        %2528 = vmatprep.subr.mxu0 0.0
        %2529 = vmatpush1.msra.mxu0 0.0
        %2530 = vmatprep.subr.mxu0 0.0
        %2531 = vmatpush1.msra.mxu0 0.0
        %2532 = vmatprep.subr.mxu0 0.0
        %2533 = vmatpush1.msra.mxu0 0.0
        %2534 = vmatprep.subr.mxu0 0.0
        %2535 = vmatpush1.msra.mxu0 0.0
        %2536 = vmatprep.subr.mxu0 0.0
        %2537 = vmatpush1.msra.mxu0 0.0
        %2538 = vmatprep.subr.mxu0 0.0
        %2539 = vmatpush1.msra.mxu0 0.0
        %2540 = vmatprep.subr.mxu0 0.0
        %2541 = vmatpush1.msra.mxu0 0.0
        %2542 = vmatprep.subr.mxu0 0.0
        %2543 = vmatpush1.msra.mxu0 0.0
        %2544 = vmatprep.subr.mxu0 0.0
        %2545 = vmatpush1.msra.mxu0 0.0
        %2546 = vmatprep.subr.mxu0 0.0
        %2547 = vmatpush1.msra.mxu0 0.0
        %2548 = vmatprep.subr.mxu0 0.0
        %2549 = vmatpush1.msra.mxu0 0.0
        %2550 = vmatprep.subr.mxu0 0.0
        %2551 = vmatpush1.msra.mxu0 0.0
        %2552 = vmatprep.mubr.f32.mxu0 0.0
        %2553 = vmatmul.mubr.f32.gmra.mrb[0].mxu0 %v2433
        %v2554 = vpop.f32.mrb[0].mxu0
        %v2555 = vadd.f32 %v2486, %v2554
        %v2556 = vpop.f32.mrb[0].mxu0
        %2557 = vmatprep.mubr.f32.mxu0 0.0
        %2558 = vmatmul.mubr.f32.gmra.mrb[0].mxu0 %v2434
        %v2559 = vpop.f32.mrb[0].mxu0
        %v2560 = vadd.f32 %v2486, %v2559
        %v2561 = vpop.f32.mrb[0].mxu0
        %2562 = vmatprep.mubr.f32.mxu0 0.0
        %2563 = vmatmul.mubr.f32.gmra.mrb[0].mxu0 %v2435
        %v2564 = vpop.f32.mrb[0].mxu0
        %v2565 = vadd.f32 %v2486, %v2564
        %v2566 = vpop.f32.mrb[0].mxu0
        %2567 = vmatprep.mubr.f32.mxu0 0.0
        %2568 = vmatmul.mubr.f32.gmra.mrb[0].mxu0 %v2436
        %v2569 = vpop.f32.mrb[0].mxu0
        %v2570 = vadd.f32 %v2486, %v2569
        %v2571 = vpop.f32.mrb[0].mxu0
        %2572 = vmatprep.mubr.f32.mxu0 0.0
        %2573 = vmatmul.mubr.f32.gmra.mrb[0].mxu0 %v2437
        %v2574 = vpop.f32.mrb[0].mxu0
        %v2575 = vadd.f32 %v2486, %v2574
        %v2576 = vpop.f32.mrb[0].mxu0
        %2577 = vmatprep.mubr.f32.mxu0 0.0
        %2578 = vmatmul.mubr.f32.gmra.mrb[0].mxu0 %v2438
        %v2579 = vpop.f32.mrb[0].mxu0
        %v2580 = vadd.f32 %v2486, %v2579
        %v2581 = vpop.f32.mrb[0].mxu0
        %2582 = vmatprep.mubr.f32.mxu0 0.0
        %2583 = vmatmul.mubr.f32.gmra.mrb[0].mxu0 %v2439
        %v2584 = vpop.f32.mrb[0].mxu0
        %v2585 = vadd.f32 %v2486, %v2584
        %v2586 = vpop.f32.mrb[0].mxu0
        %2587 = vmatprep.mubr.f32.mxu0 0.0
        %2588 = vmatmul.mubr.f32.gmra.mrb[0].mxu0 %v2440
        %v2589 = vpop.f32.mrb[0].mxu0
        %v2590 = vadd.f32 %v2486, %v2589
        %v2591 = vpop.f32.mrb[0].mxu0
        %2592 = vmatprep.mubr.f32.mxu0 0.0
        %2593 = vmatmul.mubr.f32.gmra.mrb[0].mxu0 %v2441
        %v2594 = vpop.f32.mrb[0].mxu0
        %v2595 = vadd.f32 %v2486, %v2594
        %v2596 = vpop.f32.mrb[0].mxu0
        %2597 = vmatprep.mubr.f32.mxu0 0.0
        %2598 = vmatmul.mubr.f32.gmra.mrb[0].mxu0 %v2442
        %v2599 = vpop.f32.mrb[0].mxu0
        %v2600 = vadd.f32 %v2486, %v2599
        %v2601 = vpop.f32.mrb[0].mxu0
        %2602 = vmatprep.mubr.f32.mxu0 0.0
        %2603 = vmatmul.mubr.f32.gmra.mrb[0].mxu0 %v2443
        %v2604 = vpop.f32.mrb[0].mxu0
        %v2605 = vadd.f32 %v2486, %v2604
        %v2606 = vpop.f32.mrb[0].mxu0
        %2607 = vmatprep.mubr.f32.mxu0 0.0
        %2608 = vmatmul.mubr.f32.gmra.mrb[0].mxu0 %v2444
        %v2609 = vpop.f32.mrb[0].mxu0
        %v2610 = vadd.f32 %v2486, %v2609
        %v2611 = vpop.f32.mrb[0].mxu0
        %2612 = vmatprep.mubr.f32.mxu0 0.0
        %2613 = vmatmul.mubr.f32.gmra.mrb[0].mxu0 %v2445
        %v2614 = vpop.f32.mrb[0].mxu0
        %v2615 = vadd.f32 %v2486, %v2614
        %v2616 = vpop.f32.mrb[0].mxu0
        %2617 = vmatprep.mubr.f32.mxu0 0.0
        %2618 = vmatmul.mubr.f32.gmra.mrb[0].mxu0 %v2446
        %v2619 = vpop.f32.mrb[0].mxu0
        %v2620 = vadd.f32 %v2486, %v2619
        %v2621 = vpop.f32.mrb[0].mxu0
        %2622 = vmatprep.mubr.f32.mxu0 0.0
        %2623 = vmatmul.mubr.f32.gmra.mrb[0].mxu0 %v2447
        %v2624 = vpop.f32.mrb[0].mxu0
        %v2625 = vadd.f32 %v2486, %v2624
        %v2626 = vpop.f32.mrb[0].mxu0
        %2627 = vmatprep.mubr.f32.mxu0 0.0
        %2628 = vmatmul.mubr.f32.gmra.mrb[0].mxu0 %v2448
        %v2629 = vpop.f32.mrb[0].mxu0
        %v2630 = vadd.f32 %v2486, %v2629
        %v2631 = vpop.f32.mrb[0].mxu0
        %2632 = vmatprep.mubr.f32.mxu0 0.0
        %2633 = vmatmul.mubr.f32.gmra.mrb[0].mxu0 %v2449
        %v2634 = vpop.f32.mrb[0].mxu0
        %v2635 = vadd.f32 %v2486, %v2634
        %v2636 = vpop.f32.mrb[0].mxu0
        %2637 = vmatprep.mubr.f32.mxu0 0.0
        %2638 = vmatmul.mubr.f32.gmra.mrb[0].mxu0 %v2450
        %v2639 = vpop.f32.mrb[0].mxu0
        %v2640 = vadd.f32 %v2486, %v2639
        %v2641 = vpop.f32.mrb[0].mxu0
        %2642 = vmatprep.mubr.f32.mxu0 0.0
        %2643 = vmatmul.mubr.f32.gmra.mrb[0].mxu0 %v2451
        %v2644 = vpop.f32.mrb[0].mxu0
        %v2645 = vadd.f32 %v2486, %v2644
        %v2646 = vpop.f32.mrb[0].mxu0
        %2647 = vmatprep.mubr.f32.mxu0 0.0
        %2648 = vmatmul.mubr.f32.gmra.mrb[0].mxu0 %v2452
        %v2649 = vpop.f32.mrb[0].mxu0
        %v2650 = vadd.f32 %v2486, %v2649
        %v2651 = vpop.f32.mrb[0].mxu0
        %2652 = vmatprep.mubr.f32.mxu0 0.0
        %2653 = vmatmul.mubr.f32.gmra.mrb[0].mxu0 %v2453
        %v2654 = vpop.f32.mrb[0].mxu0
        %v2655 = vadd.f32 %v2486, %v2654
        %v2656 = vpop.f32.mrb[0].mxu0
        %2657 = vmatprep.mubr.f32.mxu0 0.0
        %2658 = vmatmul.mubr.f32.gmra.mrb[0].mxu0 %v2454
        %v2659 = vpop.f32.mrb[0].mxu0
        %v2660 = vadd.f32 %v2486, %v2659
        %v2661 = vpop.f32.mrb[0].mxu0
        %2662 = vmatprep.mubr.f32.mxu0 0.0
        %2663 = vmatmul.mubr.f32.gmra.mrb[0].mxu0 %v2455
        %v2664 = vpop.f32.mrb[0].mxu0
        %v2665 = vadd.f32 %v2486, %v2664
        %v2666 = vpop.f32.mrb[0].mxu0
        %2667 = vmatprep.mubr.f32.mxu0 0.0
        %2668 = vmatmul.mubr.f32.gmra.mrb[0].mxu0 %v2456
        %v2669 = vpop.f32.mrb[0].mxu0
        %v2670 = vadd.f32 %v2486, %v2669
        %v2671 = vpop.f32.mrb[0].mxu0
        %2672 = vmatprep.mubr.f32.mxu0 0.0
        %2673 = vmatmul.mubr.f32.gmra.mrb[0].mxu0 %v2457
        %v2674 = vpop.f32.mrb[0].mxu0
        %v2675 = vadd.f32 %v2486, %v2674
        %v2676 = vpop.f32.mrb[0].mxu0
        %2677 = vmatprep.mubr.f32.mxu0 0.0
        %2678 = vmatmul.mubr.f32.gmra.mrb[0].mxu0 %v2458
        %v2679 = vpop.f32.mrb[0].mxu0
        %v2680 = vadd.f32 %v2486, %v2679
        %v2681 = vpop.f32.mrb[0].mxu0
        %2682 = vmatprep.mubr.f32.mxu0 0.0
        %2683 = vmatmul.mubr.f32.gmra.mrb[0].mxu0 %v2459
        %v2684 = vpop.f32.mrb[0].mxu0
        %v2685 = vadd.f32 %v2486, %v2684
        %v2686 = vpop.f32.mrb[0].mxu0
        %2687 = vmatprep.mubr.f32.mxu0 0.0
        %2688 = vmatmul.mubr.f32.gmra.mrb[0].mxu0 %v2460
        %v2689 = vpop.f32.mrb[0].mxu0
        %v2690 = vadd.f32 %v2486, %v2689
        %v2691 = vpop.f32.mrb[0].mxu0
        %2692 = vmatprep.mubr.f32.mxu0 0.0
        %2693 = vmatmul.mubr.f32.gmra.mrb[0].mxu0 %v2461
        %v2694 = vpop.f32.mrb[0].mxu0
        %v2695 = vadd.f32 %v2486, %v2694
        %v2696 = vpop.f32.mrb[0].mxu0
        %2697 = vmatprep.mubr.f32.mxu0 0.0
        %2698 = vmatmul.mubr.f32.gmra.mrb[0].mxu0 %v2462
        %v2699 = vpop.f32.mrb[0].mxu0
        %v2700 = vadd.f32 %v2486, %v2699
        %v2701 = vpop.f32.mrb[0].mxu0
        %2702 = vmatprep.mubr.f32.mxu0 0.0
        %2703 = vmatmul.mubr.f32.gmra.mrb[0].mxu0 %v2463
        %v2704 = vpop.f32.mrb[0].mxu0
        %v2705 = vadd.f32 %v2486, %v2704
        %v2706 = vpop.f32.mrb[0].mxu0
        %2707 = vmatprep.mubr.f32.mxu0 0.0
        %2708 = vmatmul.mubr.f32.gmra.mrb[0].mxu0 %v2464
        %v2709 = vpop.f32.mrb[0].mxu0
        %v2710 = vadd.f32 %v2486, %v2709
        %v2711 = vpop.f32.mrb[0].mxu0
        %2712 = vdwg.mxu0
        %v2713 = vmax.f32 %v2555, 0.0
        %v2714 = vmax.f32 %v2560, 0.0
        %v2715 = vmax.f32 %v2565, 0.0
        %v2716 = vmax.f32 %v2570, 0.0
        %v2717 = vmax.f32 %v2575, 0.0
        %v2718 = vmax.f32 %v2580, 0.0
        %v2719 = vmax.f32 %v2585, 0.0
        %v2720 = vmax.f32 %v2590, 0.0
        %v2721 = vmax.f32 %v2595, 0.0
        %v2722 = vmax.f32 %v2600, 0.0
        %v2723 = vmax.f32 %v2605, 0.0
        %v2724 = vmax.f32 %v2610, 0.0
        %v2725 = vmax.f32 %v2615, 0.0
        %v2726 = vmax.f32 %v2620, 0.0
        %v2727 = vmax.f32 %v2625, 0.0
        %v2728 = vmax.f32 %v2630, 0.0
        %v2729 = vmax.f32 %v2635, 0.0
        %v2730 = vmax.f32 %v2640, 0.0
        %v2731 = vmax.f32 %v2645, 0.0
        %v2732 = vmax.f32 %v2650, 0.0
        %v2733 = vmax.f32 %v2655, 0.0
        %v2734 = vmax.f32 %v2660, 0.0
        %v2735 = vmax.f32 %v2665, 0.0
        %v2736 = vmax.f32 %v2670, 0.0
        %v2737 = vmax.f32 %v2675, 0.0
        %v2738 = vmax.f32 %v2680, 0.0
        %v2739 = vmax.f32 %v2685, 0.0
        %v2740 = vmax.f32 %v2690, 0.0
        %v2741 = vmax.f32 %v2695, 0.0
        %v2742 = vmax.f32 %v2700, 0.0
        %v2743 = vmax.f32 %v2705, 0.0
        %v2744 = vmax.f32 %v2710, 0.0
        %v2745 = vand.u32 2147483647, %v2555
        %v2746 = vand.u32 2147483647, %v2560
        %v2747 = vand.u32 2147483647, %v2565
        %v2748 = vand.u32 2147483647, %v2570
        %v2749 = vand.u32 2147483647, %v2575
        %v2750 = vand.u32 2147483647, %v2580
        %v2751 = vand.u32 2147483647, %v2585
        %v2752 = vand.u32 2147483647, %v2590
        %v2753 = vand.u32 2147483647, %v2595
        %v2754 = vand.u32 2147483647, %v2600
        %v2755 = vand.u32 2147483647, %v2605
        %v2756 = vand.u32 2147483647, %v2610
        %v2757 = vand.u32 2147483647, %v2615
        %v2758 = vand.u32 2147483647, %v2620
        %v2759 = vand.u32 2147483647, %v2625
        %v2760 = vand.u32 2147483647, %v2630
        %v2761 = vand.u32 2147483647, %v2635
        %v2762 = vand.u32 2147483647, %v2640
        %v2763 = vand.u32 2147483647, %v2645
        %v2764 = vand.u32 2147483647, %v2650
        %v2765 = vand.u32 2147483647, %v2655
        %v2766 = vand.u32 2147483647, %v2660
        %v2767 = vand.u32 2147483647, %v2665
        %v2768 = vand.u32 2147483647, %v2670
        %v2769 = vand.u32 2147483647, %v2675
        %v2770 = vand.u32 2147483647, %v2680
        %v2771 = vand.u32 2147483647, %v2685
        %v2772 = vand.u32 2147483647, %v2690
        %v2773 = vand.u32 2147483647, %v2695
        %v2774 = vand.u32 2147483647, %v2700
        %v2775 = vand.u32 2147483647, %v2705
        %v2776 = vand.u32 2147483647, %v2710
        %v2777 = vsub.f32 0.0, %v2745
        %v2778 = vsub.f32 0.0, %v2746
        %v2779 = vsub.f32 0.0, %v2747
        %v2780 = vsub.f32 0.0, %v2748
        %v2781 = vsub.f32 0.0, %v2749
        %v2782 = vsub.f32 0.0, %v2750
        %v2783 = vsub.f32 0.0, %v2751
        %v2784 = vsub.f32 0.0, %v2752
        %v2785 = vsub.f32 0.0, %v2753
        %v2786 = vsub.f32 0.0, %v2754
        %v2787 = vsub.f32 0.0, %v2755
        %v2788 = vsub.f32 0.0, %v2756
        %v2789 = vsub.f32 0.0, %v2757
        %v2790 = vsub.f32 0.0, %v2758
        %v2791 = vsub.f32 0.0, %v2759
        %v2792 = vsub.f32 0.0, %v2760
        %v2793 = vsub.f32 0.0, %v2761
        %v2794 = vsub.f32 0.0, %v2762
        %v2795 = vsub.f32 0.0, %v2763
        %v2796 = vsub.f32 0.0, %v2764
        %v2797 = vsub.f32 0.0, %v2765
        %v2798 = vsub.f32 0.0, %v2766
        %v2799 = vsub.f32 0.0, %v2767
        %v2800 = vsub.f32 0.0, %v2768
        %v2801 = vsub.f32 0.0, %v2769
        %v2802 = vsub.f32 0.0, %v2770
        %v2803 = vsub.f32 0.0, %v2771
        %v2804 = vsub.f32 0.0, %v2772
        %v2805 = vsub.f32 0.0, %v2773
        %v2806 = vsub.f32 0.0, %v2774
        %v2807 = vsub.f32 0.0, %v2775
        %v2808 = vsub.f32 0.0, %v2776
        %v2809 = vmul.f32 %v2777, 1.442695
        %v2810 = vpow.pop %v2809
        %v2811 = vmul.f32 %v2778, 1.442695
        %v2812 = vpow.pop %v2811
        %v2813 = vmul.f32 %v2779, 1.442695
        %v2814 = vpow.pop %v2813
        %v2815 = vmul.f32 %v2780, 1.442695
        %v2816 = vpow.pop %v2815
        %v2817 = vmul.f32 %v2781, 1.442695
        %v2818 = vpow.pop %v2817
        %v2819 = vmul.f32 %v2782, 1.442695
        %v2820 = vpow.pop %v2819
        %v2821 = vmul.f32 %v2783, 1.442695
        %v2822 = vpow.pop %v2821
        %v2823 = vmul.f32 %v2784, 1.442695
        %v2824 = vpow.pop %v2823
        %v2825 = vmul.f32 %v2785, 1.442695
        %v2826 = vpow.pop %v2825
        %v2827 = vmul.f32 %v2786, 1.442695
        %v2828 = vpow.pop %v2827
        %v2829 = vmul.f32 %v2787, 1.442695
        %v2830 = vpow.pop %v2829
        %v2831 = vmul.f32 %v2788, 1.442695
        %v2832 = vpow.pop %v2831
        %v2833 = vmul.f32 %v2789, 1.442695
        %v2834 = vpow.pop %v2833
        %v2835 = vmul.f32 %v2790, 1.442695
        %v2836 = vpow.pop %v2835
        %v2837 = vmul.f32 %v2791, 1.442695
        %v2838 = vpow.pop %v2837
        %v2839 = vmul.f32 %v2792, 1.442695
        %v2840 = vpow.pop %v2839
        %v2841 = vmul.f32 %v2793, 1.442695
        %v2842 = vpow.pop %v2841
        %v2843 = vmul.f32 %v2794, 1.442695
        %v2844 = vpow.pop %v2843
        %v2845 = vmul.f32 %v2795, 1.442695
        %v2846 = vpow.pop %v2845
        %v2847 = vmul.f32 %v2796, 1.442695
        %v2848 = vpow.pop %v2847
        %v2849 = vmul.f32 %v2797, 1.442695
        %v2850 = vpow.pop %v2849
        %v2851 = vmul.f32 %v2798, 1.442695
        %v2852 = vpow.pop %v2851
        %v2853 = vmul.f32 %v2799, 1.442695
        %v2854 = vpow.pop %v2853
        %v2855 = vmul.f32 %v2800, 1.442695
        %v2856 = vpow.pop %v2855
        %v2857 = vmul.f32 %v2801, 1.442695
        %v2858 = vpow.pop %v2857
        %v2859 = vmul.f32 %v2802, 1.442695
        %v2860 = vpow.pop %v2859
        %v2861 = vmul.f32 %v2803, 1.442695
        %v2862 = vpow.pop %v2861
        %v2863 = vmul.f32 %v2804, 1.442695
        %v2864 = vpow.pop %v2863
        %v2865 = vmul.f32 %v2805, 1.442695
        %v2866 = vpow.pop %v2865
        %v2867 = vmul.f32 %v2806, 1.442695
        %v2868 = vpow.pop %v2867
        %v2869 = vmul.f32 %v2807, 1.442695
        %v2870 = vpow.pop %v2869
        %v2871 = vmul.f32 %v2808, 1.442695
        %v2872 = vpow.pop %v2871
        %v2873 = vadd.f32 %v2810, 1.0
        %v2874 = vlog2.pop %v2873
        %v2875 = vmul.f32 %v2874, 0.6931472
        %v2876 = vmul.f32 -0.5, %v2810
        %v2877 = vadd.f32 %v2876, 1.0
        %v2878 = vmul.f32 %v2877, %v2810
        %v2879 = vand.u32 2147483647, %v2810
        %vm2880 = vcmp.lt.f32.partialorder %v2879, 0.0004427343
        %v2881 = vsel %vm2880, %v2878, %v2875
        %v2882 = vadd.f32 %v2812, 1.0
        %v2883 = vlog2.pop %v2882
        %v2884 = vmul.f32 %v2883, 0.6931472
        %v2885 = vmul.f32 -0.5, %v2812
        %v2886 = vadd.f32 %v2885, 1.0
        %v2887 = vmul.f32 %v2886, %v2812
        %v2888 = vand.u32 2147483647, %v2812
        %vm2889 = vcmp.lt.f32.partialorder %v2888, 0.0004427343
        %v2890 = vsel %vm2889, %v2887, %v2884
        %v2891 = vadd.f32 %v2814, 1.0
        %v2892 = vlog2.pop %v2891
        %v2893 = vmul.f32 %v2892, 0.6931472
        %v2894 = vmul.f32 -0.5, %v2814
        %v2895 = vadd.f32 %v2894, 1.0
        %v2896 = vmul.f32 %v2895, %v2814
        %v2897 = vand.u32 2147483647, %v2814
        %vm2898 = vcmp.lt.f32.partialorder %v2897, 0.0004427343
        %v2899 = vsel %vm2898, %v2896, %v2893
        %v2900 = vadd.f32 %v2816, 1.0
        %v2901 = vlog2.pop %v2900
        %v2902 = vmul.f32 %v2901, 0.6931472
        %v2903 = vmul.f32 -0.5, %v2816
        %v2904 = vadd.f32 %v2903, 1.0
        %v2905 = vmul.f32 %v2904, %v2816
        %v2906 = vand.u32 2147483647, %v2816
        %vm2907 = vcmp.lt.f32.partialorder %v2906, 0.0004427343
        %v2908 = vsel %vm2907, %v2905, %v2902
        %v2909 = vadd.f32 %v2818, 1.0
        %v2910 = vlog2.pop %v2909
        %v2911 = vmul.f32 %v2910, 0.6931472
        %v2912 = vmul.f32 -0.5, %v2818
        %v2913 = vadd.f32 %v2912, 1.0
        %v2914 = vmul.f32 %v2913, %v2818
        %v2915 = vand.u32 2147483647, %v2818
        %vm2916 = vcmp.lt.f32.partialorder %v2915, 0.0004427343
        %v2917 = vsel %vm2916, %v2914, %v2911
        %v2918 = vadd.f32 %v2820, 1.0
        %v2919 = vlog2.pop %v2918
        %v2920 = vmul.f32 %v2919, 0.6931472
        %v2921 = vmul.f32 -0.5, %v2820
        %v2922 = vadd.f32 %v2921, 1.0
        %v2923 = vmul.f32 %v2922, %v2820
        %v2924 = vand.u32 2147483647, %v2820
        %vm2925 = vcmp.lt.f32.partialorder %v2924, 0.0004427343
        %v2926 = vsel %vm2925, %v2923, %v2920
        %v2927 = vadd.f32 %v2822, 1.0
        %v2928 = vlog2.pop %v2927
        %v2929 = vmul.f32 %v2928, 0.6931472
        %v2930 = vmul.f32 -0.5, %v2822
        %v2931 = vadd.f32 %v2930, 1.0
        %v2932 = vmul.f32 %v2931, %v2822
        %v2933 = vand.u32 2147483647, %v2822
        %vm2934 = vcmp.lt.f32.partialorder %v2933, 0.0004427343
        %v2935 = vsel %vm2934, %v2932, %v2929
        %v2936 = vadd.f32 %v2824, 1.0
        %v2937 = vlog2.pop %v2936
        %v2938 = vmul.f32 %v2937, 0.6931472
        %v2939 = vmul.f32 -0.5, %v2824
        %v2940 = vadd.f32 %v2939, 1.0
        %v2941 = vmul.f32 %v2940, %v2824
        %v2942 = vand.u32 2147483647, %v2824
        %vm2943 = vcmp.lt.f32.partialorder %v2942, 0.0004427343
        %v2944 = vsel %vm2943, %v2941, %v2938
        %v2945 = vadd.f32 %v2826, 1.0
        %v2946 = vlog2.pop %v2945
        %v2947 = vmul.f32 %v2946, 0.6931472
        %v2948 = vmul.f32 -0.5, %v2826
        %v2949 = vadd.f32 %v2948, 1.0
        %v2950 = vmul.f32 %v2949, %v2826
        %v2951 = vand.u32 2147483647, %v2826
        %vm2952 = vcmp.lt.f32.partialorder %v2951, 0.0004427343
        %v2953 = vsel %vm2952, %v2950, %v2947
        %v2954 = vadd.f32 %v2828, 1.0
        %v2955 = vlog2.pop %v2954
        %v2956 = vmul.f32 %v2955, 0.6931472
        %v2957 = vmul.f32 -0.5, %v2828
        %v2958 = vadd.f32 %v2957, 1.0
        %v2959 = vmul.f32 %v2958, %v2828
        %v2960 = vand.u32 2147483647, %v2828
        %vm2961 = vcmp.lt.f32.partialorder %v2960, 0.0004427343
        %v2962 = vsel %vm2961, %v2959, %v2956
        %v2963 = vadd.f32 %v2830, 1.0
        %v2964 = vlog2.pop %v2963
        %v2965 = vmul.f32 %v2964, 0.6931472
        %v2966 = vmul.f32 -0.5, %v2830
        %v2967 = vadd.f32 %v2966, 1.0
        %v2968 = vmul.f32 %v2967, %v2830
        %v2969 = vand.u32 2147483647, %v2830
        %vm2970 = vcmp.lt.f32.partialorder %v2969, 0.0004427343
        %v2971 = vsel %vm2970, %v2968, %v2965
        %v2972 = vadd.f32 %v2832, 1.0
        %v2973 = vlog2.pop %v2972
        %v2974 = vmul.f32 %v2973, 0.6931472
        %v2975 = vmul.f32 -0.5, %v2832
        %v2976 = vadd.f32 %v2975, 1.0
        %v2977 = vmul.f32 %v2976, %v2832
        %v2978 = vand.u32 2147483647, %v2832
        %vm2979 = vcmp.lt.f32.partialorder %v2978, 0.0004427343
        %v2980 = vsel %vm2979, %v2977, %v2974
        %v2981 = vadd.f32 %v2834, 1.0
        %v2982 = vlog2.pop %v2981
        %v2983 = vmul.f32 %v2982, 0.6931472
        %v2984 = vmul.f32 -0.5, %v2834
        %v2985 = vadd.f32 %v2984, 1.0
        %v2986 = vmul.f32 %v2985, %v2834
        %v2987 = vand.u32 2147483647, %v2834
        %vm2988 = vcmp.lt.f32.partialorder %v2987, 0.0004427343
        %v2989 = vsel %vm2988, %v2986, %v2983
        %v2990 = vadd.f32 %v2836, 1.0
        %v2991 = vlog2.pop %v2990
        %v2992 = vmul.f32 %v2991, 0.6931472
        %v2993 = vmul.f32 -0.5, %v2836
        %v2994 = vadd.f32 %v2993, 1.0
        %v2995 = vmul.f32 %v2994, %v2836
        %v2996 = vand.u32 2147483647, %v2836
        %vm2997 = vcmp.lt.f32.partialorder %v2996, 0.0004427343
        %v2998 = vsel %vm2997, %v2995, %v2992
        %v2999 = vadd.f32 %v2838, 1.0
        %v3000 = vlog2.pop %v2999
        %v3001 = vmul.f32 %v3000, 0.6931472
        %v3002 = vmul.f32 -0.5, %v2838
        %v3003 = vadd.f32 %v3002, 1.0
        %v3004 = vmul.f32 %v3003, %v2838
        %v3005 = vand.u32 2147483647, %v2838
        %vm3006 = vcmp.lt.f32.partialorder %v3005, 0.0004427343
        %v3007 = vsel %vm3006, %v3004, %v3001
        %v3008 = vadd.f32 %v2840, 1.0
        %v3009 = vlog2.pop %v3008
        %v3010 = vmul.f32 %v3009, 0.6931472
        %v3011 = vmul.f32 -0.5, %v2840
        %v3012 = vadd.f32 %v3011, 1.0
        %v3013 = vmul.f32 %v3012, %v2840
        %v3014 = vand.u32 2147483647, %v2840
        %vm3015 = vcmp.lt.f32.partialorder %v3014, 0.0004427343
        %v3016 = vsel %vm3015, %v3013, %v3010
        %v3017 = vadd.f32 %v2842, 1.0
        %v3018 = vlog2.pop %v3017
        %v3019 = vmul.f32 %v3018, 0.6931472
        %v3020 = vmul.f32 -0.5, %v2842
        %v3021 = vadd.f32 %v3020, 1.0
        %v3022 = vmul.f32 %v3021, %v2842
        %v3023 = vand.u32 2147483647, %v2842
        %vm3024 = vcmp.lt.f32.partialorder %v3023, 0.0004427343
        %v3025 = vsel %vm3024, %v3022, %v3019
        %v3026 = vadd.f32 %v2844, 1.0
        %v3027 = vlog2.pop %v3026
        %v3028 = vmul.f32 %v3027, 0.6931472
        %v3029 = vmul.f32 -0.5, %v2844
        %v3030 = vadd.f32 %v3029, 1.0
        %v3031 = vmul.f32 %v3030, %v2844
        %v3032 = vand.u32 2147483647, %v2844
        %vm3033 = vcmp.lt.f32.partialorder %v3032, 0.0004427343
        %v3034 = vsel %vm3033, %v3031, %v3028
        %v3035 = vadd.f32 %v2846, 1.0
        %v3036 = vlog2.pop %v3035
        %v3037 = vmul.f32 %v3036, 0.6931472
        %v3038 = vmul.f32 -0.5, %v2846
        %v3039 = vadd.f32 %v3038, 1.0
        %v3040 = vmul.f32 %v3039, %v2846
        %v3041 = vand.u32 2147483647, %v2846
        %vm3042 = vcmp.lt.f32.partialorder %v3041, 0.0004427343
        %v3043 = vsel %vm3042, %v3040, %v3037
        %v3044 = vadd.f32 %v2848, 1.0
        %v3045 = vlog2.pop %v3044
        %v3046 = vmul.f32 %v3045, 0.6931472
        %v3047 = vmul.f32 -0.5, %v2848
        %v3048 = vadd.f32 %v3047, 1.0
        %v3049 = vmul.f32 %v3048, %v2848
        %v3050 = vand.u32 2147483647, %v2848
        %vm3051 = vcmp.lt.f32.partialorder %v3050, 0.0004427343
        %v3052 = vsel %vm3051, %v3049, %v3046
        %v3053 = vadd.f32 %v2850, 1.0
        %v3054 = vlog2.pop %v3053
        %v3055 = vmul.f32 %v3054, 0.6931472
        %v3056 = vmul.f32 -0.5, %v2850
        %v3057 = vadd.f32 %v3056, 1.0
        %v3058 = vmul.f32 %v3057, %v2850
        %v3059 = vand.u32 2147483647, %v2850
        %vm3060 = vcmp.lt.f32.partialorder %v3059, 0.0004427343
        %v3061 = vsel %vm3060, %v3058, %v3055
        %v3062 = vadd.f32 %v2852, 1.0
        %v3063 = vlog2.pop %v3062
        %v3064 = vmul.f32 %v3063, 0.6931472
        %v3065 = vmul.f32 -0.5, %v2852
        %v3066 = vadd.f32 %v3065, 1.0
        %v3067 = vmul.f32 %v3066, %v2852
        %v3068 = vand.u32 2147483647, %v2852
        %vm3069 = vcmp.lt.f32.partialorder %v3068, 0.0004427343
        %v3070 = vsel %vm3069, %v3067, %v3064
        %v3071 = vadd.f32 %v2854, 1.0
        %v3072 = vlog2.pop %v3071
        %v3073 = vmul.f32 %v3072, 0.6931472
        %v3074 = vmul.f32 -0.5, %v2854
        %v3075 = vadd.f32 %v3074, 1.0
        %v3076 = vmul.f32 %v3075, %v2854
        %v3077 = vand.u32 2147483647, %v2854
        %vm3078 = vcmp.lt.f32.partialorder %v3077, 0.0004427343
        %v3079 = vsel %vm3078, %v3076, %v3073
        %v3080 = vadd.f32 %v2856, 1.0
        %v3081 = vlog2.pop %v3080
        %v3082 = vmul.f32 %v3081, 0.6931472
        %v3083 = vmul.f32 -0.5, %v2856
        %v3084 = vadd.f32 %v3083, 1.0
        %v3085 = vmul.f32 %v3084, %v2856
        %v3086 = vand.u32 2147483647, %v2856
        %vm3087 = vcmp.lt.f32.partialorder %v3086, 0.0004427343
        %v3088 = vsel %vm3087, %v3085, %v3082
        %v3089 = vadd.f32 %v2858, 1.0
        %v3090 = vlog2.pop %v3089
        %v3091 = vmul.f32 %v3090, 0.6931472
        %v3092 = vmul.f32 -0.5, %v2858
        %v3093 = vadd.f32 %v3092, 1.0
        %v3094 = vmul.f32 %v3093, %v2858
        %v3095 = vand.u32 2147483647, %v2858
        %vm3096 = vcmp.lt.f32.partialorder %v3095, 0.0004427343
        %v3097 = vsel %vm3096, %v3094, %v3091
        %v3098 = vadd.f32 %v2860, 1.0
        %v3099 = vlog2.pop %v3098
        %v3100 = vmul.f32 %v3099, 0.6931472
        %v3101 = vmul.f32 -0.5, %v2860
        %v3102 = vadd.f32 %v3101, 1.0
        %v3103 = vmul.f32 %v3102, %v2860
        %v3104 = vand.u32 2147483647, %v2860
        %vm3105 = vcmp.lt.f32.partialorder %v3104, 0.0004427343
        %v3106 = vsel %vm3105, %v3103, %v3100
        %v3107 = vadd.f32 %v2862, 1.0
        %v3108 = vlog2.pop %v3107
        %v3109 = vmul.f32 %v3108, 0.6931472
        %v3110 = vmul.f32 -0.5, %v2862
        %v3111 = vadd.f32 %v3110, 1.0
        %v3112 = vmul.f32 %v3111, %v2862
        %v3113 = vand.u32 2147483647, %v2862
        %vm3114 = vcmp.lt.f32.partialorder %v3113, 0.0004427343
        %v3115 = vsel %vm3114, %v3112, %v3109
        %v3116 = vadd.f32 %v2864, 1.0
        %v3117 = vlog2.pop %v3116
        %v3118 = vmul.f32 %v3117, 0.6931472
        %v3119 = vmul.f32 -0.5, %v2864
        %v3120 = vadd.f32 %v3119, 1.0
        %v3121 = vmul.f32 %v3120, %v2864
        %v3122 = vand.u32 2147483647, %v2864
        %vm3123 = vcmp.lt.f32.partialorder %v3122, 0.0004427343
        %v3124 = vsel %vm3123, %v3121, %v3118
        %v3125 = vadd.f32 %v2866, 1.0
        %v3126 = vlog2.pop %v3125
        %v3127 = vmul.f32 %v3126, 0.6931472
        %v3128 = vmul.f32 -0.5, %v2866
        %v3129 = vadd.f32 %v3128, 1.0
        %v3130 = vmul.f32 %v3129, %v2866
        %v3131 = vand.u32 2147483647, %v2866
        %vm3132 = vcmp.lt.f32.partialorder %v3131, 0.0004427343
        %v3133 = vsel %vm3132, %v3130, %v3127
        %v3134 = vadd.f32 %v2868, 1.0
        %v3135 = vlog2.pop %v3134
        %v3136 = vmul.f32 %v3135, 0.6931472
        %v3137 = vmul.f32 -0.5, %v2868
        %v3138 = vadd.f32 %v3137, 1.0
        %v3139 = vmul.f32 %v3138, %v2868
        %v3140 = vand.u32 2147483647, %v2868
        %vm3141 = vcmp.lt.f32.partialorder %v3140, 0.0004427343
        %v3142 = vsel %vm3141, %v3139, %v3136
        %v3143 = vadd.f32 %v2870, 1.0
        %v3144 = vlog2.pop %v3143
        %v3145 = vmul.f32 %v3144, 0.6931472
        %v3146 = vmul.f32 -0.5, %v2870
        %v3147 = vadd.f32 %v3146, 1.0
        %v3148 = vmul.f32 %v3147, %v2870
        %v3149 = vand.u32 2147483647, %v2870
        %vm3150 = vcmp.lt.f32.partialorder %v3149, 0.0004427343
        %v3151 = vsel %vm3150, %v3148, %v3145
        %v3152 = vadd.f32 %v2872, 1.0
        %v3153 = vlog2.pop %v3152
        %v3154 = vmul.f32 %v3153, 0.6931472
        %v3155 = vmul.f32 -0.5, %v2872
        %v3156 = vadd.f32 %v3155, 1.0
        %v3157 = vmul.f32 %v3156, %v2872
        %v3158 = vand.u32 2147483647, %v2872
        %vm3159 = vcmp.lt.f32.partialorder %v3158, 0.0004427343
        %v3160 = vsel %vm3159, %v3157, %v3154
        %v3161 = vadd.f32 %v2713, %v2881
        %v3162 = vadd.f32 %v2714, %v2890
        %v3163 = vadd.f32 %v2715, %v2899
        %v3164 = vadd.f32 %v2716, %v2908
        %v3165 = vadd.f32 %v2717, %v2917
        %v3166 = vadd.f32 %v2718, %v2926
        %v3167 = vadd.f32 %v2719, %v2935
        %v3168 = vadd.f32 %v2720, %v2944
        %v3169 = vadd.f32 %v2721, %v2953
        %v3170 = vadd.f32 %v2722, %v2962
        %v3171 = vadd.f32 %v2723, %v2971
        %v3172 = vadd.f32 %v2724, %v2980
        %v3173 = vadd.f32 %v2725, %v2989
        %v3174 = vadd.f32 %v2726, %v2998
        %v3175 = vadd.f32 %v2727, %v3007
        %v3176 = vadd.f32 %v2728, %v3016
        %v3177 = vadd.f32 %v2729, %v3025
        %v3178 = vadd.f32 %v2730, %v3034
        %v3179 = vadd.f32 %v2731, %v3043
        %v3180 = vadd.f32 %v2732, %v3052
        %v3181 = vadd.f32 %v2733, %v3061
        %v3182 = vadd.f32 %v2734, %v3070
        %v3183 = vadd.f32 %v2735, %v3079
        %v3184 = vadd.f32 %v2736, %v3088
        %v3185 = vadd.f32 %v2737, %v3097
        %v3186 = vadd.f32 %v2738, %v3106
        %v3187 = vadd.f32 %v2739, %v3115
        %v3188 = vadd.f32 %v2740, %v3124
        %v3189 = vadd.f32 %v2741, %v3133
        %v3190 = vadd.f32 %v2742, %v3142
        %v3191 = vadd.f32 %v2743, %v3151
        %v3192 = vadd.f32 %v2744, %v3160
        %v3193 = vsub.f32 %v3161, 0.6931472
        %v3194 = vsub.f32 %v3162, 0.6931472
        %v3195 = vsub.f32 %v3163, 0.6931472
        %v3196 = vsub.f32 %v3164, 0.6931472
        %v3197 = vsub.f32 %v3165, 0.6931472
        %v3198 = vsub.f32 %v3166, 0.6931472
        %v3199 = vsub.f32 %v3167, 0.6931472
        %v3200 = vsub.f32 %v3168, 0.6931472
        %v3201 = vsub.f32 %v3169, 0.6931472
        %v3202 = vsub.f32 %v3170, 0.6931472
        %v3203 = vsub.f32 %v3171, 0.6931472
        %v3204 = vsub.f32 %v3172, 0.6931472
        %v3205 = vsub.f32 %v3173, 0.6931472
        %v3206 = vsub.f32 %v3174, 0.6931472
        %v3207 = vsub.f32 %v3175, 0.6931472
        %v3208 = vsub.f32 %v3176, 0.6931472
        %v3209 = vsub.f32 %v3177, 0.6931472
        %v3210 = vsub.f32 %v3178, 0.6931472
        %v3211 = vsub.f32 %v3179, 0.6931472
        %v3212 = vsub.f32 %v3180, 0.6931472
        %v3213 = vsub.f32 %v3181, 0.6931472
        %v3214 = vsub.f32 %v3182, 0.6931472
        %v3215 = vsub.f32 %v3183, 0.6931472
        %v3216 = vsub.f32 %v3184, 0.6931472
        %v3217 = vsub.f32 %v3185, 0.6931472
        %v3218 = vsub.f32 %v3186, 0.6931472
        %v3219 = vsub.f32 %v3187, 0.6931472
        %v3220 = vsub.f32 %v3188, 0.6931472
        %v3221 = vsub.f32 %v3189, 0.6931472
        %v3222 = vsub.f32 %v3190, 0.6931472
        %v3223 = vsub.f32 %v3191, 0.6931472
        %v3224 = vsub.f32 %v3192, 0.6931472
        %v3225 = vmul.f32 %v407, %v3193
        %v3226 = vmul.f32 %v408, %v3194
        %v3227 = vmul.f32 %v407, %v3195
        %v3228 = vmul.f32 %v408, %v3196
        %v3229 = vmul.f32 %v407, %v3197
        %v3230 = vmul.f32 %v408, %v3198
        %v3231 = vmul.f32 %v407, %v3199
        %v3232 = vmul.f32 %v408, %v3200
        %v3233 = vmul.f32 %v407, %v3201
        %v3234 = vmul.f32 %v408, %v3202
        %v3235 = vmul.f32 %v407, %v3203
        %v3236 = vmul.f32 %v408, %v3204
        %v3237 = vmul.f32 %v407, %v3205
        %v3238 = vmul.f32 %v408, %v3206
        %v3239 = vmul.f32 %v407, %v3207
        %v3240 = vmul.f32 %v408, %v3208
        %v3241 = vmul.f32 %v407, %v3209
        %v3242 = vmul.f32 %v408, %v3210
        %v3243 = vmul.f32 %v407, %v3211
        %v3244 = vmul.f32 %v408, %v3212
        %v3245 = vmul.f32 %v407, %v3213
        %v3246 = vmul.f32 %v408, %v3214
        %v3247 = vmul.f32 %v407, %v3215
        %v3248 = vmul.f32 %v408, %v3216
        %v3249 = vmul.f32 %v407, %v3217
        %v3250 = vmul.f32 %v408, %v3218
        %v3251 = vmul.f32 %v407, %v3219
        %v3252 = vmul.f32 %v408, %v3220
        %v3253 = vmul.f32 %v407, %v3221
        %v3254 = vmul.f32 %v408, %v3222
        %v3255 = vmul.f32 %v407, %v3223
        %v3256 = vmul.f32 %v408, %v3224
        %v3257 = vadd.f32 %v3225, %v3226
        %v3258 = vrot.slane %v3257, 4
        %v3259 = vadd.f32 %v3257, %v3258
        %v3260 = vrot.slane %v3259, 2
        %v3261 = vadd.f32 %v3259, %v3260
        %v3262 = vrot.slane %v3261, 1
        %v3263 = vadd.f32 %v3261, %v3262
        %v3264 = vadd.f32 %v3227, %v3228
        %v3265 = vrot.slane %v3264, 4
        %v3266 = vadd.f32 %v3264, %v3265
        %v3267 = vrot.slane %v3266, 2
        %v3268 = vadd.f32 %v3266, %v3267
        %v3269 = vrot.slane %v3268, 1
        %v3270 = vadd.f32 %v3268, %v3269
        %v3271 = vadd.f32 %v3229, %v3230
        %v3272 = vrot.slane %v3271, 4
        %v3273 = vadd.f32 %v3271, %v3272
        %v3274 = vrot.slane %v3273, 2
        %v3275 = vadd.f32 %v3273, %v3274
        %v3276 = vrot.slane %v3275, 1
        %v3277 = vadd.f32 %v3275, %v3276
        %v3278 = vadd.f32 %v3231, %v3232
        %v3279 = vrot.slane %v3278, 4
        %v3280 = vadd.f32 %v3278, %v3279
        %v3281 = vrot.slane %v3280, 2
        %v3282 = vadd.f32 %v3280, %v3281
        %v3283 = vrot.slane %v3282, 1
        %v3284 = vadd.f32 %v3282, %v3283
        %v3285 = vadd.f32 %v3233, %v3234
        %v3286 = vrot.slane %v3285, 4
        %v3287 = vadd.f32 %v3285, %v3286
        %v3288 = vrot.slane %v3287, 2
        %v3289 = vadd.f32 %v3287, %v3288
        %v3290 = vrot.slane %v3289, 1
        %v3291 = vadd.f32 %v3289, %v3290
        %v3292 = vadd.f32 %v3235, %v3236
        %v3293 = vrot.slane %v3292, 4
        %v3294 = vadd.f32 %v3292, %v3293
        %v3295 = vrot.slane %v3294, 2
        %v3296 = vadd.f32 %v3294, %v3295
        %v3297 = vrot.slane %v3296, 1
        %v3298 = vadd.f32 %v3296, %v3297
        %v3299 = vadd.f32 %v3237, %v3238
        %v3300 = vrot.slane %v3299, 4
        %v3301 = vadd.f32 %v3299, %v3300
        %v3302 = vrot.slane %v3301, 2
        %v3303 = vadd.f32 %v3301, %v3302
        %v3304 = vrot.slane %v3303, 1
        %v3305 = vadd.f32 %v3303, %v3304
        %v3306 = vadd.f32 %v3239, %v3240
        %v3307 = vrot.slane %v3306, 4
        %v3308 = vadd.f32 %v3306, %v3307
        %v3309 = vrot.slane %v3308, 2
        %v3310 = vadd.f32 %v3308, %v3309
        %v3311 = vrot.slane %v3310, 1
        %v3312 = vadd.f32 %v3310, %v3311
        %v3313 = vadd.f32 %v3241, %v3242
        %v3314 = vrot.slane %v3313, 4
        %v3315 = vadd.f32 %v3313, %v3314
        %v3316 = vrot.slane %v3315, 2
        %v3317 = vadd.f32 %v3315, %v3316
        %v3318 = vrot.slane %v3317, 1
        %v3319 = vadd.f32 %v3317, %v3318
        %v3320 = vadd.f32 %v3243, %v3244
        %v3321 = vrot.slane %v3320, 4
        %v3322 = vadd.f32 %v3320, %v3321
        %v3323 = vrot.slane %v3322, 2
        %v3324 = vadd.f32 %v3322, %v3323
        %v3325 = vrot.slane %v3324, 1
        %v3326 = vadd.f32 %v3324, %v3325
        %v3327 = vadd.f32 %v3245, %v3246
        %v3328 = vrot.slane %v3327, 4
        %v3329 = vadd.f32 %v3327, %v3328
        %v3330 = vrot.slane %v3329, 2
        %v3331 = vadd.f32 %v3329, %v3330
        %v3332 = vrot.slane %v3331, 1
        %v3333 = vadd.f32 %v3331, %v3332
        %v3334 = vadd.f32 %v3247, %v3248
        %v3335 = vrot.slane %v3334, 4
        %v3336 = vadd.f32 %v3334, %v3335
        %v3337 = vrot.slane %v3336, 2
        %v3338 = vadd.f32 %v3336, %v3337
        %v3339 = vrot.slane %v3338, 1
        %v3340 = vadd.f32 %v3338, %v3339
        %v3341 = vadd.f32 %v3249, %v3250
        %v3342 = vrot.slane %v3341, 4
        %v3343 = vadd.f32 %v3341, %v3342
        %v3344 = vrot.slane %v3343, 2
        %v3345 = vadd.f32 %v3343, %v3344
        %v3346 = vrot.slane %v3345, 1
        %v3347 = vadd.f32 %v3345, %v3346
        %v3348 = vadd.f32 %v3251, %v3252
        %v3349 = vrot.slane %v3348, 4
        %v3350 = vadd.f32 %v3348, %v3349
        %v3351 = vrot.slane %v3350, 2
        %v3352 = vadd.f32 %v3350, %v3351
        %v3353 = vrot.slane %v3352, 1
        %v3354 = vadd.f32 %v3352, %v3353
        %v3355 = vadd.f32 %v3253, %v3254
        %v3356 = vrot.slane %v3355, 4
        %v3357 = vadd.f32 %v3355, %v3356
        %v3358 = vrot.slane %v3357, 2
        %v3359 = vadd.f32 %v3357, %v3358
        %v3360 = vrot.slane %v3359, 1
        %v3361 = vadd.f32 %v3359, %v3360
        %v3362 = vadd.f32 %v3255, %v3256
        %v3363 = vrot.slane %v3362, 4
        %v3364 = vadd.f32 %v3362, %v3363
        %v3365 = vrot.slane %v3364, 2
        %v3366 = vadd.f32 %v3364, %v3365
        %v3367 = vrot.slane %v3366, 1
        %v3368 = vadd.f32 %v3366, %v3367
        %p3369 = scmp.eq.s32.totalorder %s31, 0
        // Predicated region
        $region65: #{tpu_custom_call.1} parent=51 // pred_check
          %p3370 = pneg %p3369
        $region66: #{tpu_custom_call.1} parent=51 // pred_check_branch
          %3372 = sbr.rel (%p3370) target = $region68
        $region67: #{tpu_custom_call.1} parent=51 // pred_region
          %vm3389 = vcmask 1041409
          %v3390 = vsel %vm3389, %v3270, %v3263
          %vm3391 = vcmask 1042434
          %v3392 = vsel %vm3391, %v3277, %v3390
          %vm3393 = vcmask 1043459
          %v3394 = vsel %vm3393, %v3284, %v3392
          %vm3395 = vcmask 1044484
          %v3396 = vsel %vm3395, %v3291, %v3394
          %vm3397 = vcmask 1045509
          %v3398 = vsel %vm3397, %v3298, %v3396
          %vm3399 = vcmask 1046534
          %v3400 = vsel %vm3399, %v3305, %v3398
          %vm3401 = vcmask 1047559
          %v3402 = vsel %vm3401, %v3312, %v3400
          %v3403 = vsel %vm3389, %v3326, %v3319
          %v3404 = vsel %vm3391, %v3333, %v3403
          %v3405 = vsel %vm3393, %v3340, %v3404
          %v3406 = vsel %vm3395, %v3347, %v3405
          %v3407 = vsel %vm3397, %v3354, %v3406
          %v3408 = vsel %vm3399, %v3361, %v3407
          %v3409 = vsel %vm3401, %v3368, %v3408
          %3412 = vst [vmem:[%s393] sm:$0xff] %v3402
          %3413 = vst [vmem:[%s393 + $0x8] sm:$0xff] %v3409
        $region68: #{tpu_custom_call.1} parent=51 // pred_fallthru
          _
        %p3414 = scmp.ne.s32.totalorder %s31, 0
        // Predicated region
        $region69: #{tpu_custom_call.1} parent=51 // pred_check
          %p3415 = pneg %p3414
        $region70: #{tpu_custom_call.1} parent=51 // pred_check_branch
          %3417 = sbr.rel (%p3415) target = $region72
        $region71: #{tpu_custom_call.1} parent=51 // pred_region
          %v3418 = vld [vmem:[%s393] sm:$0xff]
          %v3419 = vld [vmem:[%s393 + $0x8] sm:$0xff]
          %vm3436 = vcmask 1041409
          %v3437 = vsel %vm3436, %v3270, %v3263
          %vm3438 = vcmask 1042434
          %v3439 = vsel %vm3438, %v3277, %v3437
          %vm3440 = vcmask 1043459
          %v3441 = vsel %vm3440, %v3284, %v3439
          %vm3442 = vcmask 1044484
          %v3443 = vsel %vm3442, %v3291, %v3441
          %vm3444 = vcmask 1045509
          %v3445 = vsel %vm3444, %v3298, %v3443
          %vm3446 = vcmask 1046534
          %v3447 = vsel %vm3446, %v3305, %v3445
          %vm3448 = vcmask 1047559
          %v3449 = vsel %vm3448, %v3312, %v3447
          %v3450 = vsel %vm3436, %v3326, %v3319
          %v3451 = vsel %vm3438, %v3333, %v3450
          %v3452 = vsel %vm3440, %v3340, %v3451
          %v3453 = vsel %vm3442, %v3347, %v3452
          %v3454 = vsel %vm3444, %v3354, %v3453
          %v3455 = vsel %vm3446, %v3361, %v3454
          %v3456 = vsel %vm3448, %v3368, %v3455
          %v3459 = vadd.f32 %v3418, %v3449
          %v3460 = vadd.f32 %v3419, %v3456
          %3461 = vst [vmem:[%s393] sm:$0xff] %v3459
          %3462 = vst [vmem:[%s393 + $0x8] sm:$0xff] %v3460
        $region72: #{tpu_custom_call.1} parent=51 // pred_fallthru
          _
        %s3463 = sand.u32 %s229, 1
        %s3464 = scalar_lea.sflag [#allocation4], %s3463
        %s3465 = sand.u32 %s229, 1
        %s3466 = smul.addr %s3465, 16
        %s3467 = scalar_lea.vmem [#allocation8], %s3466
        // Predicated region
        $region73: #{tpu_custom_call.1} parent=51 // pred_check
          %p3468 = pneg %p239
        $region74: #{tpu_custom_call.1} parent=51 // pred_check_branch
          %3470 = sbr.rel (%p3468) target = $region76
        $region75: #{tpu_custom_call.1} parent=51 // pred_region
          %s3471 = smul.u32 2, %s30
          %s3473 = ssub.s32 256, 256
          %3474 = vsyncadd %s3464, %s3473
          %s3475 = smul.addr %s3471, 128
          %s3476 = scalar_lea.hbm %s8, %s3475
          %s3477 = sshll.u32 %s3467, 4
          %s3478 = int_to_ptr.vmem [resolvable:$true] %s3477
          %3483 = dma.vmem_to_hbm [thread:$0]  %s3478, 256, %s3476, %s3464, 128, 128, 8
        $region76: #{tpu_custom_call.1} parent=51 // pred_fallthru
          _
      $region52: #{tpu_custom_call.1} parent=5 // pred_fallthru
        _
      %p3484 = scmp.le.s32.totalorder 2, %s21
      // Predicated region
      $region77: #{tpu_custom_call.1} parent=5 // pred_check
        %p3485 = pneg %p3484
      $region78: #{tpu_custom_call.1} parent=5 // pred_check_branch
        %3487 = sbr.rel (%p3485) target = $region80
      $region79: #{tpu_custom_call.1} parent=5 // pred_region
        %s3488 = ssub.s32 %s21, 2
        // Predicated region
        $region81: #{tpu_custom_call.1} parent=79 // pred_check
          %p3489 = pneg %p245
        $region82: #{tpu_custom_call.1} parent=79 // pred_check_branch
          %3491 = sbr.rel (%p3489) target = $region84
        $region83: #{tpu_custom_call.1} parent=79 // pred_region
          %s3492 = sand.u32 %s230, 1
          %s3493 = scalar_lea.sflag [#allocation4], %s3492
          %s3494 = sand.u32 %s230, 1
          %s3495 = smul.addr %s3494, 16
          %s3496 = scalar_lea.vmem [#allocation8], %s3495
          %3497 = dma.done %s3493, 256
        $region84: #{tpu_custom_call.1} parent=79 // pred_fallthru
          _
      $region80: #{tpu_custom_call.1} parent=5 // pred_fallthru
        _
    $region6: #{tpu_custom_call.1} parent=1 // loop_footer
      %s25 = sadd.s32 1, %s21
    $region7: #{tpu_custom_call.1} parent=1 // loop_footer_branch
      %20 = sbr.rel target = $region3
    $region8: #{tpu_custom_call.1} parent=1 // loop_exit
      _
    %3498 = vsyncpa [#allocation3], 1
    %s3499 = scalar_lea.sflag [#allocation3], 1
    %3500 = vsyncpa %s3499, 1
    %3501 = vsyncpa [#allocation6], 1
    %3502 = vsyncpa [#allocation4], 1
    %s3503 = scalar_lea.sflag [#allocation4], 1
    %3504 = vsyncpa %s3503, 1

</llo_original>
